<compile_context>
chip_gen: v6e
topology: v6e:2x2x1
jax: 0.10.0
libtpu: 0.0.40
codegen_flags: <defaults>
</compile_context>

<pallas_src>
import functools

import jax
import jax.numpy as jnp
from jax import lax
from jax.experimental import pallas as pl
from jax.experimental.pallas import tpu as pltpu


def _pick_tile(n, max_tile=1024):
    for t in (2048, 1024, 512, 256, 128, 64, 32, 16, 8):
        if t <= max_tile and n % t == 0:
            return t
    return n


def _vmem_budget():
    """(vmem_limit_bytes, small_vmem) with per-generation policy."""
    try:
        cap = int(pltpu.get_tpu_info().vmem_capacity_bytes)
    except Exception:
        cap = 128 * 1024 * 1024
    small = cap <= 64 * 1024 * 1024              # v7x: 64 MiB / TC
    if small:
        return min(cap * 3 // 4, 48 * 1024 * 1024), True
    return cap * 3 // 4, False                   # v5e/v6e: ~96 MiB of 128 MiB


def _slice_reduce_kernel(x_ref, w1_ref, b1_ref, wqkv_ref, wout_ref,
                         sw_ref, w2_ref, st_acc, sn_acc,
                         *, heads, dim_head, slice_num, scale):
    """Pass 1: fused projection -> per-head softmax -> slice-token reduction.

    Finalize (last N-tile of each batch) runs the tiny per-head G x G slice
    attention in the transposed (D, G) domain and emits the per-batch fused
    de-slice+output weight w2 = blockdiag(out_token_h) @ wout of shape (HG, C).
    """
    H, D, G = heads, dim_head, slice_num
    HD, HG = H * D, H * G
    nt = pl.program_id(1)
    cdt = x_ref.dtype  # MXU operand dtype (f32 or bf16)

    @pl.when(nt == 0)
    def _init():
        st_acc[...] = jnp.zeros_like(st_acc)
        sn_acc[...] = jnp.zeros_like(sn_acc)

    x = x_ref[0]                                                      # (tn, C)
    # Single fused projection: [fx | slice logits], f32 accumulation.
    proj = jnp.dot(x, w1_ref[...],
                   preferred_element_type=jnp.float32) + b1_ref[...]  # (tn, HD+HG)
    fx = proj[:, :HD]                                                 # (tn, HD) f32
    logits = proj[:, HD:]                                             # (tn, HG) f32

    # Per-head softmax over G-lane groups (VPU/XLU/EUP only; no MXU).
    sw_parts = []
    for h in range(H):
        lg = logits[:, h * G:(h + 1) * G]                             # (tn, G)
        m = jnp.max(lg, axis=-1, keepdims=True)
        e = jnp.exp(lg - m)
        sw_parts.append(
            e * pl.reciprocal(jnp.sum(e, axis=-1, keepdims=True), approx=True))
    sw = jnp.concatenate(sw_parts, axis=-1)                           # (tn, HG) f32

    # One lane-dense store of the whole slice-weight tile.
    sw_ref[0] = sw.astype(sw_ref.dtype)

    # Head-fused slice-token reduction: (HD, HG) += fx^T @ sw (contract tokens).
    st_acc[...] += lax.dot_general(
        fx.astype(cdt), sw.astype(cdt),
        (((0,), (0,)), ((), ())), preferred_element_type=jnp.float32)
    sn_acc[...] += jnp.sum(sw, axis=0, keepdims=True)                 # (1, HG)

    @pl.when(nt == pl.num_programs(1) - 1)
    def _finalize():
        w2_blocks = []
        for h in range(H):
            inv_n = pl.reciprocal(sn_acc[:, h * G:(h + 1) * G] + 1e-5,
                                  approx=True)                        # (1, G)
            st_t = st_acc[h * D:(h + 1) * D, h * G:(h + 1) * G] * inv_n  # (D, G)
            qkv_t = jnp.dot(wqkv_ref[...], st_t.astype(cdt),
                            preferred_element_type=jnp.float32)       # (3D, G)
            q_t = qkv_t[0 * D:1 * D]                                  # (D, G)
            k_t = qkv_t[1 * D:2 * D]
            v_t = qkv_t[2 * D:3 * D]
            dots = lax.dot_general(q_t, k_t, (((0,), (0,)), ((), ())),
                                   preferred_element_type=jnp.float32) * scale
            m = jnp.max(dots, axis=-1, keepdims=True)
            e = jnp.exp(dots - m)
            attn = e * pl.reciprocal(jnp.sum(e, axis=-1, keepdims=True),
                                     approx=True)                     # (G, G)
            ot_t = lax.dot_general(v_t, attn, (((1,), (1,)), ((), ())),
                                   preferred_element_type=jnp.float32)  # (D, G)
            # Fold de-slice with output projection:
            #   w2_block[g, c] = sum_d out_token[g, d] * wout[h*D+d, c]
            w2_blocks.append(lax.dot_general(
                ot_t, wout_ref[h * D:(h + 1) * D, :],
                (((0,), (0,)), ((), ())), preferred_element_type=jnp.float32))
        w2_ref[0] = jnp.concatenate(w2_blocks, axis=0).astype(w2_ref.dtype)


def _deslice_kernel(sw_ref, w2_ref, bout_ref, o_ref):
    """Pass 2: one (tn, HG) @ (HG, C) matmul + bias (de-slice + out-proj fused)."""
    out = jnp.dot(sw_ref[0], w2_ref[0],
                  preferred_element_type=jnp.float32) + bout_ref[...]
    o_ref[0] = out.astype(o_ref.dtype)


def physics_attention(x, params, *, heads, dim_head, slice_num,
                      tile_n=None, compute_dtype=jnp.bfloat16):
    B, N, C = x.shape
    H, D, G = heads, dim_head, slice_num
    HD, HG = H * D, H * G
    scale = float(D) ** -0.5
    cdt = compute_dtype
    f32 = jnp.float32

    vmem_limit, small_vmem = _vmem_budget()
    if tile_n is None:
        itemsize = jnp.dtype(cdt).itemsize
        max_tile = 1024 if (small_vmem and itemsize >= 4) else 2048
        tn = _pick_tile(N, max_tile)
    else:
        tn = tile_n
    assert N % tn == 0, (N, tn)
    n_tiles = N // tn

    # ---- Host-side exact algebraic foldings (f32) ----
    inv_temp = (1.0 / params["temp"].reshape(H)).astype(f32)
    wfx = params["wfx"].astype(f32)
    bfx = params["bfx"].astype(f32)
    wx = params["wx"].astype(f32)
    bx = params["bx"].astype(f32)
    wsl = params["wsl"].astype(f32)
    bsl = params["bsl"].astype(f32)
    # Fold wx @ wsl (and 1/temperature) into the input projection.
    wx_sl = jnp.einsum('chd,dg->chg', wx.reshape(C, H, D), wsl)
    wx_sl = (wx_sl * inv_temp[None, :, None]).reshape(C, HG)
    b_sl = ((bx.reshape(H, D) @ wsl + bsl[None, :]) * inv_temp[:, None]).reshape(HG)
    w1 = jnp.concatenate([wfx, wx_sl], axis=1).astype(cdt)            # (C, HD+HG)
    b1 = jnp.concatenate([bfx, b_sl]).reshape(1, HD + HG).astype(f32)
    # Concatenated, transposed q/k/v weight: qkv^T = wqkv_t @ slice_token^T.
    wqkv_t = jnp.concatenate(
        [params["wq"].T, params["wk"].T, params["wv"].T], axis=0).astype(cdt)
    wout = params["wout"].astype(f32)      # used only in pass-1 finalize fold
    bout = params["bout"].reshape(1, C).astype(f32)
    xc = x.astype(cdt)

    cp1 = pltpu.CompilerParams(dimension_semantics=("parallel", "arbitrary"),
                               vmem_limit_bytes=vmem_limit)
    cp2 = pltpu.CompilerParams(dimension_semantics=("parallel", "parallel"),
                               vmem_limit_bytes=vmem_limit)

    k1 = functools.partial(_slice_reduce_kernel, heads=H, dim_head=D,
                           slice_num=G, scale=scale)
    sw_cache, w2 = pl.pallas_call(
        k1,
        out_shape=(jax.ShapeDtypeStruct((B, N, HG), cdt),    # slice-weight cache
                   jax.ShapeDtypeStruct((B, HG, C), cdt)),   # fused de-slice weight
        grid_spec=pltpu.PrefetchScalarGridSpec(
            num_scalar_prefetch=0,
            grid=(B, n_tiles),
            in_specs=[
                pl.BlockSpec((1, tn, C), lambda b, t: (b, t, 0)),       # x tile
                pl.BlockSpec((C, HD + HG), lambda b, t: (0, 0)),        # [wfx | wx@wsl/T]
                pl.BlockSpec((1, HD + HG), lambda b, t: (0, 0)),        # fused bias
                pl.BlockSpec((3 * D, D), lambda b, t: (0, 0)),          # wqkv^T
                pl.BlockSpec((HD, C), lambda b, t: (0, 0)),             # wout (finalize)
            ],
            out_specs=[
                pl.BlockSpec((1, tn, HG), lambda b, t: (b, t, 0)),      # sw cache
                pl.BlockSpec((1, HG, C), lambda b, t: (b, 0, 0)),       # w2 per batch
            ],
            scratch_shapes=[
                pltpu.VMEM((HD, HG), jnp.float32),   # slice_token accumulator (T)
                pltpu.VMEM((1, HG), jnp.float32),    # slice_norm accumulator
            ]),
        compiler_params=cp1,
    )(xc, w1, b1, wqkv_t, wout)

    out = pl.pallas_call(
        _deslice_kernel,
        out_shape=jax.ShapeDtypeStruct((B, N, C), jnp.float32),
        grid_spec=pltpu.PrefetchScalarGridSpec(
            num_scalar_prefetch=0,
            grid=(B, n_tiles),
            in_specs=[
                pl.BlockSpec((1, tn, HG), lambda b, t: (b, t, 0)),      # sw tile
                pl.BlockSpec((1, HG, C), lambda b, t: (b, 0, 0)),       # fused weight
                pl.BlockSpec((1, C), lambda b, t: (0, 0)),              # bout
            ],
            out_specs=pl.BlockSpec((1, tn, C), lambda b, t: (b, t, 0)),
        ),
        compiler_params=cp2,
    )(sw_cache, w2, bout)
    return out


def reference_forward(x, p, *, heads, dim_head, slice_num):
    """Pure-JAX replica of the PyTorch forward (dropout=0), all f32."""
    B, N, C = x.shape
    H, D, G = heads, dim_head, slice_num
    fx = (x @ p["wfx"] + p["bfx"]).reshape(B, N, H, D).transpose(0, 2, 1, 3)
    xm = (x @ p["wx"] + p["bx"]).reshape(B, N, H, D).transpose(0, 2, 1, 3)
    temp = p["temp"].reshape(1, H, 1, 1)
    logits = (xm @ p["wsl"] + p["bsl"]) / temp
    sw = jax.nn.softmax(logits, axis=-1)
    snorm = sw.sum(axis=2)
    st = jnp.einsum('bhnd,bhng->bhgd', fx, sw)
    st = st / (snorm + 1e-5)[..., None]
    q = st @ p["wq"]
    k = st @ p["wk"]
    v = st @ p["wv"]
    dots = jnp.einsum('bhgd,bhkd->bhgk', q, k) * (float(D) ** -0.5)
    attn = jax.nn.softmax(dots, axis=-1)
    ot = jnp.einsum('bhgk,bhkd->bhgd', attn, v)
    out_x = jnp.einsum('bhgd,bhng->bhnd', ot, sw)
    out_x = out_x.transpose(0, 2, 1, 3).reshape(B, N, H * D)
    return out_x @ p["wout"] + p["bout"]


def init_params(key, *, dim, heads, dim_head, slice_num):
    H, C, D, G = heads, dim, dim_head, slice_num
    ks = jax.random.split(key, 10)
    s = 0.1
    return {
        "wfx": jax.random.normal(ks[0], (C, H * D), jnp.float32) * s,
        "bfx": jax.random.normal(ks[1], (H * D,), jnp.float32) * s,
        "wx": jax.random.normal(ks[2], (C, H * D), jnp.float32) * s,
        "bx": jax.random.normal(ks[3], (H * D,), jnp.float32) * s,
        "wsl": jax.random.normal(ks[4], (D, G), jnp.float32) * s,
        "bsl": jnp.zeros((G,), jnp.float32),
        "temp": jnp.full((1, H, 1, 1), 0.5, jnp.float32),
        "wq": jax.random.normal(ks[5], (D, D), jnp.float32) * s,
        "wk": jax.random.normal(ks[6], (D, D), jnp.float32) * s,
        "wv": jax.random.normal(ks[7], (D, D), jnp.float32) * s,
        "wout": jax.random.normal(ks[8], (H * D, C), jnp.float32) * s,
        "bout": jax.random.normal(ks[9], (C,), jnp.float32) * s,
    }


if __name__ == "__main__":
    # Small but representative: C = H*D = 128 so projections / stores are lane-dense,
    # N = 64 with tile_n = 32 exercises the multi-tile reduction + finalize path.
    B, N, dim = 2, 64, 128
    heads, dim_head, slice_num = 4, 32, 16

    key = jax.random.PRNGKey(0)
    kx, kp = jax.random.split(key)
    x = jax.random.normal(kx, (B, N, dim), jnp.float32)
    params = init_params(kp, dim=dim, heads=heads, dim_head=dim_head,
                         slice_num=slice_num)

    ref = jax.block_until_ready(
        reference_forward(x, params, heads=heads, dim_head=dim_head,
                          slice_num=slice_num))

    # f32 compute path (approx EUP reciprocals in the softmaxes -> loose-ish tol).
    out = jax.block_until_ready(
        physics_attention(x, params, heads=heads, dim_head=dim_head,
                          slice_num=slice_num, tile_n=32,
                          compute_dtype=jnp.float32))
    assert out.shape == (B, N, dim), out.shape
    err = float(jnp.max(jnp.abs(out - ref)))
    assert jnp.allclose(out, ref, atol=2e-2, rtol=2e-2), err

    # bf16 MXU-operand path (f32 accumulation), validated at bf16 tolerance.
    out_bf16 = jax.block_until_ready(
        physics_attention(x, params, heads=heads, dim_head=dim_head,
                          slice_num=slice_num, tile_n=32,
                          compute_dtype=jnp.bfloat16))
    err_bf16 = float(jnp.max(jnp.abs(out_bf16 - ref)))
    assert jnp.allclose(out_bf16, ref, atol=1.2e-1, rtol=1.2e-1), err_bf16

    print("KERNEL_OK")
</pallas_src>

<mosaic_0001>
module attributes {stable_mosaic.version = 11 : i64} {
  func.func @_slice_reduce_kernel(%arg0: i32, %arg1: i32, %arg2: memref<1x32x128xf32, #tpu.memory_space<vmem>>, %arg3: memref<128x192xf32, #tpu.memory_space<vmem>>, %arg4: memref<1x192xf32, #tpu.memory_space<vmem>>, %arg5: memref<96x32xf32, #tpu.memory_space<vmem>>, %arg6: memref<128x128xf32, #tpu.memory_space<vmem>>, %arg7: memref<1x32x64xf32, #tpu.memory_space<vmem>>, %arg8: memref<1x64x128xf32, #tpu.memory_space<vmem>>, %arg9: memref<128x64xf32, #tpu.memory_space<vmem>>, %arg10: memref<1x64xf32, #tpu.memory_space<vmem>>) attributes {dimension_semantics = [#tpu.dimension_semantics<parallel>, #tpu.dimension_semantics<arbitrary>], iteration_bounds = array<i64: 2, 2>, scalar_prefetch = 0 : i64, scratch_operands = 2 : i64, tpu.core_type = #tpu.core_type<tc>, window_params = [{transform_indices = @transform_0, window_bounds = array<i64: 1, 32, 128>}, {pipeline_mode = #tpu.pipeline_mode<synchronous>, transform_indices = @transform_1, window_bounds = array<i64: 128, 192>}, {pipeline_mode = #tpu.pipeline_mode<synchronous>, transform_indices = @transform_2, window_bounds = array<i64: 1, 192>}, {pipeline_mode = #tpu.pipeline_mode<synchronous>, transform_indices = @transform_3, window_bounds = array<i64: 96, 32>}, {pipeline_mode = #tpu.pipeline_mode<synchronous>, transform_indices = @transform_4, window_bounds = array<i64: 128, 128>}, {transform_indices = @transform_5, window_bounds = array<i64: 1, 32, 64>}, {transform_indices = @transform_6, window_bounds = array<i64: 1, 64, 128>}]} {
    %c0_i32 = arith.constant 0 : i32
    %0 = arith.cmpi eq, %arg1, %c0_i32 : i32
    %1 = arith.extui %0 : i1 to i32
    %c0_i32_0 = arith.constant 0 : i32
    %2 = arith.cmpi ne, %1, %c0_i32_0 : i32
    scf.if %2 {
      %cst_29 = arith.constant 0.000000e+00 : f32
      %72 = vector.broadcast %cst_29 : f32 to vector<128x64xf32>
      %c0_30 = arith.constant 0 : index
      %c0_31 = arith.constant 0 : index
      %73 = vector.load %arg9[%c0_30, %c0_31] : memref<128x64xf32, #tpu.memory_space<vmem>>, vector<128x64xf32>
      tpu.vector_store %arg9[%c0_30, %c0_31], %72 {strides = array<i32>} : memref<128x64xf32, #tpu.memory_space<vmem>>, vector<128x64xf32>,
      %cst_32 = arith.constant 0.000000e+00 : f32
      %74 = vector.broadcast %cst_32 : f32 to vector<1x64xf32>
      %c0_33 = arith.constant 0 : index
      %c0_34 = arith.constant 0 : index
      %75 = vector.load %arg10[%c0_33, %c0_34] : memref<1x64xf32, #tpu.memory_space<vmem>>, vector<1x64xf32>
      tpu.vector_store %arg10[%c0_33, %c0_34], %74 {strides = array<i32>} : memref<1x64xf32, #tpu.memory_space<vmem>>, vector<1x64xf32>,
    } else {
    }
    %c0 = arith.constant 0 : index
    %c0_1 = arith.constant 0 : index
    %c0_2 = arith.constant 0 : index
    %3 = vector.load %arg2[%c0, %c0_1, %c0_2] : memref<1x32x128xf32, #tpu.memory_space<vmem>>, vector<1x32x128xf32>
    %4 = vector.shape_cast %3 : vector<1x32x128xf32> to vector<32x128xf32>
    %c0_3 = arith.constant 0 : index
    %c0_4 = arith.constant 0 : index
    %5 = vector.load %arg3[%c0_3, %c0_4] : memref<128x192xf32, #tpu.memory_space<vmem>>, vector<128x192xf32>
    %cst = arith.constant dense<0.000000e+00> : vector<32x192xf32>
    %6 = tpu.matmul %4, %5, %cst {dimension_numbers = #tpu.dot_dimension_numbers<[1], [0], [0], [1], [0, 0, 1, 1], [], []>} : vector<32x128xf32>, vector<128x192xf32>, vector<32x192xf32> -> vector<32x192xf32>
    %c0_5 = arith.constant 0 : index
    %c0_6 = arith.constant 0 : index
    %7 = vector.load %arg4[%c0_5, %c0_6] : memref<1x192xf32, #tpu.memory_space<vmem>>, vector<1x192xf32>
    %8 = vector.broadcast %7 : vector<1x192xf32> to vector<32x192xf32>
    %9 = arith.addf %6, %8 : vector<32x192xf32>
    %10 = vector.extract_strided_slice %9 {offsets = [0, 0], sizes = [32, 128], strides = [1, 1]} : vector<32x192xf32> to vector<32x128xf32>
    %11 = vector.extract_strided_slice %9 {offsets = [0, 128], sizes = [32, 64], strides = [1, 1]} : vector<32x192xf32> to vector<32x64xf32>
    %12 = vector.extract_strided_slice %11 {offsets = [0, 0], sizes = [32, 16], strides = [1, 1]} : vector<32x64xf32> to vector<32x16xf32>
    %cst_7 = arith.constant dense<0xFF800000> : vector<32xf32>
    %13 = vector.multi_reduction <maximumf>, %12, %cst_7 [1] : vector<32x16xf32> to vector<32xf32>
    %14 = vector.shape_cast %13 : vector<32xf32> to vector<32x1xf32>
    %15 = vector.broadcast %14 : vector<32x1xf32> to vector<32x16xf32>
    %16 = arith.subf %12, %15 : vector<32x16xf32>
    %17 = math.exp %16 : vector<32x16xf32>
    %cst_8 = arith.constant dense<0.000000e+00> : vector<32xf32>
    %18 = vector.multi_reduction <add>, %17, %cst_8 [1] : vector<32x16xf32> to vector<32xf32>
    %19 = vector.shape_cast %18 : vector<32xf32> to vector<32x1xf32>
    %20 = tpu.reciprocal %19 {approx = true} : vector<32x1xf32> -> vector<32x1xf32>
    %21 = vector.broadcast %20 : vector<32x1xf32> to vector<32x16xf32>
    %22 = arith.mulf %17, %21 : vector<32x16xf32>
    %23 = vector.extract_strided_slice %11 {offsets = [0, 16], sizes = [32, 16], strides = [1, 1]} : vector<32x64xf32> to vector<32x16xf32>
    %cst_9 = arith.constant dense<0xFF800000> : vector<32xf32>
    %24 = vector.multi_reduction <maximumf>, %23, %cst_9 [1] : vector<32x16xf32> to vector<32xf32>
    %25 = vector.shape_cast %24 : vector<32xf32> to vector<32x1xf32>
    %26 = vector.broadcast %25 : vector<32x1xf32> to vector<32x16xf32>
    %27 = arith.subf %23, %26 : vector<32x16xf32>
    %28 = math.exp %27 : vector<32x16xf32>
    %cst_10 = arith.constant dense<0.000000e+00> : vector<32xf32>
    %29 = vector.multi_reduction <add>, %28, %cst_10 [1] : vector<32x16xf32> to vector<32xf32>
    %30 = vector.shape_cast %29 : vector<32xf32> to vector<32x1xf32>
    %31 = tpu.reciprocal %30 {approx = true} : vector<32x1xf32> -> vector<32x1xf32>
    %32 = vector.broadcast %31 : vector<32x1xf32> to vector<32x16xf32>
    %33 = arith.mulf %28, %32 : vector<32x16xf32>
    %34 = vector.extract_strided_slice %11 {offsets = [0, 32], sizes = [32, 16], strides = [1, 1]} : vector<32x64xf32> to vector<32x16xf32>
    %cst_11 = arith.constant dense<0xFF800000> : vector<32xf32>
    %35 = vector.multi_reduction <maximumf>, %34, %cst_11 [1] : vector<32x16xf32> to vector<32xf32>
    %36 = vector.shape_cast %35 : vector<32xf32> to vector<32x1xf32>
    %37 = vector.broadcast %36 : vector<32x1xf32> to vector<32x16xf32>
    %38 = arith.subf %34, %37 : vector<32x16xf32>
    %39 = math.exp %38 : vector<32x16xf32>
    %cst_12 = arith.constant dense<0.000000e+00> : vector<32xf32>
    %40 = vector.multi_reduction <add>, %39, %cst_12 [1] : vector<32x16xf32> to vector<32xf32>
    %41 = vector.shape_cast %40 : vector<32xf32> to vector<32x1xf32>
    %42 = tpu.reciprocal %41 {approx = true} : vector<32x1xf32> -> vector<32x1xf32>
    %43 = vector.broadcast %42 : vector<32x1xf32> to vector<32x16xf32>
    %44 = arith.mulf %39, %43 : vector<32x16xf32>
    %45 = vector.extract_strided_slice %11 {offsets = [0, 48], sizes = [32, 16], strides = [1, 1]} : vector<32x64xf32> to vector<32x16xf32>
    %cst_13 = arith.constant dense<0xFF800000> : vector<32xf32>
    %46 = vector.multi_reduction <maximumf>, %45, %cst_13 [1] : vector<32x16xf32> to vector<32xf32>
    %47 = vector.shape_cast %46 : vector<32xf32> to vector<32x1xf32>
    %48 = vector.broadcast %47 : vector<32x1xf32> to vector<32x16xf32>
    %49 = arith.subf %45, %48 : vector<32x16xf32>
    %50 = math.exp %49 : vector<32x16xf32>
    %cst_14 = arith.constant dense<0.000000e+00> : vector<32xf32>
    %51 = vector.multi_reduction <add>, %50, %cst_14 [1] : vector<32x16xf32> to vector<32xf32>
    %52 = vector.shape_cast %51 : vector<32xf32> to vector<32x1xf32>
    %53 = tpu.reciprocal %52 {approx = true} : vector<32x1xf32> -> vector<32x1xf32>
    %54 = vector.broadcast %53 : vector<32x1xf32> to vector<32x16xf32>
    %55 = arith.mulf %50, %54 : vector<32x16xf32>
    %56 = tpu.concatenate %22, %33, %44, %55 in 1 : vector<32x16xf32>, vector<32x16xf32>, vector<32x16xf32>, vector<32x16xf32> -> vector<32x64xf32>
    %c0_15 = arith.constant 0 : index
    %c0_16 = arith.constant 0 : index
    %c0_17 = arith.constant 0 : index
    %57 = vector.load %arg7[%c0_15, %c0_16, %c0_17] : memref<1x32x64xf32, #tpu.memory_space<vmem>>, vector<1x32x64xf32>
    %58 = vector.shape_cast %57 : vector<1x32x64xf32> to vector<32x64xf32>
    %59 = vector.shape_cast %56 : vector<32x64xf32> to vector<1x32x64xf32>
    tpu.vector_store %arg7[%c0_15, %c0_16, %c0_17], %59 {strides = array<i32>} : memref<1x32x64xf32, #tpu.memory_space<vmem>>, vector<1x32x64xf32>,
    %c0_18 = arith.constant 0 : index
    %c0_19 = arith.constant 0 : index
    %60 = vector.load %arg9[%c0_18, %c0_19] : memref<128x64xf32, #tpu.memory_space<vmem>>, vector<128x64xf32>
    %cst_20 = arith.constant dense<0.000000e+00> : vector<128x64xf32>
    %61 = tpu.matmul %10, %56, %cst_20 {dimension_numbers = #tpu.dot_dimension_numbers<[0], [0], [1], [1], [0, 1, 1, 1], [], []>} : vector<32x128xf32>, vector<32x64xf32>, vector<128x64xf32> -> vector<128x64xf32>
    %62 = arith.addf %60, %61 : vector<128x64xf32>
    %c0_21 = arith.constant 0 : index
    %c0_22 = arith.constant 0 : index
    %63 = vector.load %arg9[%c0_21, %c0_22] : memref<128x64xf32, #tpu.memory_space<vmem>>, vector<128x64xf32>
    tpu.vector_store %arg9[%c0_21, %c0_22], %62 {strides = array<i32>} : memref<128x64xf32, #tpu.memory_space<vmem>>, vector<128x64xf32>,
    %c0_23 = arith.constant 0 : index
    %c0_24 = arith.constant 0 : index
    %64 = vector.load %arg10[%c0_23, %c0_24] : memref<1x64xf32, #tpu.memory_space<vmem>>, vector<1x64xf32>
    %cst_25 = arith.constant dense<0.000000e+00> : vector<64xf32>
    %65 = vector.multi_reduction <add>, %56, %cst_25 [0] : vector<32x64xf32> to vector<64xf32>
    %66 = vector.shape_cast %65 : vector<64xf32> to vector<1x64xf32>
    %67 = arith.addf %64, %66 : vector<1x64xf32>
    %c0_26 = arith.constant 0 : index
    %c0_27 = arith.constant 0 : index
    %68 = vector.load %arg10[%c0_26, %c0_27] : memref<1x64xf32, #tpu.memory_space<vmem>>, vector<1x64xf32>
    tpu.vector_store %arg10[%c0_26, %c0_27], %67 {strides = array<i32>} : memref<1x64xf32, #tpu.memory_space<vmem>>, vector<1x64xf32>,
    %c1_i32 = arith.constant 1 : i32
    %69 = arith.cmpi eq, %arg1, %c1_i32 : i32
    %70 = arith.extui %69 : i1 to i32
    %c0_i32_28 = arith.constant 0 : i32
    %71 = arith.cmpi ne, %70, %c0_i32_28 : i32
    scf.if %71 {
      %c0_29 = arith.constant 0 : index
      %c0_30 = arith.constant 0 : index
      %72 = vector.load %arg10[%c0_29, %c0_30] : memref<1x64xf32, #tpu.memory_space<vmem>>, vector<1x16xf32>
      %cst_31 = arith.constant 9.99999974E-6 : f32
      %73 = vector.broadcast %cst_31 : f32 to vector<1x16xf32>
      %74 = arith.addf %72, %73 : vector<1x16xf32>
      %75 = tpu.reciprocal %74 {approx = true} : vector<1x16xf32> -> vector<1x16xf32>
      %c0_32 = arith.constant 0 : index
      %c0_33 = arith.constant 0 : index
      %76 = vector.load %arg9[%c0_32, %c0_33] : memref<128x64xf32, #tpu.memory_space<vmem>>, vector<32x16xf32>
      %77 = vector.broadcast %75 : vector<1x16xf32> to vector<32x16xf32>
      %78 = arith.mulf %76, %77 : vector<32x16xf32>
      %c0_34 = arith.constant 0 : index
      %c0_35 = arith.constant 0 : index
      %79 = vector.load %arg5[%c0_34, %c0_35] : memref<96x32xf32, #tpu.memory_space<vmem>>, vector<96x32xf32>
      %cst_36 = arith.constant dense<0.000000e+00> : vector<96x16xf32>
      %80 = tpu.matmul %79, %78, %cst_36 {dimension_numbers = #tpu.dot_dimension_numbers<[1], [0], [0], [1], [0, 0, 1, 1], [], []>} : vector<96x32xf32>, vector<32x16xf32>, vector<96x16xf32> -> vector<96x16xf32>
      %81 = vector.extract_strided_slice %80 {offsets = [0, 0], sizes = [32, 16], strides = [1, 1]} : vector<96x16xf32> to vector<32x16xf32>
      %82 = vector.extract_strided_slice %80 {offsets = [32, 0], sizes = [32, 16], strides = [1, 1]} : vector<96x16xf32> to vector<32x16xf32>
      %83 = vector.extract_strided_slice %80 {offsets = [64, 0], sizes = [32, 16], strides = [1, 1]} : vector<96x16xf32> to vector<32x16xf32>
      %cst_37 = arith.constant dense<0.000000e+00> : vector<16x16xf32>
      %84 = tpu.matmul %81, %82, %cst_37 {dimension_numbers = #tpu.dot_dimension_numbers<[0], [0], [1], [1], [0, 1, 1, 1], [], []>} : vector<32x16xf32>, vector<32x16xf32>, vector<16x16xf32> -> vector<16x16xf32>
      %cst_38 = arith.constant 0.176776692 : f32
      %85 = vector.broadcast %cst_38 : f32 to vector<16x16xf32>
      %86 = arith.mulf %84, %85 : vector<16x16xf32>
      %cst_39 = arith.constant dense<0xFF800000> : vector<16xf32>
      %87 = vector.multi_reduction <maximumf>, %86, %cst_39 [1] : vector<16x16xf32> to vector<16xf32>
      %88 = vector.shape_cast %87 : vector<16xf32> to vector<16x1xf32>
      %89 = vector.broadcast %88 : vector<16x1xf32> to vector<16x16xf32>
      %90 = arith.subf %86, %89 : vector<16x16xf32>
      %91 = math.exp %90 : vector<16x16xf32>
      %cst_40 = arith.constant dense<0.000000e+00> : vector<16xf32>
      %92 = vector.multi_reduction <add>, %91, %cst_40 [1] : vector<16x16xf32> to vector<16xf32>
      %93 = vector.shape_cast %92 : vector<16xf32> to vector<16x1xf32>
      %94 = tpu.reciprocal %93 {approx = true} : vector<16x1xf32> -> vector<16x1xf32>
      %95 = vector.broadcast %94 : vector<16x1xf32> to vector<16x16xf32>
      %96 = arith.mulf %91, %95 : vector<16x16xf32>
      %cst_41 = arith.constant dense<0.000000e+00> : vector<32x16xf32>
      %97 = tpu.matmul %83, %96, %cst_41 {dimension_numbers = #tpu.dot_dimension_numbers<[1], [1], [0], [0], [0, 0, 1, 0], [], []>} : vector<32x16xf32>, vector<16x16xf32>, vector<32x16xf32> -> vector<32x16xf32>
      %c0_42 = arith.constant 0 : index
      %c0_43 = arith.constant 0 : index
      %98 = vector.load %arg6[%c0_42, %c0_43] : memref<128x128xf32, #tpu.memory_space<vmem>>, vector<32x128xf32>
      %cst_44 = arith.constant dense<0.000000e+00> : vector<16x128xf32>
      %99 = tpu.matmul %97, %98, %cst_44 {dimension_numbers = #tpu.dot_dimension_numbers<[0], [0], [1], [1], [0, 1, 1, 1], [], []>} : vector<32x16xf32>, vector<32x128xf32>, vector<16x128xf32> -> vector<16x128xf32>
      %c0_45 = arith.constant 0 : index
      %c16 = arith.constant 16 : index
      %100 = vector.load %arg10[%c0_45, %c16] : memref<1x64xf32, #tpu.memory_space<vmem>>, vector<1x16xf32>
      %cst_46 = arith.constant 9.99999974E-6 : f32
      %101 = vector.broadcast %cst_46 : f32 to vector<1x16xf32>
      %102 = arith.addf %100, %101 : vector<1x16xf32>
      %103 = tpu.reciprocal %102 {approx = true} : vector<1x16xf32> -> vector<1x16xf32>
      %c32 = arith.constant 32 : index
      %c16_47 = arith.constant 16 : index
      %104 = vector.load %arg9[%c32, %c16_47] : memref<128x64xf32, #tpu.memory_space<vmem>>, vector<32x16xf32>
      %105 = vector.broadcast %103 : vector<1x16xf32> to vector<32x16xf32>
      %106 = arith.mulf %104, %105 : vector<32x16xf32>
      %c0_48 = arith.constant 0 : index
      %c0_49 = arith.constant 0 : index
      %107 = vector.load %arg5[%c0_48, %c0_49] : memref<96x32xf32, #tpu.memory_space<vmem>>, vector<96x32xf32>
      %cst_50 = arith.constant dense<0.000000e+00> : vector<96x16xf32>
      %108 = tpu.matmul %107, %106, %cst_50 {dimension_numbers = #tpu.dot_dimension_numbers<[1], [0], [0], [1], [0, 0, 1, 1], [], []>} : vector<96x32xf32>, vector<32x16xf32>, vector<96x16xf32> -> vector<96x16xf32>
      %109 = vector.extract_strided_slice %108 {offsets = [0, 0], sizes = [32, 16], strides = [1, 1]} : vector<96x16xf32> to vector<32x16xf32>
      %110 = vector.extract_strided_slice %108 {offsets = [32, 0], sizes = [32, 16], strides = [1, 1]} : vector<96x16xf32> to vector<32x16xf32>
      %111 = vector.extract_strided_slice %108 {offsets = [64, 0], sizes = [32, 16], strides = [1, 1]} : vector<96x16xf32> to vector<32x16xf32>
      %cst_51 = arith.constant dense<0.000000e+00> : vector<16x16xf32>
      %112 = tpu.matmul %109, %110, %cst_51 {dimension_numbers = #tpu.dot_dimension_numbers<[0], [0], [1], [1], [0, 1, 1, 1], [], []>} : vector<32x16xf32>, vector<32x16xf32>, vector<16x16xf32> -> vector<16x16xf32>
      %cst_52 = arith.constant 0.176776692 : f32
      %113 = vector.broadcast %cst_52 : f32 to vector<16x16xf32>
      %114 = arith.mulf %112, %113 : vector<16x16xf32>
      %cst_53 = arith.constant dense<0xFF800000> : vector<16xf32>
      %115 = vector.multi_reduction <maximumf>, %114, %cst_53 [1] : vector<16x16xf32> to vector<16xf32>
      %116 = vector.shape_cast %115 : vector<16xf32> to vector<16x1xf32>
      %117 = vector.broadcast %116 : vector<16x1xf32> to vector<16x16xf32>
      %118 = arith.subf %114, %117 : vector<16x16xf32>
      %119 = math.exp %118 : vector<16x16xf32>
      %cst_54 = arith.constant dense<0.000000e+00> : vector<16xf32>
      %120 = vector.multi_reduction <add>, %119, %cst_54 [1] : vector<16x16xf32> to vector<16xf32>
      %121 = vector.shape_cast %120 : vector<16xf32> to vector<16x1xf32>
      %122 = tpu.reciprocal %121 {approx = true} : vector<16x1xf32> -> vector<16x1xf32>
      %123 = vector.broadcast %122 : vector<16x1xf32> to vector<16x16xf32>
      %124 = arith.mulf %119, %123 : vector<16x16xf32>
      %cst_55 = arith.constant dense<0.000000e+00> : vector<32x16xf32>
      %125 = tpu.matmul %111, %124, %cst_55 {dimension_numbers = #tpu.dot_dimension_numbers<[1], [1], [0], [0], [0, 0, 1, 0], [], []>} : vector<32x16xf32>, vector<16x16xf32>, vector<32x16xf32> -> vector<32x16xf32>
      %c32_56 = arith.constant 32 : index
      %c0_57 = arith.constant 0 : index
      %126 = vector.load %arg6[%c32_56, %c0_57] : memref<128x128xf32, #tpu.memory_space<vmem>>, vector<32x128xf32>
      %cst_58 = arith.constant dense<0.000000e+00> : vector<16x128xf32>
      %127 = tpu.matmul %125, %126, %cst_58 {dimension_numbers = #tpu.dot_dimension_numbers<[0], [0], [1], [1], [0, 1, 1, 1], [], []>} : vector<32x16xf32>, vector<32x128xf32>, vector<16x128xf32> -> vector<16x128xf32>
      %c0_59 = arith.constant 0 : index
      %c32_60 = arith.constant 32 : index
      %128 = vector.load %arg10[%c0_59, %c32_60] : memref<1x64xf32, #tpu.memory_space<vmem>>, vector<1x16xf32>
      %cst_61 = arith.constant 9.99999974E-6 : f32
      %129 = vector.broadcast %cst_61 : f32 to vector<1x16xf32>
      %130 = arith.addf %128, %129 : vector<1x16xf32>
      %131 = tpu.reciprocal %130 {approx = true} : vector<1x16xf32> -> vector<1x16xf32>
      %c64 = arith.constant 64 : index
      %c32_62 = arith.constant 32 : index
      %132 = vector.load %arg9[%c64, %c32_62] : memref<128x64xf32, #tpu.memory_space<vmem>>, vector<32x16xf32>
      %133 = vector.broadcast %131 : vector<1x16xf32> to vector<32x16xf32>
      %134 = arith.mulf %132, %133 : vector<32x16xf32>
      %c0_63 = arith.constant 0 : index
      %c0_64 = arith.constant 0 : index
      %135 = vector.load %arg5[%c0_63, %c0_64] : memref<96x32xf32, #tpu.memory_space<vmem>>, vector<96x32xf32>
      %cst_65 = arith.constant dense<0.000000e+00> : vector<96x16xf32>
      %136 = tpu.matmul %135, %134, %cst_65 {dimension_numbers = #tpu.dot_dimension_numbers<[1], [0], [0], [1], [0, 0, 1, 1], [], []>} : vector<96x32xf32>, vector<32x16xf32>, vector<96x16xf32> -> vector<96x16xf32>
      %137 = vector.extract_strided_slice %136 {offsets = [0, 0], sizes = [32, 16], strides = [1, 1]} : vector<96x16xf32> to vector<32x16xf32>
      %138 = vector.extract_strided_slice %136 {offsets = [32, 0], sizes = [32, 16], strides = [1, 1]} : vector<96x16xf32> to vector<32x16xf32>
      %139 = vector.extract_strided_slice %136 {offsets = [64, 0], sizes = [32, 16], strides = [1, 1]} : vector<96x16xf32> to vector<32x16xf32>
      %cst_66 = arith.constant dense<0.000000e+00> : vector<16x16xf32>
      %140 = tpu.matmul %137, %138, %cst_66 {dimension_numbers = #tpu.dot_dimension_numbers<[0], [0], [1], [1], [0, 1, 1, 1], [], []>} : vector<32x16xf32>, vector<32x16xf32>, vector<16x16xf32> -> vector<16x16xf32>
      %cst_67 = arith.constant 0.176776692 : f32
      %141 = vector.broadcast %cst_67 : f32 to vector<16x16xf32>
      %142 = arith.mulf %140, %141 : vector<16x16xf32>
      %cst_68 = arith.constant dense<0xFF800000> : vector<16xf32>
      %143 = vector.multi_reduction <maximumf>, %142, %cst_68 [1] : vector<16x16xf32> to vector<16xf32>
      %144 = vector.shape_cast %143 : vector<16xf32> to vector<16x1xf32>
      %145 = vector.broadcast %144 : vector<16x1xf32> to vector<16x16xf32>
      %146 = arith.subf %142, %145 : vector<16x16xf32>
      %147 = math.exp %146 : vector<16x16xf32>
      %cst_69 = arith.constant dense<0.000000e+00> : vector<16xf32>
      %148 = vector.multi_reduction <add>, %147, %cst_69 [1] : vector<16x16xf32> to vector<16xf32>
      %149 = vector.shape_cast %148 : vector<16xf32> to vector<16x1xf32>
      %150 = tpu.reciprocal %149 {approx = true} : vector<16x1xf32> -> vector<16x1xf32>
      %151 = vector.broadcast %150 : vector<16x1xf32> to vector<16x16xf32>
      %152 = arith.mulf %147, %151 : vector<16x16xf32>
      %cst_70 = arith.constant dense<0.000000e+00> : vector<32x16xf32>
      %153 = tpu.matmul %139, %152, %cst_70 {dimension_numbers = #tpu.dot_dimension_numbers<[1], [1], [0], [0], [0, 0, 1, 0], [], []>} : vector<32x16xf32>, vector<16x16xf32>, vector<32x16xf32> -> vector<32x16xf32>
      %c64_71 = arith.constant 64 : index
      %c0_72 = arith.constant 0 : index
      %154 = vector.load %arg6[%c64_71, %c0_72] : memref<128x128xf32, #tpu.memory_space<vmem>>, vector<32x128xf32>
      %cst_73 = arith.constant dense<0.000000e+00> : vector<16x128xf32>
      %155 = tpu.matmul %153, %154, %cst_73 {dimension_numbers = #tpu.dot_dimension_numbers<[0], [0], [1], [1], [0, 1, 1, 1], [], []>} : vector<32x16xf32>, vector<32x128xf32>, vector<16x128xf32> -> vector<16x128xf32>
      %c0_74 = arith.constant 0 : index
      %c48 = arith.constant 48 : index
      %156 = vector.load %arg10[%c0_74, %c48] : memref<1x64xf32, #tpu.memory_space<vmem>>, vector<1x16xf32>
      %cst_75 = arith.constant 9.99999974E-6 : f32
      %157 = vector.broadcast %cst_75 : f32 to vector<1x16xf32>
      %158 = arith.addf %156, %157 : vector<1x16xf32>
      %159 = tpu.reciprocal %158 {approx = true} : vector<1x16xf32> -> vector<1x16xf32>
      %c96 = arith.constant 96 : index
      %c48_76 = arith.constant 48 : index
      %160 = vector.load %arg9[%c96, %c48_76] : memref<128x64xf32, #tpu.memory_space<vmem>>, vector<32x16xf32>
      %161 = vector.broadcast %159 : vector<1x16xf32> to vector<32x16xf32>
      %162 = arith.mulf %160, %161 : vector<32x16xf32>
      %c0_77 = arith.constant 0 : index
      %c0_78 = arith.constant 0 : index
      %163 = vector.load %arg5[%c0_77, %c0_78] : memref<96x32xf32, #tpu.memory_space<vmem>>, vector<96x32xf32>
      %cst_79 = arith.constant dense<0.000000e+00> : vector<96x16xf32>
      %164 = tpu.matmul %163, %162, %cst_79 {dimension_numbers = #tpu.dot_dimension_numbers<[1], [0], [0], [1], [0, 0, 1, 1], [], []>} : vector<96x32xf32>, vector<32x16xf32>, vector<96x16xf32> -> vector<96x16xf32>
      %165 = vector.extract_strided_slice %164 {offsets = [0, 0], sizes = [32, 16], strides = [1, 1]} : vector<96x16xf32> to vector<32x16xf32>
      %166 = vector.extract_strided_slice %164 {offsets = [32, 0], sizes = [32, 16], strides = [1, 1]} : vector<96x16xf32> to vector<32x16xf32>
      %167 = vector.extract_strided_slice %164 {offsets = [64, 0], sizes = [32, 16], strides = [1, 1]} : vector<96x16xf32> to vector<32x16xf32>
      %cst_80 = arith.constant dense<0.000000e+00> : vector<16x16xf32>
      %168 = tpu.matmul %165, %166, %cst_80 {dimension_numbers = #tpu.dot_dimension_numbers<[0], [0], [1], [1], [0, 1, 1, 1], [], []>} : vector<32x16xf32>, vector<32x16xf32>, vector<16x16xf32> -> vector<16x16xf32>
      %cst_81 = arith.constant 0.176776692 : f32
      %169 = vector.broadcast %cst_81 : f32 to vector<16x16xf32>
      %170 = arith.mulf %168, %169 : vector<16x16xf32>
      %cst_82 = arith.constant dense<0xFF800000> : vector<16xf32>
      %171 = vector.multi_reduction <maximumf>, %170, %cst_82 [1] : vector<16x16xf32> to vector<16xf32>
      %172 = vector.shape_cast %171 : vector<16xf32> to vector<16x1xf32>
      %173 = vector.broadcast %172 : vector<16x1xf32> to vector<16x16xf32>
      %174 = arith.subf %170, %173 : vector<16x16xf32>
      %175 = math.exp %174 : vector<16x16xf32>
      %cst_83 = arith.constant dense<0.000000e+00> : vector<16xf32>
      %176 = vector.multi_reduction <add>, %175, %cst_83 [1] : vector<16x16xf32> to vector<16xf32>
      %177 = vector.shape_cast %176 : vector<16xf32> to vector<16x1xf32>
      %178 = tpu.reciprocal %177 {approx = true} : vector<16x1xf32> -> vector<16x1xf32>
      %179 = vector.broadcast %178 : vector<16x1xf32> to vector<16x16xf32>
      %180 = arith.mulf %175, %179 : vector<16x16xf32>
      %cst_84 = arith.constant dense<0.000000e+00> : vector<32x16xf32>
      %181 = tpu.matmul %167, %180, %cst_84 {dimension_numbers = #tpu.dot_dimension_numbers<[1], [1], [0], [0], [0, 0, 1, 0], [], []>} : vector<32x16xf32>, vector<16x16xf32>, vector<32x16xf32> -> vector<32x16xf32>
      %c96_85 = arith.constant 96 : index
      %c0_86 = arith.constant 0 : index
      %182 = vector.load %arg6[%c96_85, %c0_86] : memref<128x128xf32, #tpu.memory_space<vmem>>, vector<32x128xf32>
      %cst_87 = arith.constant dense<0.000000e+00> : vector<16x128xf32>
      %183 = tpu.matmul %181, %182, %cst_87 {dimension_numbers = #tpu.dot_dimension_numbers<[0], [0], [1], [1], [0, 1, 1, 1], [], []>} : vector<32x16xf32>, vector<32x128xf32>, vector<16x128xf32> -> vector<16x128xf32>
      %184 = tpu.concatenate %99, %127, %155, %183 in 0 : vector<16x128xf32>, vector<16x128xf32>, vector<16x128xf32>, vector<16x128xf32> -> vector<64x128xf32>
      %c0_88 = arith.constant 0 : index
      %c0_89 = arith.constant 0 : index
      %c0_90 = arith.constant 0 : index
      %185 = vector.load %arg8[%c0_88, %c0_89, %c0_90] : memref<1x64x128xf32, #tpu.memory_space<vmem>>, vector<1x64x128xf32>
      %186 = vector.shape_cast %185 : vector<1x64x128xf32> to vector<64x128xf32>
      %187 = vector.shape_cast %184 : vector<64x128xf32> to vector<1x64x128xf32>
      tpu.vector_store %arg8[%c0_88, %c0_89, %c0_90], %187 {strides = array<i32>} : memref<1x64x128xf32, #tpu.memory_space<vmem>>, vector<1x64x128xf32>,
    } else {
    }
    return
  }
  func.func @transform_0(%arg0: i32, %arg1: i32) -> (i32, i32, i32) {
    %c0_i32 = arith.constant 0 : i32
    %c0_i32_0 = arith.constant 0 : i32
    return %arg0, %arg1, %c0_i32 : i32, i32, i32
  }
  func.func @transform_1(%arg0: i32, %arg1: i32) -> (i32, i32) {
    %c0_i32 = arith.constant 0 : i32
    %c0_i32_0 = arith.constant 0 : i32
    %c0_i32_1 = arith.constant 0 : i32
    return %c0_i32, %c0_i32_0 : i32, i32
  }
  func.func @transform_2(%arg0: i32, %arg1: i32) -> (i32, i32) {
    %c0_i32 = arith.constant 0 : i32
    %c0_i32_0 = arith.constant 0 : i32
    %c0_i32_1 = arith.constant 0 : i32
    return %c0_i32, %c0_i32_0 : i32, i32
  }
  func.func @transform_3(%arg0: i32, %arg1: i32) -> (i32, i32) {
    %c0_i32 = arith.constant 0 : i32
    %c0_i32_0 = arith.constant 0 : i32
    %c0_i32_1 = arith.constant 0 : i32
    return %c0_i32, %c0_i32_0 : i32, i32
  }
  func.func @transform_4(%arg0: i32, %arg1: i32) -> (i32, i32) {
    %c0_i32 = arith.constant 0 : i32
    %c0_i32_0 = arith.constant 0 : i32
    %c0_i32_1 = arith.constant 0 : i32
    return %c0_i32, %c0_i32_0 : i32, i32
  }
  func.func @transform_5(%arg0: i32, %arg1: i32) -> (i32, i32, i32) {
    %c0_i32 = arith.constant 0 : i32
    %c0_i32_0 = arith.constant 0 : i32
    return %arg0, %arg1, %c0_i32 : i32, i32, i32
  }
  func.func @transform_6(%arg0: i32, %arg1: i32) -> (i32, i32, i32) {
    %c0_i32 = arith.constant 0 : i32
    %c0_i32_0 = arith.constant 0 : i32
    %c0_i32_1 = arith.constant 0 : i32
    return %arg0, %c0_i32, %c0_i32_0 : i32, i32, i32
  }
}

</mosaic_0001>

<llo_original>
// kernel: tpu_custom_call.1
$region0: #{tpu_custom_call.1}
  #allocation0 [shape = 'u32[]', space=smem, size = 0x4, offset = 0x4, fixed_abs, tag = 'smem constant byte address 0x4 - core index']
  #allocation1 [shape = 'u32[144,128]{1,0:T(1,128)}', space=vmem, size = 0x12000, scoped, tag = 'internal scratch']
  #allocation2 [shape = 'f32[128,64]{1,0:T(8,128)}', space=vmem, size = 0x10000, scoped, tag = 'scratch operand']
  #allocation3 [shape = 'f32[1,64]{1,0:T(1,128)}', space=vmem, size = 0x200, scoped, tag = 'scratch operand']
  %s0 = inlined_call_operand.vmem [shape: f32[2,64,128], index: 0, kind: input, shape index: {}]
  %s1 = inlined_call_operand.vmem [shape: f32[128,192], index: 1, kind: input, shape index: {}]
  %s2 = inlined_call_operand.vmem [shape: f32[1,192], index: 2, kind: input, shape index: {}]
  %s3 = inlined_call_operand.vmem [shape: f32[96,32], index: 3, kind: input, shape index: {}]
  %s4 = inlined_call_operand.vmem [shape: f32[128,128], index: 4, kind: input, shape index: {}]
  %s5 = inlined_call_operand.hbm [shape: f32[2,64,64], index: 5, kind: output, shape index: {0}]
  %s6 = inlined_call_operand.hbm [shape: f32[2,64,128], index: 6, kind: output, shape index: {1}]
  %7 = xla_tuple %s5, %s6
  %s8 = sld [smem:[#allocation0]]
  $region69: #{tpu_custom_call.1} parent=0
    _
  %s10 = ssub.s32 1, %s8
  %s11 = scalar_select 0, %s10, %s8
  $region1: #{tpu_custom_call.1} parent=0
    #allocation4 [shape = 'u8[32768]{0}', space=vmem, size = 0x8000, scoped, tag = 'output window, operand 0']
    #allocation5 [shape = 's32[2]{0}', space=sflag, size = 0x8, scoped, tag = 'scoped memory for tpu_custom_call.1']
    #allocation6 [shape = 'u8[65536]{0}', space=vmem, size = 0x10000, scoped, tag = 'output window, operand 1']
    #allocation7 [shape = 's32[2]{0}', space=sflag, size = 0x8, scoped, tag = 'scoped memory for tpu_custom_call.1']
    %12 = vsyncpa [#allocation5], 0
    %s13 = scalar_lea.sflag [#allocation5], 1
    %14 = vsyncpa %s13, 0
    %15 = vsyncpa [#allocation7], 0
    %s16 = scalar_lea.sflag [#allocation7], 1
    %17 = vsyncpa %s16, 0
    loop: start=0, step=1, limit=6
    $region2: #{tpu_custom_call.1} parent=1 // loop_pre_header
      _
    $region3: #{tpu_custom_call.1} parent=1 // loop_header
      %s19 = sphi 0, %s23
      %p20 = scmp.ge.s32.totalorder %s19, 6
      %s26 = sphi 0, %s38
      %s27 = sphi 0, %s34
      %s28 = sphi 0, %s26
      %s29 = sphi 0, %s27
      %s30 = sphi 0, %s28
      %s31 = sphi 0, %s29
      %s43 = sphi 0, %s45
      %s46 = sphi 0, %s43
      %s47 = sphi 0, %s46
      %s63 = sphi 0, %s47
      %s67 = sphi 0, %s67
      %s69 = sphi 0, %s67
      %s70 = sphi 0, %s69
      %s84 = sphi 0, %s70
      %s88 = sphi 0, %s88
      %s90 = sphi 0, %s88
      %s91 = sphi 0, %s90
      %s105 = sphi 0, %s91
      %s109 = sphi 0, %s109
      %s111 = sphi 0, %s109
      %s112 = sphi 0, %s111
      %s126 = sphi 0, %s112
      %s130 = sphi 0, %s130
      %s132 = sphi 0, %s130
      %s133 = sphi 0, %s132
      %s147 = sphi 0, %s133
      %s155 = sphi 0, %s157
      %s158 = sphi 0, %s155
      %s159 = sphi 0, %s158
      %s175 = sphi 0, %s159
      %s181 = sphi 0, %s183
      %s184 = sphi 0, %s181
      %s185 = sphi 0, %s184
      %s201 = sphi 0, %s185
    $region4: #{tpu_custom_call.1} parent=1 // loop_header_branch
      %22 = sbr.rel (%p20) target = $region8
    $region5: #{tpu_custom_call.1} parent=1 // loop_body
      %s24 = ssub.s32 %s19, 1
      %s25 = ssub.s32 %s19, 2
      %s32 = sadd.s32 1, %s27
      %p33 = scmp.ge.s32.totalorder %s32, 2
      %s34 = scalar_select %p33, 0, %s32
      %s35 = sadd.s32 1, %s26
      %s36 = scalar_select %p33, %s35, %s26
      %p37 = scmp.ge.s32.totalorder %s36, 2
      %s38 = scalar_select %p37, 0, %s36
      %s39 = ssub.s32 %s26, %s38
      %s40 = ssub.s32 %s27, %s34
      %s41 = sor.u32 %s39, %s40
      %p42 = scmp.eq.s32.totalorder %s41, 0
      %s44 = sadd.s32 %s43, 1
      %s45 = scalar_select %p42, %s43, %s44
      %p48 = pneg %p42
      %p49 = scmp.eq.s32.totalorder %s19, 3
      %p50 = por %p48, %p49
      %p51 = scmp.ne.s32.totalorder %s43, %s46
      %p52 = scmp.eq.s32.totalorder %s19, 0
      %p53 = por %p51, %p52
      %p54 = scmp.ne.s32.totalorder %s43, %s46
      %p55 = scmp.eq.s32.totalorder %s24, 3
      %p56 = por %p54, %p55
      %p57 = scmp.ne.s32.totalorder %s46, %s47
      %p58 = scmp.eq.s32.totalorder %s24, 0
      %p59 = por %p57, %p58
      %p60 = scmp.ne.s32.totalorder %s46, %s47
      %p61 = scmp.eq.s32.totalorder %s25, 3
      %p62 = por %p60, %p61
      %p64 = scmp.ne.s32.totalorder %s47, %s63
      %p65 = scmp.eq.s32.totalorder %s25, 0
      %p66 = por %p64, %p65
      %s68 = sadd.s32 %s67, 1
      %p71 = scmp.eq.s32.totalorder %s19, 3
      %p72 = scmp.ne.s32.totalorder %s67, %s69
      %p73 = scmp.eq.s32.totalorder %s19, 0
      %p74 = por %p72, %p73
      %p75 = scmp.ne.s32.totalorder %s67, %s69
      %p76 = scmp.eq.s32.totalorder %s24, 3
      %p77 = por %p75, %p76
      %p78 = scmp.ne.s32.totalorder %s69, %s70
      %p79 = scmp.eq.s32.totalorder %s24, 0
      %p80 = por %p78, %p79
      %p81 = scmp.ne.s32.totalorder %s69, %s70
      %p82 = scmp.eq.s32.totalorder %s25, 3
      %p83 = por %p81, %p82
      %p85 = scmp.ne.s32.totalorder %s70, %s84
      %p86 = scmp.eq.s32.totalorder %s25, 0
      %p87 = por %p85, %p86
      %s89 = sadd.s32 %s88, 1
      %p92 = scmp.eq.s32.totalorder %s19, 3
      %p93 = scmp.ne.s32.totalorder %s88, %s90
      %p94 = scmp.eq.s32.totalorder %s19, 0
      %p95 = por %p93, %p94
      %p96 = scmp.ne.s32.totalorder %s88, %s90
      %p97 = scmp.eq.s32.totalorder %s24, 3
      %p98 = por %p96, %p97
      %p99 = scmp.ne.s32.totalorder %s90, %s91
      %p100 = scmp.eq.s32.totalorder %s24, 0
      %p101 = por %p99, %p100
      %p102 = scmp.ne.s32.totalorder %s90, %s91
      %p103 = scmp.eq.s32.totalorder %s25, 3
      %p104 = por %p102, %p103
      %p106 = scmp.ne.s32.totalorder %s91, %s105
      %p107 = scmp.eq.s32.totalorder %s25, 0
      %p108 = por %p106, %p107
      %s110 = sadd.s32 %s109, 1
      %p113 = scmp.eq.s32.totalorder %s19, 3
      %p114 = scmp.ne.s32.totalorder %s109, %s111
      %p115 = scmp.eq.s32.totalorder %s19, 0
      %p116 = por %p114, %p115
      %p117 = scmp.ne.s32.totalorder %s109, %s111
      %p118 = scmp.eq.s32.totalorder %s24, 3
      %p119 = por %p117, %p118
      %p120 = scmp.ne.s32.totalorder %s111, %s112
      %p121 = scmp.eq.s32.totalorder %s24, 0
      %p122 = por %p120, %p121
      %p123 = scmp.ne.s32.totalorder %s111, %s112
      %p124 = scmp.eq.s32.totalorder %s25, 3
      %p125 = por %p123, %p124
      %p127 = scmp.ne.s32.totalorder %s112, %s126
      %p128 = scmp.eq.s32.totalorder %s25, 0
      %p129 = por %p127, %p128
      %s131 = sadd.s32 %s130, 1
      %p134 = scmp.eq.s32.totalorder %s19, 3
      %p135 = scmp.ne.s32.totalorder %s130, %s132
      %p136 = scmp.eq.s32.totalorder %s19, 0
      %p137 = por %p135, %p136
      %p138 = scmp.ne.s32.totalorder %s130, %s132
      %p139 = scmp.eq.s32.totalorder %s24, 3
      %p140 = por %p138, %p139
      %p141 = scmp.ne.s32.totalorder %s132, %s133
      %p142 = scmp.eq.s32.totalorder %s24, 0
      %p143 = por %p141, %p142
      %p144 = scmp.ne.s32.totalorder %s132, %s133
      %p145 = scmp.eq.s32.totalorder %s25, 3
      %p146 = por %p144, %p145
      %p148 = scmp.ne.s32.totalorder %s133, %s147
      %p149 = scmp.eq.s32.totalorder %s25, 0
      %p150 = por %p148, %p149
      %s151 = ssub.s32 %s26, %s38
      %s152 = ssub.s32 %s27, %s34
      %s153 = sor.u32 %s151, %s152
      %p154 = scmp.eq.s32.totalorder %s153, 0
      %s156 = sadd.s32 %s155, 1
      %s157 = scalar_select %p154, %s155, %s156
      %p160 = pneg %p154
      %p161 = scmp.eq.s32.totalorder %s19, 3
      %p162 = por %p160, %p161
      %p163 = scmp.ne.s32.totalorder %s155, %s158
      %p164 = scmp.eq.s32.totalorder %s19, 0
      %p165 = por %p163, %p164
      %p166 = scmp.ne.s32.totalorder %s155, %s158
      %p167 = scmp.eq.s32.totalorder %s24, 3
      %p168 = por %p166, %p167
      %p169 = scmp.ne.s32.totalorder %s158, %s159
      %p170 = scmp.eq.s32.totalorder %s24, 0
      %p171 = por %p169, %p170
      %p172 = scmp.ne.s32.totalorder %s158, %s159
      %p173 = scmp.eq.s32.totalorder %s25, 3
      %p174 = por %p172, %p173
      %p176 = scmp.ne.s32.totalorder %s159, %s175
      %p177 = scmp.eq.s32.totalorder %s25, 0
      %p178 = por %p176, %p177
      %s179 = ssub.s32 %s26, %s38
      %p180 = scmp.eq.s32.totalorder %s179, 0
      %s182 = sadd.s32 %s181, 1
      %s183 = scalar_select %p180, %s181, %s182
      %p186 = pneg %p180
      %p187 = scmp.eq.s32.totalorder %s19, 3
      %p188 = por %p186, %p187
      %p189 = scmp.ne.s32.totalorder %s181, %s184
      %p190 = scmp.eq.s32.totalorder %s19, 0
      %p191 = por %p189, %p190
      %p192 = scmp.ne.s32.totalorder %s181, %s184
      %p193 = scmp.eq.s32.totalorder %s24, 3
      %p194 = por %p192, %p193
      %p195 = scmp.ne.s32.totalorder %s184, %s185
      %p196 = scmp.eq.s32.totalorder %s24, 0
      %p197 = por %p195, %p196
      %p198 = scmp.ne.s32.totalorder %s184, %s185
      %p199 = scmp.eq.s32.totalorder %s25, 3
      %p200 = por %p198, %p199
      %p202 = scmp.ne.s32.totalorder %s185, %s201
      %p203 = scmp.eq.s32.totalorder %s25, 0
      %p204 = por %p202, %p203
      %p205 = scmp.le.s32.totalorder 1, %s19
      %p206 = scmp.lt.s32.totalorder %s19, 5
      %p207 = pnand %p205, %p206
      %p208 = pneg %p207
      // Predicated region
      $region9: #{tpu_custom_call.1} parent=5 // pred_check
        _
      $region10: #{tpu_custom_call.1} parent=5 // pred_check_branch
        %210 = sbr.rel (%p207) target = $region12
      $region11: #{tpu_custom_call.1} parent=5 // pred_region
        %s211 = ssub.s32 %s19, 1
        // Predicated region
        $region13: #{tpu_custom_call.1} parent=11 // pred_check
          %p212 = pneg %p80
        $region14: #{tpu_custom_call.1} parent=11 // pred_check_branch
          %214 = sbr.rel (%p212) target = $region16
        $region15: #{tpu_custom_call.1} parent=11 // pred_region
          _
        $region16: #{tpu_custom_call.1} parent=11 // pred_fallthru
          _
        // Predicated region
        $region17: #{tpu_custom_call.1} parent=11 // pred_check
          %p215 = pneg %p101
        $region18: #{tpu_custom_call.1} parent=11 // pred_check_branch
          %217 = sbr.rel (%p215) target = $region20
        $region19: #{tpu_custom_call.1} parent=11 // pred_region
          _
        $region20: #{tpu_custom_call.1} parent=11 // pred_fallthru
          _
        // Predicated region
        $region21: #{tpu_custom_call.1} parent=11 // pred_check
          %p218 = pneg %p122
        $region22: #{tpu_custom_call.1} parent=11 // pred_check_branch
          %220 = sbr.rel (%p218) target = $region24
        $region23: #{tpu_custom_call.1} parent=11 // pred_region
          _
        $region24: #{tpu_custom_call.1} parent=11 // pred_fallthru
          _
        // Predicated region
        $region25: #{tpu_custom_call.1} parent=11 // pred_check
          %p221 = pneg %p143
        $region26: #{tpu_custom_call.1} parent=11 // pred_check_branch
          %223 = sbr.rel (%p221) target = $region28
        $region27: #{tpu_custom_call.1} parent=11 // pred_region
          _
        $region28: #{tpu_custom_call.1} parent=11 // pred_fallthru
          _
      $region12: #{tpu_custom_call.1} parent=5 // pred_fallthru
        _
      %p224 = scmp.lt.s32.totalorder %s19, 4
      // Predicated region
      $region29: #{tpu_custom_call.1} parent=5 // pred_check
        %p225 = pneg %p224
      $region30: #{tpu_custom_call.1} parent=5 // pred_check_branch
        %227 = sbr.rel (%p225) target = $region32
      $region31: #{tpu_custom_call.1} parent=5 // pred_region
        // Predicated region
        $region33: #{tpu_custom_call.1} parent=31 // pred_check
          %p228 = pneg %p53
        $region34: #{tpu_custom_call.1} parent=31 // pred_check_branch
          %230 = sbr.rel (%p228) target = $region36
        $region35: #{tpu_custom_call.1} parent=31 // pred_region
          %s231 = smul.u32 4, %s27
          %p232 = scmp.lt.s32.totalorder %s26, 1
          %s233 = scalar_select %p232, %s26, 1
          %p234 = scmp.lt.s32.totalorder %s231, 7
          %s235 = scalar_select %p234, %s231, 7
          %s236 = smul.addr %s233, 8
          %s237 = sadd.s32 %s235, %s236
          %s238 = smul.addr %s237, 8
          %s239 = scalar_lea.vmem %s0, %s238
          %s240 = smul.u32 4, %s27
        $region36: #{tpu_custom_call.1} parent=31 // pred_fallthru
          _
      $region32: #{tpu_custom_call.1} parent=5 // pred_fallthru
        _
      %p241 = scmp.le.s32.totalorder 1, %s19
      %p242 = scmp.lt.s32.totalorder %s19, 5
      %p243 = pnand %p241, %p242
      %p244 = pneg %p243
      // Predicated region
      $region37: #{tpu_custom_call.1} parent=5 // pred_check
        _
      $region38: #{tpu_custom_call.1} parent=5 // pred_check_branch
        %246 = sbr.rel (%p243) target = $region40
      $region39: #{tpu_custom_call.1} parent=5 // pred_region
        %s247 = ssub.s32 %s19, 1
        %s248 = smul.u32 4, %s29
        %p249 = scmp.lt.s32.totalorder %s28, 1
        %s250 = scalar_select %p249, %s28, 1
        %p251 = scmp.lt.s32.totalorder %s248, 7
        %s252 = scalar_select %p251, %s248, 7
        %s253 = smul.addr %s250, 8
        %s254 = sadd.s32 %s252, %s253
        %s255 = smul.addr %s254, 8
        %s256 = scalar_lea.vmem %s0, %s255
        %p257 = pneg %p59
        %p258 = pneg %p56
        %p259 = pneg %p80
        %p260 = pneg %p77
        %p261 = pneg %p101
        %p262 = pneg %p98
        %p263 = pneg %p122
        %p264 = pneg %p119
        %p265 = pneg %p143
        %p266 = pneg %p140
        %p267 = pneg %p171
        %p268 = pneg %p168
        %s269 = sand.u32 %s158, 1
        %s270 = scalar_lea.sflag [#allocation5], %s269
        %s271 = sand.u32 %s158, 1
        %s272 = smul.addr %s271, 32
        %s273 = scalar_lea.vmem [#allocation4], %s272
        %p274 = pneg %p197
        %p275 = pneg %p194
        %s276 = sand.u32 %s184, 1
        %s277 = scalar_lea.sflag [#allocation7], %s276
        %s278 = sand.u32 %s184, 1
        %s279 = smul.addr %s278, 64
        %s280 = scalar_lea.vmem [#allocation6], %s279
        %s281 = smul.u32 4, %s29
        %p282 = scmp.lt.s32.totalorder %s28, 1
        %s283 = scalar_select %p282, %s28, 1
        %p284 = scmp.lt.s32.totalorder %s281, 7
        %s285 = scalar_select %p284, %s281, 7
        %s286 = smul.addr %s283, 8
        %s287 = sadd.s32 %s285, %s286
        %s288 = smul.addr %s287, 8
        %s289 = scalar_lea.vmem %s0, %s288
        %s290 = smul.u32 4, %s29
        %s291 = smul.u32 4, %s29
        %p292 = scmp.eq.s32.totalorder %s29, 0
        // Predicated region
        $region41: #{tpu_custom_call.1} parent=39 // pred_check
          %p293 = pneg %p292
        $region42: #{tpu_custom_call.1} parent=39 // pred_check_branch
          %295 = sbr.rel (%p293) target = $region44
        $region43: #{tpu_custom_call.1} parent=39 // pred_region
          %vm296 = vcmask 523264
          %297 = vst.msk [vmem:[#allocation2] sm:$0xff] %vm296, 0.0
          %298 = vst.msk [vmem:[#allocation2 + $0x8] sm:$0xff] %vm296, 0.0
          %299 = vst.msk [vmem:[#allocation2 + $0x10] sm:$0xff] %vm296, 0.0
          %300 = vst.msk [vmem:[#allocation2 + $0x18] sm:$0xff] %vm296, 0.0
          %301 = vst.msk [vmem:[#allocation2 + $0x20] sm:$0xff] %vm296, 0.0
          %302 = vst.msk [vmem:[#allocation2 + $0x28] sm:$0xff] %vm296, 0.0
          %303 = vst.msk [vmem:[#allocation2 + $0x30] sm:$0xff] %vm296, 0.0
          %304 = vst.msk [vmem:[#allocation2 + $0x38] sm:$0xff] %vm296, 0.0
          %305 = vst.msk [vmem:[#allocation2 + $0x40] sm:$0xff] %vm296, 0.0
          %306 = vst.msk [vmem:[#allocation2 + $0x48] sm:$0xff] %vm296, 0.0
          %307 = vst.msk [vmem:[#allocation2 + $0x50] sm:$0xff] %vm296, 0.0
          %308 = vst.msk [vmem:[#allocation2 + $0x58] sm:$0xff] %vm296, 0.0
          %309 = vst.msk [vmem:[#allocation2 + $0x60] sm:$0xff] %vm296, 0.0
          %310 = vst.msk [vmem:[#allocation2 + $0x68] sm:$0xff] %vm296, 0.0
          %311 = vst.msk [vmem:[#allocation2 + $0x70] sm:$0xff] %vm296, 0.0
          %312 = vst.msk [vmem:[#allocation2 + $0x78] sm:$0xff] %vm296, 0.0
          %vm313 = vcmask 516096
          %314 = vst.msk [vmem:[#allocation3] sm:$0x1] %vm313, 0.0
        $region44: #{tpu_custom_call.1} parent=39 // pred_fallthru
          _
        %v315 = vld [vmem:[%s289] sm:$0xff]
        %v316 = vld [vmem:[%s289 + $0x8] sm:$0xff]
        %v317 = vld [vmem:[%s289 + $0x10] sm:$0xff]
        %v318 = vld [vmem:[%s289 + $0x18] sm:$0xff]
        %v319 = vld [vmem:[%s1] sm:$0xff]
        %v320 = vld [vmem:[%s1 + $0x8] sm:$0xff]
        %v321 = vld [vmem:[%s1 + $0x10] sm:$0xff]
        %v322 = vld [vmem:[%s1 + $0x18] sm:$0xff]
        %v323 = vld [vmem:[%s1 + $0x20] sm:$0xff]
        %v324 = vld [vmem:[%s1 + $0x28] sm:$0xff]
        %v325 = vld [vmem:[%s1 + $0x30] sm:$0xff]
        %v326 = vld [vmem:[%s1 + $0x38] sm:$0xff]
        %v327 = vld [vmem:[%s1 + $0x40] sm:$0xff]
        %v328 = vld [vmem:[%s1 + $0x48] sm:$0xff]
        %v329 = vld [vmem:[%s1 + $0x50] sm:$0xff]
        %v330 = vld [vmem:[%s1 + $0x58] sm:$0xff]
        %v331 = vld [vmem:[%s1 + $0x60] sm:$0xff]
        %v332 = vld [vmem:[%s1 + $0x68] sm:$0xff]
        %v333 = vld [vmem:[%s1 + $0x70] sm:$0xff]
        %v334 = vld [vmem:[%s1 + $0x78] sm:$0xff]
        %v335 = vld [vmem:[%s1 + $0x80] sm:$0xff]
        %v336 = vld [vmem:[%s1 + $0x88] sm:$0xff]
        %v337 = vld [vmem:[%s1 + $0x90] sm:$0xff]
        %v338 = vld [vmem:[%s1 + $0x98] sm:$0xff]
        %v339 = vld [vmem:[%s1 + $0xa0] sm:$0xff]
        %v340 = vld [vmem:[%s1 + $0xa8] sm:$0xff]
        %v341 = vld [vmem:[%s1 + $0xb0] sm:$0xff]
        %v342 = vld [vmem:[%s1 + $0xb8] sm:$0xff]
        %v343 = vld [vmem:[%s1 + $0xc0] sm:$0xff]
        %v344 = vld [vmem:[%s1 + $0xc8] sm:$0xff]
        %v345 = vld [vmem:[%s1 + $0xd0] sm:$0xff]
        %v346 = vld [vmem:[%s1 + $0xd8] sm:$0xff]
        %v347 = vld [vmem:[%s1 + $0xe0] sm:$0xff]
        %v348 = vld [vmem:[%s1 + $0xe8] sm:$0xff]
        %v349 = vld [vmem:[%s1 + $0xf0] sm:$0xff]
        %v350 = vld [vmem:[%s1 + $0xf8] sm:$0xff]
        %v351 = vld [vmem:[%s2] sm:$0x3]
        %v353 = vlaneseq
        %v354 = vshrl.u32 %v353, 7
        %v355 = vsub.s32 0, %v354
        %v356 = vrot.slane %v351, %v355
        %v357 = vlaneseq
        %v358 = vshrl.u32 %v357, 7
        %v359 = vsub.s32 1, %v358
        %v360 = vrot.slane %v351, %v359
        %363 = vmatprep.subr.mxu0 %v350
        %364 = vmatpush1.msra.mxu0 %v349
        %365 = vmatprep.subr.mxu0 %v348
        %366 = vmatpush1.msra.mxu0 %v347
        %367 = vmatprep.subr.mxu0 %v346
        %368 = vmatpush1.msra.mxu0 %v345
        %369 = vmatprep.subr.mxu0 %v344
        %370 = vmatpush1.msra.mxu0 %v343
        %371 = vmatprep.subr.mxu0 %v342
        %372 = vmatpush1.msra.mxu0 %v341
        %373 = vmatprep.subr.mxu0 %v340
        %374 = vmatpush1.msra.mxu0 %v339
        %375 = vmatprep.subr.mxu0 %v338
        %376 = vmatpush1.msra.mxu0 %v337
        %377 = vmatprep.subr.mxu0 %v336
        %378 = vmatpush1.msra.mxu0 %v335
        %379 = vmatprep.subr.mxu0 %v334
        %380 = vmatpush1.msra.mxu0 %v333
        %381 = vmatprep.subr.mxu0 %v332
        %382 = vmatpush1.msra.mxu0 %v331
        %383 = vmatprep.subr.mxu0 %v330
        %384 = vmatpush1.msra.mxu0 %v329
        %385 = vmatprep.subr.mxu0 %v328
        %386 = vmatpush1.msra.mxu0 %v327
        %387 = vmatprep.subr.mxu0 %v326
        %388 = vmatpush1.msra.mxu0 %v325
        %389 = vmatprep.subr.mxu0 %v324
        %390 = vmatpush1.msra.mxu0 %v323
        %391 = vmatprep.subr.mxu0 %v322
        %392 = vmatpush1.msra.mxu0 %v321
        %393 = vmatprep.subr.mxu0 %v320
        %394 = vmatpush1.msra.mxu0 %v319
        %395 = vmatprep.subr.mxu0 0.0
        %396 = vmatpush2.msra.mxu0 0.0
        %397 = vmatprep.subr.mxu0 0.0
        %398 = vmatpush2.msra.mxu0 0.0
        %399 = vmatprep.subr.mxu0 0.0
        %400 = vmatpush2.msra.mxu0 0.0
        %401 = vmatprep.subr.mxu0 0.0
        %402 = vmatpush2.msra.mxu0 0.0
        %403 = vmatprep.subr.mxu0 0.0
        %404 = vmatpush2.msra.mxu0 0.0
        %405 = vmatprep.subr.mxu0 0.0
        %406 = vmatpush2.msra.mxu0 0.0
        %407 = vmatprep.subr.mxu0 0.0
        %408 = vmatpush2.msra.mxu0 0.0
        %409 = vmatprep.subr.mxu0 0.0
        %410 = vmatpush2.msra.mxu0 0.0
        %411 = vmatprep.subr.mxu0 0.0
        %412 = vmatpush2.msra.mxu0 0.0
        %413 = vmatprep.subr.mxu0 0.0
        %414 = vmatpush2.msra.mxu0 0.0
        %415 = vmatprep.subr.mxu0 0.0
        %416 = vmatpush2.msra.mxu0 0.0
        %417 = vmatprep.subr.mxu0 0.0
        %418 = vmatpush2.msra.mxu0 0.0
        %419 = vmatprep.subr.mxu0 0.0
        %420 = vmatpush2.msra.mxu0 0.0
        %421 = vmatprep.subr.mxu0 0.0
        %422 = vmatpush2.msra.mxu0 0.0
        %423 = vmatprep.subr.mxu0 0.0
        %424 = vmatpush2.msra.mxu0 0.0
        %425 = vmatprep.subr.mxu0 0.0
        %426 = vmatpush2.msra.mxu0 0.0
        %427 = vmatprep.mubr.f32.mxu0 0.0
        %428 = vmatmul.mubr.f32.gmra.mxu0 %v315
        %v429 = vpop.f32.mrf.mxu0
        %v430 = vadd.f32 %v356, %v429
        %v431 = vpop.f32.mrf.mxu0
        %v432 = vadd.f32 %v360, %v431
        %433 = vmatprep.mubr.f32.mxu0 0.0
        %434 = vmatmul.mubr.f32.gmra.mxu0 %v316
        %v435 = vpop.f32.mrf.mxu0
        %v436 = vadd.f32 %v356, %v435
        %v437 = vpop.f32.mrf.mxu0
        %v438 = vadd.f32 %v360, %v437
        %439 = vmatprep.mubr.f32.mxu0 0.0
        %440 = vmatmul.mubr.f32.gmra.mxu0 %v317
        %v441 = vpop.f32.mrf.mxu0
        %v442 = vadd.f32 %v356, %v441
        %v443 = vpop.f32.mrf.mxu0
        %v444 = vadd.f32 %v360, %v443
        %445 = vmatprep.mubr.f32.mxu0 0.0
        %446 = vmatmul.mubr.f32.gmra.mxu0 %v318
        %v447 = vpop.f32.mrf.mxu0
        %v448 = vadd.f32 %v356, %v447
        %v449 = vpop.f32.mrf.mxu0
        %v450 = vadd.f32 %v360, %v449
        %451 = vdwg.mxu0
        %vm452 = vcmask 130048
        %v453 = vsel %vm452, %v432, -inf
        %454 = vmax.xlane.f32.xlu0 %v453
        %v455 = vpop.xlane.xlu0 %454
        %v456 = vsel %vm452, %v438, -inf
        %457 = vmax.xlane.f32.xlu0 %v456
        %v458 = vpop.xlane.xlu0 %457
        %v459 = vsel %vm452, %v444, -inf
        %460 = vmax.xlane.f32.xlu0 %v459
        %v461 = vpop.xlane.xlu0 %460
        %v462 = vsel %vm452, %v450, -inf
        %463 = vmax.xlane.f32.xlu0 %v462
        %v464 = vpop.xlane.xlu0 %463
        %v465 = vsub.f32 %v432, %v455
        %v466 = vsub.f32 %v438, %v458
        %v467 = vsub.f32 %v444, %v461
        %v468 = vsub.f32 %v450, %v464
        %v469 = vmul.f32 %v465, 1.442695
        %v470 = vpow.pop %v469
        %v471 = vmul.f32 %v466, 1.442695
        %v472 = vpow.pop %v471
        %v473 = vmul.f32 %v467, 1.442695
        %v474 = vpow.pop %v473
        %v475 = vmul.f32 %v468, 1.442695
        %v476 = vpow.pop %v475
        %v477 = vsel %vm452, %v470, 0.0
        %478 = vadd.xlane.f32.xlu0 %v477
        %v479 = vpop.xlane.xlu0 %478
        %v480 = vsel %vm452, %v472, 0.0
        %481 = vadd.xlane.f32.xlu0 %v480
        %v482 = vpop.xlane.xlu0 %481
        %v483 = vsel %vm452, %v474, 0.0
        %484 = vadd.xlane.f32.xlu0 %v483
        %v485 = vpop.xlane.xlu0 %484
        %v486 = vsel %vm452, %v476, 0.0
        %487 = vadd.xlane.f32.xlu0 %v486
        %v488 = vpop.xlane.xlu0 %487
        %v489 = vrcp.pop %v479
        %v490 = vrcp.pop %v482
        %v491 = vrcp.pop %v485
        %v492 = vrcp.pop %v488
        %v493 = vmul.f32 %v470, %v489
        %v494 = vmul.f32 %v472, %v490
        %v495 = vmul.f32 %v474, %v491
        %v496 = vmul.f32 %v476, %v492
        %vm497 = vcmask 261248
        %v498 = vsel %vm497, %v432, -inf
        %499 = vmax.xlane.f32.xlu0 %v498
        %v500 = vpop.xlane.xlu0 %499
        %v501 = vsel %vm497, %v438, -inf
        %502 = vmax.xlane.f32.xlu0 %v501
        %v503 = vpop.xlane.xlu0 %502
        %v504 = vsel %vm497, %v444, -inf
        %505 = vmax.xlane.f32.xlu0 %v504
        %v506 = vpop.xlane.xlu0 %505
        %v507 = vsel %vm497, %v450, -inf
        %508 = vmax.xlane.f32.xlu0 %v507
        %v509 = vpop.xlane.xlu0 %508
        %v510 = vsub.f32 %v432, %v500
        %v511 = vsub.f32 %v438, %v503
        %v512 = vsub.f32 %v444, %v506
        %v513 = vsub.f32 %v450, %v509
        %v514 = vmul.f32 %v510, 1.442695
        %v515 = vpow.pop %v514
        %v516 = vmul.f32 %v511, 1.442695
        %v517 = vpow.pop %v516
        %v518 = vmul.f32 %v512, 1.442695
        %v519 = vpow.pop %v518
        %v520 = vmul.f32 %v513, 1.442695
        %v521 = vpow.pop %v520
        %526 = vrot.lane.b32.xlu0 %v515, 112
        %v527 = vpop.permute.xlu0 %526
        %528 = vrot.lane.b32.xlu0 %v517, 112
        %v529 = vpop.permute.xlu0 %528
        %530 = vrot.lane.b32.xlu0 %v519, 112
        %v531 = vpop.permute.xlu0 %530
        %532 = vrot.lane.b32.xlu0 %v521, 112
        %v533 = vpop.permute.xlu0 %532
        %v538 = vsel %vm452, %v527, 0.0
        %539 = vadd.xlane.f32.xlu0 %v538
        %v540 = vpop.xlane.xlu0 %539
        %v541 = vsel %vm452, %v529, 0.0
        %542 = vadd.xlane.f32.xlu0 %v541
        %v543 = vpop.xlane.xlu0 %542
        %v544 = vsel %vm452, %v531, 0.0
        %545 = vadd.xlane.f32.xlu0 %v544
        %v546 = vpop.xlane.xlu0 %545
        %v547 = vsel %vm452, %v533, 0.0
        %548 = vadd.xlane.f32.xlu0 %v547
        %v549 = vpop.xlane.xlu0 %548
        %v550 = vrcp.pop %v540
        %v551 = vrcp.pop %v543
        %v552 = vrcp.pop %v546
        %v553 = vrcp.pop %v549
        %v554 = vmul.f32 %v515, %v550
        %v555 = vmul.f32 %v517, %v551
        %v556 = vmul.f32 %v519, %v552
        %v557 = vmul.f32 %v521, %v553
        %vm558 = vcmask 392448
        %v559 = vsel %vm558, %v432, -inf
        %560 = vmax.xlane.f32.xlu0 %v559
        %v561 = vpop.xlane.xlu0 %560
        %v562 = vsel %vm558, %v438, -inf
        %563 = vmax.xlane.f32.xlu0 %v562
        %v564 = vpop.xlane.xlu0 %563
        %v565 = vsel %vm558, %v444, -inf
        %566 = vmax.xlane.f32.xlu0 %v565
        %v567 = vpop.xlane.xlu0 %566
        %v568 = vsel %vm558, %v450, -inf
        %569 = vmax.xlane.f32.xlu0 %v568
        %v570 = vpop.xlane.xlu0 %569
        %v571 = vsub.f32 %v432, %v561
        %v572 = vsub.f32 %v438, %v564
        %v573 = vsub.f32 %v444, %v567
        %v574 = vsub.f32 %v450, %v570
        %v575 = vmul.f32 %v571, 1.442695
        %v576 = vpow.pop %v575
        %v577 = vmul.f32 %v572, 1.442695
        %v578 = vpow.pop %v577
        %v579 = vmul.f32 %v573, 1.442695
        %v580 = vpow.pop %v579
        %v581 = vmul.f32 %v574, 1.442695
        %v582 = vpow.pop %v581
        %587 = vrot.lane.b32.xlu0 %v576, 96
        %v588 = vpop.permute.xlu0 %587
        %589 = vrot.lane.b32.xlu0 %v578, 96
        %v590 = vpop.permute.xlu0 %589
        %591 = vrot.lane.b32.xlu0 %v580, 96
        %v592 = vpop.permute.xlu0 %591
        %593 = vrot.lane.b32.xlu0 %v582, 96
        %v594 = vpop.permute.xlu0 %593
        %v599 = vsel %vm452, %v588, 0.0
        %600 = vadd.xlane.f32.xlu0 %v599
        %v601 = vpop.xlane.xlu0 %600
        %v602 = vsel %vm452, %v590, 0.0
        %603 = vadd.xlane.f32.xlu0 %v602
        %v604 = vpop.xlane.xlu0 %603
        %v605 = vsel %vm452, %v592, 0.0
        %606 = vadd.xlane.f32.xlu0 %v605
        %v607 = vpop.xlane.xlu0 %606
        %v608 = vsel %vm452, %v594, 0.0
        %609 = vadd.xlane.f32.xlu0 %v608
        %v610 = vpop.xlane.xlu0 %609
        %v611 = vrcp.pop %v601
        %v612 = vrcp.pop %v604
        %v613 = vrcp.pop %v607
        %v614 = vrcp.pop %v610
        %v615 = vmul.f32 %v576, %v611
        %v616 = vmul.f32 %v578, %v612
        %v617 = vmul.f32 %v580, %v613
        %v618 = vmul.f32 %v582, %v614
        %vm619 = vcmask 523648
        %v620 = vsel %vm619, %v432, -inf
        %621 = vmax.xlane.f32.xlu0 %v620
        %v622 = vpop.xlane.xlu0 %621
        %v623 = vsel %vm619, %v438, -inf
        %624 = vmax.xlane.f32.xlu0 %v623
        %v625 = vpop.xlane.xlu0 %624
        %v626 = vsel %vm619, %v444, -inf
        %627 = vmax.xlane.f32.xlu0 %v626
        %v628 = vpop.xlane.xlu0 %627
        %v629 = vsel %vm619, %v450, -inf
        %630 = vmax.xlane.f32.xlu0 %v629
        %v631 = vpop.xlane.xlu0 %630
        %v632 = vsub.f32 %v432, %v622
        %v633 = vsub.f32 %v438, %v625
        %v634 = vsub.f32 %v444, %v628
        %v635 = vsub.f32 %v450, %v631
        %v636 = vmul.f32 %v632, 1.442695
        %v637 = vpow.pop %v636
        %v638 = vmul.f32 %v633, 1.442695
        %v639 = vpow.pop %v638
        %v640 = vmul.f32 %v634, 1.442695
        %v641 = vpow.pop %v640
        %v642 = vmul.f32 %v635, 1.442695
        %v643 = vpow.pop %v642
        %648 = vrot.lane.b32.xlu0 %v637, 80
        %v649 = vpop.permute.xlu0 %648
        %650 = vrot.lane.b32.xlu0 %v639, 80
        %v651 = vpop.permute.xlu0 %650
        %652 = vrot.lane.b32.xlu0 %v641, 80
        %v653 = vpop.permute.xlu0 %652
        %654 = vrot.lane.b32.xlu0 %v643, 80
        %v655 = vpop.permute.xlu0 %654
        %v660 = vsel %vm452, %v649, 0.0
        %661 = vadd.xlane.f32.xlu0 %v660
        %v662 = vpop.xlane.xlu0 %661
        %v663 = vsel %vm452, %v651, 0.0
        %664 = vadd.xlane.f32.xlu0 %v663
        %v665 = vpop.xlane.xlu0 %664
        %v666 = vsel %vm452, %v653, 0.0
        %667 = vadd.xlane.f32.xlu0 %v666
        %v668 = vpop.xlane.xlu0 %667
        %v669 = vsel %vm452, %v655, 0.0
        %670 = vadd.xlane.f32.xlu0 %v669
        %v671 = vpop.xlane.xlu0 %670
        %v672 = vrcp.pop %v662
        %v673 = vrcp.pop %v665
        %v674 = vrcp.pop %v668
        %v675 = vrcp.pop %v671
        %v676 = vmul.f32 %v637, %v672
        %v677 = vmul.f32 %v639, %v673
        %v678 = vmul.f32 %v641, %v674
        %v679 = vmul.f32 %v643, %v675
        %v680 = vsel %vm452, %v493, %v554
        %v681 = vsel %vm452, %v494, %v555
        %v682 = vsel %vm452, %v495, %v556
        %v683 = vsel %vm452, %v496, %v557
        %vm684 = vcmask 261120
        %v685 = vsel %vm684, %v680, %v615
        %v686 = vsel %vm684, %v681, %v616
        %v687 = vsel %vm684, %v682, %v617
        %v688 = vsel %vm684, %v683, %v618
        %vm689 = vcmask 392192
        %v690 = vsel %vm689, %v685, %v676
        %v691 = vsel %vm689, %v686, %v677
        %v692 = vsel %vm689, %v687, %v678
        %v693 = vsel %vm689, %v688, %v679
        %vm694 = vcmask 523264
        %695 = vst.msk [vmem:[%s273] sm:$0xff] %vm694, %v690
        %696 = vst.msk [vmem:[%s273 + $0x8] sm:$0xff] %vm694, %v691
        %697 = vst.msk [vmem:[%s273 + $0x10] sm:$0xff] %vm694, %v692
        %698 = vst.msk [vmem:[%s273 + $0x18] sm:$0xff] %vm694, %v693
        %v699 = vld [vmem:[#allocation2] sm:$0xff]
        %v700 = vld [vmem:[#allocation2 + $0x8] sm:$0xff]
        %v701 = vld [vmem:[#allocation2 + $0x10] sm:$0xff]
        %v702 = vld [vmem:[#allocation2 + $0x18] sm:$0xff]
        %v703 = vld [vmem:[#allocation2 + $0x20] sm:$0xff]
        %v704 = vld [vmem:[#allocation2 + $0x28] sm:$0xff]
        %v705 = vld [vmem:[#allocation2 + $0x30] sm:$0xff]
        %v706 = vld [vmem:[#allocation2 + $0x38] sm:$0xff]
        %v707 = vld [vmem:[#allocation2 + $0x40] sm:$0xff]
        %v708 = vld [vmem:[#allocation2 + $0x48] sm:$0xff]
        %v709 = vld [vmem:[#allocation2 + $0x50] sm:$0xff]
        %v710 = vld [vmem:[#allocation2 + $0x58] sm:$0xff]
        %v711 = vld [vmem:[#allocation2 + $0x60] sm:$0xff]
        %v712 = vld [vmem:[#allocation2 + $0x68] sm:$0xff]
        %v713 = vld [vmem:[#allocation2 + $0x70] sm:$0xff]
        %v714 = vld [vmem:[#allocation2 + $0x78] sm:$0xff]
        %715 = vxpose.xlu0.b32.start [1/16] %v430, 128
        %716 = vxpose.xlu0.b32.cont [2/16] %v436, 128
        %717 = vxpose.xlu0.b32.cont [3/16] %v442, 128
        %718 = vxpose.xlu0.b32.cont [4/16] %v448, 128
        %719 = vxpose.xlu0.b32.cont [5/16] 0.0, 128
        %720 = vxpose.xlu0.b32.cont [6/16] 0.0, 128
        %721 = vxpose.xlu0.b32.cont [7/16] 0.0, 128
        %722 = vxpose.xlu0.b32.cont [8/16] 0.0, 128
        %723 = vxpose.xlu0.b32.cont [9/16] 0.0, 128
        %724 = vxpose.xlu0.b32.cont [10/16] 0.0, 128
        %725 = vxpose.xlu0.b32.cont [11/16] 0.0, 128
        %726 = vxpose.xlu0.b32.cont [12/16] 0.0, 128
        %727 = vxpose.xlu0.b32.cont [13/16] 0.0, 128
        %728 = vxpose.xlu0.b32.cont [14/16] 0.0, 128
        %729 = vxpose.xlu0.b32.cont [15/16] 0.0, 128
        %730 = vxpose.xlu0.b32.end [16/16] 0.0, 128
        %v731 = vpop.trf.xlu0
        %v732 = vpop.trf.xlu0
        %v733 = vpop.trf.xlu0
        %v734 = vpop.trf.xlu0
        %v735 = vpop.trf.xlu0
        %v736 = vpop.trf.xlu0
        %v737 = vpop.trf.xlu0
        %v738 = vpop.trf.xlu0
        %v739 = vpop.trf.xlu0
        %v740 = vpop.trf.xlu0
        %v741 = vpop.trf.xlu0
        %v742 = vpop.trf.xlu0
        %v743 = vpop.trf.xlu0
        %v744 = vpop.trf.xlu0
        %v745 = vpop.trf.xlu0
        %v746 = vpop.trf.xlu0
        %v748 = vsel %vm684, %v731, 0
        %v751 = vsel %vm684, %v732, 0
        %v754 = vsel %vm684, %v733, 0
        %v757 = vsel %vm684, %v734, 0
        %v760 = vsel %vm684, %v735, 0
        %v763 = vsel %vm684, %v736, 0
        %v766 = vsel %vm684, %v737, 0
        %v769 = vsel %vm684, %v738, 0
        %v772 = vsel %vm684, %v739, 0
        %v775 = vsel %vm684, %v740, 0
        %v778 = vsel %vm684, %v741, 0
        %v781 = vsel %vm684, %v742, 0
        %v784 = vsel %vm684, %v743, 0
        %v787 = vsel %vm684, %v744, 0
        %v790 = vsel %vm684, %v745, 0
        %v793 = vsel %vm684, %v746, 0
        %795 = vmatprep.subr.mxu0 0.0
        %796 = vmatpush1.msra.mxu0 0.0
        %797 = vmatprep.subr.mxu0 0.0
        %798 = vmatpush1.msra.mxu0 0.0
        %799 = vmatprep.subr.mxu0 0.0
        %800 = vmatpush1.msra.mxu0 0.0
        %801 = vmatprep.subr.mxu0 0.0
        %802 = vmatpush1.msra.mxu0 0.0
        %803 = vmatprep.subr.mxu0 0.0
        %804 = vmatpush1.msra.mxu0 0.0
        %805 = vmatprep.subr.mxu0 0.0
        %806 = vmatpush1.msra.mxu0 0.0
        %807 = vmatprep.subr.mxu0 0.0
        %808 = vmatpush1.msra.mxu0 0.0
        %809 = vmatprep.subr.mxu0 0.0
        %810 = vmatpush1.msra.mxu0 0.0
        %811 = vmatprep.subr.mxu0 0.0
        %812 = vmatpush1.msra.mxu0 0.0
        %813 = vmatprep.subr.mxu0 0.0
        %814 = vmatpush1.msra.mxu0 0.0
        %815 = vmatprep.subr.mxu0 0.0
        %816 = vmatpush1.msra.mxu0 0.0
        %817 = vmatprep.subr.mxu0 0.0
        %818 = vmatpush1.msra.mxu0 0.0
        %819 = vmatprep.subr.mxu0 0.0
        %820 = vmatpush1.msra.mxu0 %v693
        %821 = vmatprep.subr.mxu0 0.0
        %822 = vmatpush1.msra.mxu0 %v692
        %823 = vmatprep.subr.mxu0 0.0
        %824 = vmatpush1.msra.mxu0 %v691
        %825 = vmatprep.subr.mxu0 0.0
        %826 = vmatpush1.msra.mxu0 %v690
        %827 = vmatprep.subr.mxu0 0.0
        %828 = vmatpush2.msra.mxu0 0.0
        %829 = vmatprep.subr.mxu0 0.0
        %830 = vmatpush2.msra.mxu0 0.0
        %831 = vmatprep.subr.mxu0 0.0
        %832 = vmatpush2.msra.mxu0 0.0
        %833 = vmatprep.subr.mxu0 0.0
        %834 = vmatpush2.msra.mxu0 0.0
        %835 = vmatprep.subr.mxu0 0.0
        %836 = vmatpush2.msra.mxu0 0.0
        %837 = vmatprep.subr.mxu0 0.0
        %838 = vmatpush2.msra.mxu0 0.0
        %839 = vmatprep.subr.mxu0 0.0
        %840 = vmatpush2.msra.mxu0 0.0
        %841 = vmatprep.subr.mxu0 0.0
        %842 = vmatpush2.msra.mxu0 0.0
        %843 = vmatprep.subr.mxu0 0.0
        %844 = vmatpush2.msra.mxu0 0.0
        %845 = vmatprep.subr.mxu0 0.0
        %846 = vmatpush2.msra.mxu0 0.0
        %847 = vmatprep.subr.mxu0 0.0
        %848 = vmatpush2.msra.mxu0 0.0
        %849 = vmatprep.subr.mxu0 0.0
        %850 = vmatpush2.msra.mxu0 0.0
        %851 = vmatprep.subr.mxu0 0.0
        %852 = vmatpush2.msra.mxu0 0.0
        %853 = vmatprep.subr.mxu0 0.0
        %854 = vmatpush2.msra.mxu0 0.0
        %855 = vmatprep.subr.mxu0 0.0
        %856 = vmatpush2.msra.mxu0 0.0
        %857 = vmatprep.subr.mxu0 0.0
        %858 = vmatpush2.msra.mxu0 0.0
        %859 = vmatprep.mubr.f32.mxu0 0.0
        %860 = vmatmul.mubr.f32.gmra.mxu0 %v748
        %v861 = vpop.f32.mrf.mxu0
        %v862 = vadd.f32 0.0, %v861
        %v863 = vpop.f32.mrf.mxu0
        %864 = vmatprep.mubr.f32.mxu0 0.0
        %865 = vmatmul.mubr.f32.gmra.mxu0 %v751
        %v866 = vpop.f32.mrf.mxu0
        %v867 = vadd.f32 0.0, %v866
        %v868 = vpop.f32.mrf.mxu0
        %869 = vmatprep.mubr.f32.mxu0 0.0
        %870 = vmatmul.mubr.f32.gmra.mxu0 %v754
        %v871 = vpop.f32.mrf.mxu0
        %v872 = vadd.f32 0.0, %v871
        %v873 = vpop.f32.mrf.mxu0
        %874 = vmatprep.mubr.f32.mxu0 0.0
        %875 = vmatmul.mubr.f32.gmra.mxu0 %v757
        %v876 = vpop.f32.mrf.mxu0
        %v877 = vadd.f32 0.0, %v876
        %v878 = vpop.f32.mrf.mxu0
        %879 = vmatprep.mubr.f32.mxu0 0.0
        %880 = vmatmul.mubr.f32.gmra.mxu0 %v760
        %v881 = vpop.f32.mrf.mxu0
        %v882 = vadd.f32 0.0, %v881
        %v883 = vpop.f32.mrf.mxu0
        %884 = vmatprep.mubr.f32.mxu0 0.0
        %885 = vmatmul.mubr.f32.gmra.mxu0 %v763
        %v886 = vpop.f32.mrf.mxu0
        %v887 = vadd.f32 0.0, %v886
        %v888 = vpop.f32.mrf.mxu0
        %889 = vmatprep.mubr.f32.mxu0 0.0
        %890 = vmatmul.mubr.f32.gmra.mxu0 %v766
        %v891 = vpop.f32.mrf.mxu0
        %v892 = vadd.f32 0.0, %v891
        %v893 = vpop.f32.mrf.mxu0
        %894 = vmatprep.mubr.f32.mxu0 0.0
        %895 = vmatmul.mubr.f32.gmra.mxu0 %v769
        %v896 = vpop.f32.mrf.mxu0
        %v897 = vadd.f32 0.0, %v896
        %v898 = vpop.f32.mrf.mxu0
        %899 = vmatprep.mubr.f32.mxu0 0.0
        %900 = vmatmul.mubr.f32.gmra.mxu0 %v772
        %v901 = vpop.f32.mrf.mxu0
        %v902 = vadd.f32 0.0, %v901
        %v903 = vpop.f32.mrf.mxu0
        %904 = vmatprep.mubr.f32.mxu0 0.0
        %905 = vmatmul.mubr.f32.gmra.mxu0 %v775
        %v906 = vpop.f32.mrf.mxu0
        %v907 = vadd.f32 0.0, %v906
        %v908 = vpop.f32.mrf.mxu0
        %909 = vmatprep.mubr.f32.mxu0 0.0
        %910 = vmatmul.mubr.f32.gmra.mxu0 %v778
        %v911 = vpop.f32.mrf.mxu0
        %v912 = vadd.f32 0.0, %v911
        %v913 = vpop.f32.mrf.mxu0
        %914 = vmatprep.mubr.f32.mxu0 0.0
        %915 = vmatmul.mubr.f32.gmra.mxu0 %v781
        %v916 = vpop.f32.mrf.mxu0
        %v917 = vadd.f32 0.0, %v916
        %v918 = vpop.f32.mrf.mxu0
        %919 = vmatprep.mubr.f32.mxu0 0.0
        %920 = vmatmul.mubr.f32.gmra.mxu0 %v784
        %v921 = vpop.f32.mrf.mxu0
        %v922 = vadd.f32 0.0, %v921
        %v923 = vpop.f32.mrf.mxu0
        %924 = vmatprep.mubr.f32.mxu0 0.0
        %925 = vmatmul.mubr.f32.gmra.mxu0 %v787
        %v926 = vpop.f32.mrf.mxu0
        %v927 = vadd.f32 0.0, %v926
        %v928 = vpop.f32.mrf.mxu0
        %929 = vmatprep.mubr.f32.mxu0 0.0
        %930 = vmatmul.mubr.f32.gmra.mxu0 %v790
        %v931 = vpop.f32.mrf.mxu0
        %v932 = vadd.f32 0.0, %v931
        %v933 = vpop.f32.mrf.mxu0
        %934 = vmatprep.mubr.f32.mxu0 0.0
        %935 = vmatmul.mubr.f32.gmra.mxu0 %v793
        %v936 = vpop.f32.mrf.mxu0
        %v937 = vadd.f32 0.0, %v936
        %v938 = vpop.f32.mrf.mxu0
        %939 = vdwg.mxu0
        %v940 = vadd.f32 %v699, %v862
        %v941 = vadd.f32 %v700, %v867
        %v942 = vadd.f32 %v701, %v872
        %v943 = vadd.f32 %v702, %v877
        %v944 = vadd.f32 %v703, %v882
        %v945 = vadd.f32 %v704, %v887
        %v946 = vadd.f32 %v705, %v892
        %v947 = vadd.f32 %v706, %v897
        %v948 = vadd.f32 %v707, %v902
        %v949 = vadd.f32 %v708, %v907
        %v950 = vadd.f32 %v709, %v912
        %v951 = vadd.f32 %v710, %v917
        %v952 = vadd.f32 %v711, %v922
        %v953 = vadd.f32 %v712, %v927
        %v954 = vadd.f32 %v713, %v932
        %v955 = vadd.f32 %v714, %v937
        %956 = vst.msk [vmem:[#allocation2] sm:$0xff] %vm694, %v940
        %957 = vst.msk [vmem:[#allocation2 + $0x8] sm:$0xff] %vm694, %v941
        %958 = vst.msk [vmem:[#allocation2 + $0x10] sm:$0xff] %vm694, %v942
        %959 = vst.msk [vmem:[#allocation2 + $0x18] sm:$0xff] %vm694, %v943
        %960 = vst.msk [vmem:[#allocation2 + $0x20] sm:$0xff] %vm694, %v944
        %961 = vst.msk [vmem:[#allocation2 + $0x28] sm:$0xff] %vm694, %v945
        %962 = vst.msk [vmem:[#allocation2 + $0x30] sm:$0xff] %vm694, %v946
        %963 = vst.msk [vmem:[#allocation2 + $0x38] sm:$0xff] %vm694, %v947
        %964 = vst.msk [vmem:[#allocation2 + $0x40] sm:$0xff] %vm694, %v948
        %965 = vst.msk [vmem:[#allocation2 + $0x48] sm:$0xff] %vm694, %v949
        %966 = vst.msk [vmem:[#allocation2 + $0x50] sm:$0xff] %vm694, %v950
        %967 = vst.msk [vmem:[#allocation2 + $0x58] sm:$0xff] %vm694, %v951
        %968 = vst.msk [vmem:[#allocation2 + $0x60] sm:$0xff] %vm694, %v952
        %969 = vst.msk [vmem:[#allocation2 + $0x68] sm:$0xff] %vm694, %v953
        %970 = vst.msk [vmem:[#allocation2 + $0x70] sm:$0xff] %vm694, %v954
        %971 = vst.msk [vmem:[#allocation2 + $0x78] sm:$0xff] %vm694, %v955
        %v972 = vld [vmem:[#allocation3] sm:$0x1]
        %v973 = vsel %vm694, %v690, 0.0
        %v974 = vsel %vm694, %v691, 0.0
        %v975 = vadd.f32 %v973, %v974
        %v976 = vsel %vm694, %v692, 0.0
        %v977 = vadd.f32 %v975, %v976
        %v978 = vsel %vm694, %v693, 0.0
        %v979 = vadd.f32 %v977, %v978
        %v980 = vrot.slane %v979, 4
        %v981 = vadd.f32 %v979, %v980
        %v982 = vrot.slane %v981, 2
        %v983 = vadd.f32 %v981, %v982
        %v984 = vrot.slane %v983, 1
        %v985 = vadd.f32 %v983, %v984
        %v986 = vadd.f32 %v972, %v985
        %vm987 = vcmask 516096
        %988 = vst.msk [vmem:[#allocation3] sm:$0x1] %vm987, %v986
        %p989 = scmp.eq.s32.totalorder %s29, 1
        // Predicated region
        $region45: #{tpu_custom_call.1} parent=39 // pred_check
          %p990 = pneg %p989
        $region46: #{tpu_custom_call.1} parent=39 // pred_check_branch
          %992 = sbr.rel (%p990) target = $region48
        $region47: #{tpu_custom_call.1} parent=39 // pred_region
          %v993 = vld [vmem:[#allocation3] sm:$0x1]
          %v994 = vadd.f32 %v993, 1e-05
          %v995 = vrcp.pop %v994
          %v996 = vld [vmem:[#allocation2] sm:$0xff]
          %v997 = vld [vmem:[#allocation2 + $0x8] sm:$0xff]
          %v998 = vld [vmem:[#allocation2 + $0x10] sm:$0xff]
          %v999 = vld [vmem:[#allocation2 + $0x18] sm:$0xff]
          %v1001 = vlaneseq
          %v1002 = vshrl.u32 %v1001, 7
          %v1003 = vsub.s32 0, %v1002
          %v1004 = vrot.slane %v995, %v1003
          %v1006 = vmul.f32 %v996, %v1004
          %v1007 = vmul.f32 %v997, %v1004
          %v1008 = vmul.f32 %v998, %v1004
          %v1009 = vmul.f32 %v999, %v1004
          %v1010 = vld [vmem:[%s3] sm:$0xff]
          %v1011 = vld [vmem:[%s3 + $0x8] sm:$0xff]
          %v1012 = vld [vmem:[%s3 + $0x10] sm:$0xff]
          %v1013 = vld [vmem:[%s3 + $0x18] sm:$0xff]
          %v1014 = vld [vmem:[%s3 + $0x20] sm:$0xff]
          %v1015 = vld [vmem:[%s3 + $0x28] sm:$0xff]
          %v1016 = vld [vmem:[%s3 + $0x30] sm:$0xff]
          %v1017 = vld [vmem:[%s3 + $0x38] sm:$0xff]
          %v1018 = vld [vmem:[%s3 + $0x40] sm:$0xff]
          %v1019 = vld [vmem:[%s3 + $0x48] sm:$0xff]
          %v1020 = vld [vmem:[%s3 + $0x50] sm:$0xff]
          %v1021 = vld [vmem:[%s3 + $0x58] sm:$0xff]
          %v1023 = vsel %vm684, %v1010, 0
          %v1026 = vsel %vm684, %v1011, 0
          %v1029 = vsel %vm684, %v1012, 0
          %v1032 = vsel %vm684, %v1013, 0
          %v1035 = vsel %vm684, %v1014, 0
          %v1038 = vsel %vm684, %v1015, 0
          %v1041 = vsel %vm684, %v1016, 0
          %v1044 = vsel %vm684, %v1017, 0
          %v1047 = vsel %vm684, %v1018, 0
          %v1050 = vsel %vm684, %v1019, 0
          %v1053 = vsel %vm684, %v1020, 0
          %v1056 = vsel %vm684, %v1021, 0
          %1058 = vmatprep.subr.mxu0 0.0
          %1059 = vmatpush1.msra.mxu0 0.0
          %1060 = vmatprep.subr.mxu0 0.0
          %1061 = vmatpush1.msra.mxu0 0.0
          %1062 = vmatprep.subr.mxu0 0.0
          %1063 = vmatpush1.msra.mxu0 0.0
          %1064 = vmatprep.subr.mxu0 0.0
          %1065 = vmatpush1.msra.mxu0 0.0
          %1066 = vmatprep.subr.mxu0 0.0
          %1067 = vmatpush1.msra.mxu0 0.0
          %1068 = vmatprep.subr.mxu0 0.0
          %1069 = vmatpush1.msra.mxu0 0.0
          %1070 = vmatprep.subr.mxu0 0.0
          %1071 = vmatpush1.msra.mxu0 0.0
          %1072 = vmatprep.subr.mxu0 0.0
          %1073 = vmatpush1.msra.mxu0 0.0
          %1074 = vmatprep.subr.mxu0 0.0
          %1075 = vmatpush1.msra.mxu0 0.0
          %1076 = vmatprep.subr.mxu0 0.0
          %1077 = vmatpush1.msra.mxu0 0.0
          %1078 = vmatprep.subr.mxu0 0.0
          %1079 = vmatpush1.msra.mxu0 0.0
          %1080 = vmatprep.subr.mxu0 0.0
          %1081 = vmatpush1.msra.mxu0 0.0
          %1082 = vmatprep.subr.mxu0 0.0
          %1083 = vmatpush1.msra.mxu0 %v1009
          %1084 = vmatprep.subr.mxu0 0.0
          %1085 = vmatpush1.msra.mxu0 %v1008
          %1086 = vmatprep.subr.mxu0 0.0
          %1087 = vmatpush1.msra.mxu0 %v1007
          %1088 = vmatprep.subr.mxu0 0.0
          %1089 = vmatpush1.msra.mxu0 %v1006
          %1090 = vmatprep.subr.mxu0 0.0
          %1091 = vmatpush2.msra.mxu0 0.0
          %1092 = vmatprep.subr.mxu0 0.0
          %1093 = vmatpush2.msra.mxu0 0.0
          %1094 = vmatprep.subr.mxu0 0.0
          %1095 = vmatpush2.msra.mxu0 0.0
          %1096 = vmatprep.subr.mxu0 0.0
          %1097 = vmatpush2.msra.mxu0 0.0
          %1098 = vmatprep.subr.mxu0 0.0
          %1099 = vmatpush2.msra.mxu0 0.0
          %1100 = vmatprep.subr.mxu0 0.0
          %1101 = vmatpush2.msra.mxu0 0.0
          %1102 = vmatprep.subr.mxu0 0.0
          %1103 = vmatpush2.msra.mxu0 0.0
          %1104 = vmatprep.subr.mxu0 0.0
          %1105 = vmatpush2.msra.mxu0 0.0
          %1106 = vmatprep.subr.mxu0 0.0
          %1107 = vmatpush2.msra.mxu0 0.0
          %1108 = vmatprep.subr.mxu0 0.0
          %1109 = vmatpush2.msra.mxu0 0.0
          %1110 = vmatprep.subr.mxu0 0.0
          %1111 = vmatpush2.msra.mxu0 0.0
          %1112 = vmatprep.subr.mxu0 0.0
          %1113 = vmatpush2.msra.mxu0 0.0
          %1114 = vmatprep.subr.mxu0 0.0
          %1115 = vmatpush2.msra.mxu0 0.0
          %1116 = vmatprep.subr.mxu0 0.0
          %1117 = vmatpush2.msra.mxu0 0.0
          %1118 = vmatprep.subr.mxu0 0.0
          %1119 = vmatpush2.msra.mxu0 0.0
          %1120 = vmatprep.subr.mxu0 0.0
          %1121 = vmatpush2.msra.mxu0 0.0
          %1122 = vmatprep.mubr.f32.mxu0 0.0
          %1123 = vmatmul.mubr.f32.gmra.mxu0 %v1023
          %v1124 = vpop.f32.mrf.mxu0
          %v1125 = vadd.f32 0.0, %v1124
          %v1126 = vpop.f32.mrf.mxu0
          %1127 = vmatprep.mubr.f32.mxu0 0.0
          %1128 = vmatmul.mubr.f32.gmra.mxu0 %v1026
          %v1129 = vpop.f32.mrf.mxu0
          %v1130 = vadd.f32 0.0, %v1129
          %v1131 = vpop.f32.mrf.mxu0
          %1132 = vmatprep.mubr.f32.mxu0 0.0
          %1133 = vmatmul.mubr.f32.gmra.mxu0 %v1029
          %v1134 = vpop.f32.mrf.mxu0
          %v1135 = vadd.f32 0.0, %v1134
          %v1136 = vpop.f32.mrf.mxu0
          %1137 = vmatprep.mubr.f32.mxu0 0.0
          %1138 = vmatmul.mubr.f32.gmra.mxu0 %v1032
          %v1139 = vpop.f32.mrf.mxu0
          %v1140 = vadd.f32 0.0, %v1139
          %v1141 = vpop.f32.mrf.mxu0
          %1142 = vmatprep.mubr.f32.mxu0 0.0
          %1143 = vmatmul.mubr.f32.gmra.mxu0 %v1035
          %v1144 = vpop.f32.mrf.mxu0
          %v1145 = vadd.f32 0.0, %v1144
          %v1146 = vpop.f32.mrf.mxu0
          %1147 = vmatprep.mubr.f32.mxu0 0.0
          %1148 = vmatmul.mubr.f32.gmra.mxu0 %v1038
          %v1149 = vpop.f32.mrf.mxu0
          %v1150 = vadd.f32 0.0, %v1149
          %v1151 = vpop.f32.mrf.mxu0
          %1152 = vmatprep.mubr.f32.mxu0 0.0
          %1153 = vmatmul.mubr.f32.gmra.mxu0 %v1041
          %v1154 = vpop.f32.mrf.mxu0
          %v1155 = vadd.f32 0.0, %v1154
          %v1156 = vpop.f32.mrf.mxu0
          %1157 = vmatprep.mubr.f32.mxu0 0.0
          %1158 = vmatmul.mubr.f32.gmra.mxu0 %v1044
          %v1159 = vpop.f32.mrf.mxu0
          %v1160 = vadd.f32 0.0, %v1159
          %v1161 = vpop.f32.mrf.mxu0
          %1162 = vmatprep.mubr.f32.mxu0 0.0
          %1163 = vmatmul.mubr.f32.gmra.mxu0 %v1047
          %v1164 = vpop.f32.mrf.mxu0
          %v1165 = vadd.f32 0.0, %v1164
          %v1166 = vpop.f32.mrf.mxu0
          %1167 = vmatprep.mubr.f32.mxu0 0.0
          %1168 = vmatmul.mubr.f32.gmra.mxu0 %v1050
          %v1169 = vpop.f32.mrf.mxu0
          %v1170 = vadd.f32 0.0, %v1169
          %v1171 = vpop.f32.mrf.mxu0
          %1172 = vmatprep.mubr.f32.mxu0 0.0
          %1173 = vmatmul.mubr.f32.gmra.mxu0 %v1053
          %v1174 = vpop.f32.mrf.mxu0
          %v1175 = vadd.f32 0.0, %v1174
          %v1176 = vpop.f32.mrf.mxu0
          %1177 = vmatprep.mubr.f32.mxu0 0.0
          %1178 = vmatmul.mubr.f32.gmra.mxu0 %v1056
          %v1179 = vpop.f32.mrf.mxu0
          %v1180 = vadd.f32 0.0, %v1179
          %v1181 = vpop.f32.mrf.mxu0
          %1182 = vdwg.mxu0
          %1183 = vxpose.xlu0.b32.start [1/16] %v1125, 128
          %1184 = vxpose.xlu0.b32.cont [2/16] %v1130, 128
          %1185 = vxpose.xlu0.b32.cont [3/16] %v1135, 128
          %1186 = vxpose.xlu0.b32.cont [4/16] %v1140, 128
          %1187 = vxpose.xlu0.b32.cont [5/16] 0.0, 128
          %1188 = vxpose.xlu0.b32.cont [6/16] 0.0, 128
          %1189 = vxpose.xlu0.b32.cont [7/16] 0.0, 128
          %1190 = vxpose.xlu0.b32.cont [8/16] 0.0, 128
          %1191 = vxpose.xlu0.b32.cont [9/16] 0.0, 128
          %1192 = vxpose.xlu0.b32.cont [10/16] 0.0, 128
          %1193 = vxpose.xlu0.b32.cont [11/16] 0.0, 128
          %1194 = vxpose.xlu0.b32.cont [12/16] 0.0, 128
          %1195 = vxpose.xlu0.b32.cont [13/16] 0.0, 128
          %1196 = vxpose.xlu0.b32.cont [14/16] 0.0, 128
          %1197 = vxpose.xlu0.b32.cont [15/16] 0.0, 128
          %1198 = vxpose.xlu0.b32.end [16/16] 0.0, 128
          %v1199 = vpop.trf.xlu0
          %v1200 = vpop.trf.xlu0
          %v1201 = vpop.trf.xlu0
          %v1202 = vpop.trf.xlu0
          %v1203 = vpop.trf.xlu0
          %v1204 = vpop.trf.xlu0
          %v1205 = vpop.trf.xlu0
          %v1206 = vpop.trf.xlu0
          %v1207 = vpop.trf.xlu0
          %v1208 = vpop.trf.xlu0
          %v1209 = vpop.trf.xlu0
          %v1210 = vpop.trf.xlu0
          %v1211 = vpop.trf.xlu0
          %v1212 = vpop.trf.xlu0
          %v1213 = vpop.trf.xlu0
          %v1214 = vpop.trf.xlu0
          %v1216 = vsel %vm684, %v1199, 0
          %v1219 = vsel %vm684, %v1200, 0
          %1221 = vmatprep.subr.mxu0 0.0
          %1222 = vmatpush1.msra.mxu0 0.0
          %1223 = vmatprep.subr.mxu0 0.0
          %1224 = vmatpush1.msra.mxu0 0.0
          %1225 = vmatprep.subr.mxu0 0.0
          %1226 = vmatpush1.msra.mxu0 0.0
          %1227 = vmatprep.subr.mxu0 0.0
          %1228 = vmatpush1.msra.mxu0 0.0
          %1229 = vmatprep.subr.mxu0 0.0
          %1230 = vmatpush1.msra.mxu0 0.0
          %1231 = vmatprep.subr.mxu0 0.0
          %1232 = vmatpush1.msra.mxu0 0.0
          %1233 = vmatprep.subr.mxu0 0.0
          %1234 = vmatpush1.msra.mxu0 0.0
          %1235 = vmatprep.subr.mxu0 0.0
          %1236 = vmatpush1.msra.mxu0 0.0
          %1237 = vmatprep.subr.mxu0 0.0
          %1238 = vmatpush1.msra.mxu0 0.0
          %1239 = vmatprep.subr.mxu0 0.0
          %1240 = vmatpush1.msra.mxu0 0.0
          %1241 = vmatprep.subr.mxu0 0.0
          %1242 = vmatpush1.msra.mxu0 0.0
          %1243 = vmatprep.subr.mxu0 0.0
          %1244 = vmatpush1.msra.mxu0 0.0
          %1245 = vmatprep.subr.mxu0 0.0
          %1246 = vmatpush1.msra.mxu0 %v1160
          %1247 = vmatprep.subr.mxu0 0.0
          %1248 = vmatpush1.msra.mxu0 %v1155
          %1249 = vmatprep.subr.mxu0 0.0
          %1250 = vmatpush1.msra.mxu0 %v1150
          %1251 = vmatprep.subr.mxu0 0.0
          %1252 = vmatpush1.msra.mxu0 %v1145
          %1253 = vmatprep.subr.mxu0 0.0
          %1254 = vmatpush2.msra.mxu0 0.0
          %1255 = vmatprep.subr.mxu0 0.0
          %1256 = vmatpush2.msra.mxu0 0.0
          %1257 = vmatprep.subr.mxu0 0.0
          %1258 = vmatpush2.msra.mxu0 0.0
          %1259 = vmatprep.subr.mxu0 0.0
          %1260 = vmatpush2.msra.mxu0 0.0
          %1261 = vmatprep.subr.mxu0 0.0
          %1262 = vmatpush2.msra.mxu0 0.0
          %1263 = vmatprep.subr.mxu0 0.0
          %1264 = vmatpush2.msra.mxu0 0.0
          %1265 = vmatprep.subr.mxu0 0.0
          %1266 = vmatpush2.msra.mxu0 0.0
          %1267 = vmatprep.subr.mxu0 0.0
          %1268 = vmatpush2.msra.mxu0 0.0
          %1269 = vmatprep.subr.mxu0 0.0
          %1270 = vmatpush2.msra.mxu0 0.0
          %1271 = vmatprep.subr.mxu0 0.0
          %1272 = vmatpush2.msra.mxu0 0.0
          %1273 = vmatprep.subr.mxu0 0.0
          %1274 = vmatpush2.msra.mxu0 0.0
          %1275 = vmatprep.subr.mxu0 0.0
          %1276 = vmatpush2.msra.mxu0 0.0
          %1277 = vmatprep.subr.mxu0 0.0
          %1278 = vmatpush2.msra.mxu0 0.0
          %1279 = vmatprep.subr.mxu0 0.0
          %1280 = vmatpush2.msra.mxu0 0.0
          %1281 = vmatprep.subr.mxu0 0.0
          %1282 = vmatpush2.msra.mxu0 0.0
          %1283 = vmatprep.subr.mxu0 0.0
          %1284 = vmatpush2.msra.mxu0 0.0
          %1285 = vmatprep.mubr.f32.mxu0 0.0
          %1286 = vmatmul.mubr.f32.gmra.mxu0 %v1216
          %v1287 = vpop.f32.mrf.mxu0
          %v1288 = vadd.f32 0.0, %v1287
          %v1289 = vpop.f32.mrf.mxu0
          %1290 = vmatprep.mubr.f32.mxu0 0.0
          %1291 = vmatmul.mubr.f32.gmra.mxu0 %v1219
          %v1292 = vpop.f32.mrf.mxu0
          %v1293 = vadd.f32 0.0, %v1292
          %v1294 = vpop.f32.mrf.mxu0
          %1295 = vdwg.mxu0
          %v1296 = vmul.f32 %v1288, 0.17677669
          %v1297 = vmul.f32 %v1293, 0.17677669
          %v1298 = vsel %vm452, %v1296, -inf
          %1299 = vmax.xlane.f32.xlu0 %v1298
          %v1300 = vpop.xlane.xlu0 %1299
          %v1301 = vsel %vm452, %v1297, -inf
          %1302 = vmax.xlane.f32.xlu0 %v1301
          %v1303 = vpop.xlane.xlu0 %1302
          %v1304 = vsub.f32 %v1296, %v1300
          %v1305 = vsub.f32 %v1297, %v1303
          %v1306 = vmul.f32 %v1304, 1.442695
          %v1307 = vpow.pop %v1306
          %v1308 = vmul.f32 %v1305, 1.442695
          %v1309 = vpow.pop %v1308
          %v1310 = vsel %vm452, %v1307, 0.0
          %1311 = vadd.xlane.f32.xlu0 %v1310
          %v1312 = vpop.xlane.xlu0 %1311
          %v1313 = vsel %vm452, %v1309, 0.0
          %1314 = vadd.xlane.f32.xlu0 %v1313
          %v1315 = vpop.xlane.xlu0 %1314
          %v1316 = vrcp.pop %v1312
          %v1317 = vrcp.pop %v1315
          %v1318 = vmul.f32 %v1307, %v1316
          %v1319 = vmul.f32 %v1309, %v1317
          %v1321 = vsel %vm452, %v1165, 0
          %v1324 = vsel %vm452, %v1170, 0
          %v1327 = vsel %vm452, %v1175, 0
          %v1330 = vsel %vm452, %v1180, 0
          %v1333 = vsel %vm452, %v1318, 0
          %v1336 = vsel %vm452, %v1319, 0
          %1338 = vmatprep.subr.mxu0 0.0
          %1339 = vmatpush1.xpose.msra.mxu0 0.0
          %1340 = vmatprep.subr.mxu0 0.0
          %1341 = vmatpush1.xpose.msra.mxu0 0.0
          %1342 = vmatprep.subr.mxu0 0.0
          %1343 = vmatpush1.xpose.msra.mxu0 0.0
          %1344 = vmatprep.subr.mxu0 0.0
          %1345 = vmatpush1.xpose.msra.mxu0 0.0
          %1346 = vmatprep.subr.mxu0 0.0
          %1347 = vmatpush1.xpose.msra.mxu0 0.0
          %1348 = vmatprep.subr.mxu0 0.0
          %1349 = vmatpush1.xpose.msra.mxu0 0.0
          %1350 = vmatprep.subr.mxu0 0.0
          %1351 = vmatpush1.xpose.msra.mxu0 0.0
          %1352 = vmatprep.subr.mxu0 0.0
          %1353 = vmatpush1.xpose.msra.mxu0 0.0
          %1354 = vmatprep.subr.mxu0 0.0
          %1355 = vmatpush1.xpose.msra.mxu0 0.0
          %1356 = vmatprep.subr.mxu0 0.0
          %1357 = vmatpush1.xpose.msra.mxu0 0.0
          %1358 = vmatprep.subr.mxu0 0.0
          %1359 = vmatpush1.xpose.msra.mxu0 0.0
          %1360 = vmatprep.subr.mxu0 0.0
          %1361 = vmatpush1.xpose.msra.mxu0 0.0
          %1362 = vmatprep.subr.mxu0 0.0
          %1363 = vmatpush1.xpose.msra.mxu0 0.0
          %1364 = vmatprep.subr.mxu0 0.0
          %1365 = vmatpush1.xpose.msra.mxu0 0.0
          %1366 = vmatprep.subr.mxu0 0.0
          %1367 = vmatpush1.xpose.msra.mxu0 %v1336
          %1368 = vmatprep.subr.mxu0 0.0
          %1369 = vmatpush1.xpose.msra.mxu0 %v1333
          %1370 = vmatprep.subr.mxu0 0.0
          %1371 = vmatpush2.xpose.msra.mxu0 0.0
          %1372 = vmatprep.subr.mxu0 0.0
          %1373 = vmatpush2.xpose.msra.mxu0 0.0
          %1374 = vmatprep.subr.mxu0 0.0
          %1375 = vmatpush2.xpose.msra.mxu0 0.0
          %1376 = vmatprep.subr.mxu0 0.0
          %1377 = vmatpush2.xpose.msra.mxu0 0.0
          %1378 = vmatprep.subr.mxu0 0.0
          %1379 = vmatpush2.xpose.msra.mxu0 0.0
          %1380 = vmatprep.subr.mxu0 0.0
          %1381 = vmatpush2.xpose.msra.mxu0 0.0
          %1382 = vmatprep.subr.mxu0 0.0
          %1383 = vmatpush2.xpose.msra.mxu0 0.0
          %1384 = vmatprep.subr.mxu0 0.0
          %1385 = vmatpush2.xpose.msra.mxu0 0.0
          %1386 = vmatprep.subr.mxu0 0.0
          %1387 = vmatpush2.xpose.msra.mxu0 0.0
          %1388 = vmatprep.subr.mxu0 0.0
          %1389 = vmatpush2.xpose.msra.mxu0 0.0
          %1390 = vmatprep.subr.mxu0 0.0
          %1391 = vmatpush2.xpose.msra.mxu0 0.0
          %1392 = vmatprep.subr.mxu0 0.0
          %1393 = vmatpush2.xpose.msra.mxu0 0.0
          %1394 = vmatprep.subr.mxu0 0.0
          %1395 = vmatpush2.xpose.msra.mxu0 0.0
          %1396 = vmatprep.subr.mxu0 0.0
          %1397 = vmatpush2.xpose.msra.mxu0 0.0
          %1398 = vmatprep.subr.mxu0 0.0
          %1399 = vmatpush2.xpose.msra.mxu0 0.0
          %1400 = vmatprep.subr.mxu0 0.0
          %1401 = vmatpush2.xpose.msra.mxu0 0.0
          %1402 = vmatprep.mubr.f32.mxu0 0.0
          %1403 = vmatmul.mubr.f32.gmra.mxu0 %v1321
          %v1404 = vpop.f32.mrf.mxu0
          %v1405 = vadd.f32 0.0, %v1404
          %v1406 = vpop.f32.mrf.mxu0
          %1407 = vmatprep.mubr.f32.mxu0 0.0
          %1408 = vmatmul.mubr.f32.gmra.mxu0 %v1324
          %v1409 = vpop.f32.mrf.mxu0
          %v1410 = vadd.f32 0.0, %v1409
          %v1411 = vpop.f32.mrf.mxu0
          %1412 = vmatprep.mubr.f32.mxu0 0.0
          %1413 = vmatmul.mubr.f32.gmra.mxu0 %v1327
          %v1414 = vpop.f32.mrf.mxu0
          %v1415 = vadd.f32 0.0, %v1414
          %v1416 = vpop.f32.mrf.mxu0
          %1417 = vmatprep.mubr.f32.mxu0 0.0
          %1418 = vmatmul.mubr.f32.gmra.mxu0 %v1330
          %v1419 = vpop.f32.mrf.mxu0
          %v1420 = vadd.f32 0.0, %v1419
          %v1421 = vpop.f32.mrf.mxu0
          %1422 = vdwg.mxu0
          %v1423 = vld [vmem:[%s4] sm:$0xff]
          %v1424 = vld [vmem:[%s4 + $0x8] sm:$0xff]
          %v1425 = vld [vmem:[%s4 + $0x10] sm:$0xff]
          %v1426 = vld [vmem:[%s4 + $0x18] sm:$0xff]
          %1427 = vxpose.xlu0.b32.start [1/16] %v1405, 128
          %1428 = vxpose.xlu0.b32.cont [2/16] %v1410, 128
          %1429 = vxpose.xlu0.b32.cont [3/16] %v1415, 128
          %1430 = vxpose.xlu0.b32.cont [4/16] %v1420, 128
          %1431 = vxpose.xlu0.b32.cont [5/16] 0.0, 128
          %1432 = vxpose.xlu0.b32.cont [6/16] 0.0, 128
          %1433 = vxpose.xlu0.b32.cont [7/16] 0.0, 128
          %1434 = vxpose.xlu0.b32.cont [8/16] 0.0, 128
          %1435 = vxpose.xlu0.b32.cont [9/16] 0.0, 128
          %1436 = vxpose.xlu0.b32.cont [10/16] 0.0, 128
          %1437 = vxpose.xlu0.b32.cont [11/16] 0.0, 128
          %1438 = vxpose.xlu0.b32.cont [12/16] 0.0, 128
          %1439 = vxpose.xlu0.b32.cont [13/16] 0.0, 128
          %1440 = vxpose.xlu0.b32.cont [14/16] 0.0, 128
          %1441 = vxpose.xlu0.b32.cont [15/16] 0.0, 128
          %1442 = vxpose.xlu0.b32.end [16/16] 0.0, 128
          %v1443 = vpop.trf.xlu0
          %v1444 = vpop.trf.xlu0
          %v1445 = vpop.trf.xlu0
          %v1446 = vpop.trf.xlu0
          %v1447 = vpop.trf.xlu0
          %v1448 = vpop.trf.xlu0
          %v1449 = vpop.trf.xlu0
          %v1450 = vpop.trf.xlu0
          %v1451 = vpop.trf.xlu0
          %v1452 = vpop.trf.xlu0
          %v1453 = vpop.trf.xlu0
          %v1454 = vpop.trf.xlu0
          %v1455 = vpop.trf.xlu0
          %v1456 = vpop.trf.xlu0
          %v1457 = vpop.trf.xlu0
          %v1458 = vpop.trf.xlu0
          %v1460 = vsel %vm684, %v1443, 0
          %v1463 = vsel %vm684, %v1444, 0
          %1465 = vmatprep.subr.mxu0 0.0
          %1466 = vmatpush1.msra.mxu0 0.0
          %1467 = vmatprep.subr.mxu0 0.0
          %1468 = vmatpush1.msra.mxu0 0.0
          %1469 = vmatprep.subr.mxu0 0.0
          %1470 = vmatpush1.msra.mxu0 0.0
          %1471 = vmatprep.subr.mxu0 0.0
          %1472 = vmatpush1.msra.mxu0 0.0
          %1473 = vmatprep.subr.mxu0 0.0
          %1474 = vmatpush1.msra.mxu0 0.0
          %1475 = vmatprep.subr.mxu0 0.0
          %1476 = vmatpush1.msra.mxu0 0.0
          %1477 = vmatprep.subr.mxu0 0.0
          %1478 = vmatpush1.msra.mxu0 0.0
          %1479 = vmatprep.subr.mxu0 0.0
          %1480 = vmatpush1.msra.mxu0 0.0
          %1481 = vmatprep.subr.mxu0 0.0
          %1482 = vmatpush1.msra.mxu0 0.0
          %1483 = vmatprep.subr.mxu0 0.0
          %1484 = vmatpush1.msra.mxu0 0.0
          %1485 = vmatprep.subr.mxu0 0.0
          %1486 = vmatpush1.msra.mxu0 0.0
          %1487 = vmatprep.subr.mxu0 0.0
          %1488 = vmatpush1.msra.mxu0 0.0
          %1489 = vmatprep.subr.mxu0 0.0
          %1490 = vmatpush1.msra.mxu0 %v1426
          %1491 = vmatprep.subr.mxu0 0.0
          %1492 = vmatpush1.msra.mxu0 %v1425
          %1493 = vmatprep.subr.mxu0 0.0
          %1494 = vmatpush1.msra.mxu0 %v1424
          %1495 = vmatprep.subr.mxu0 0.0
          %1496 = vmatpush1.msra.mxu0 %v1423
          %1497 = vmatprep.subr.mxu0 0.0
          %1498 = vmatpush2.msra.mxu0 0.0
          %1499 = vmatprep.subr.mxu0 0.0
          %1500 = vmatpush2.msra.mxu0 0.0
          %1501 = vmatprep.subr.mxu0 0.0
          %1502 = vmatpush2.msra.mxu0 0.0
          %1503 = vmatprep.subr.mxu0 0.0
          %1504 = vmatpush2.msra.mxu0 0.0
          %1505 = vmatprep.subr.mxu0 0.0
          %1506 = vmatpush2.msra.mxu0 0.0
          %1507 = vmatprep.subr.mxu0 0.0
          %1508 = vmatpush2.msra.mxu0 0.0
          %1509 = vmatprep.subr.mxu0 0.0
          %1510 = vmatpush2.msra.mxu0 0.0
          %1511 = vmatprep.subr.mxu0 0.0
          %1512 = vmatpush2.msra.mxu0 0.0
          %1513 = vmatprep.subr.mxu0 0.0
          %1514 = vmatpush2.msra.mxu0 0.0
          %1515 = vmatprep.subr.mxu0 0.0
          %1516 = vmatpush2.msra.mxu0 0.0
          %1517 = vmatprep.subr.mxu0 0.0
          %1518 = vmatpush2.msra.mxu0 0.0
          %1519 = vmatprep.subr.mxu0 0.0
          %1520 = vmatpush2.msra.mxu0 0.0
          %1521 = vmatprep.subr.mxu0 0.0
          %1522 = vmatpush2.msra.mxu0 0.0
          %1523 = vmatprep.subr.mxu0 0.0
          %1524 = vmatpush2.msra.mxu0 0.0
          %1525 = vmatprep.subr.mxu0 0.0
          %1526 = vmatpush2.msra.mxu0 0.0
          %1527 = vmatprep.subr.mxu0 0.0
          %1528 = vmatpush2.msra.mxu0 0.0
          %1529 = vmatprep.mubr.f32.mxu0 0.0
          %1530 = vmatmul.mubr.f32.gmra.mxu0 %v1460
          %v1531 = vpop.f32.mrf.mxu0
          %v1532 = vadd.f32 0.0, %v1531
          %v1533 = vpop.f32.mrf.mxu0
          %1534 = vmatprep.mubr.f32.mxu0 0.0
          %1535 = vmatmul.mubr.f32.gmra.mxu0 %v1463
          %v1536 = vpop.f32.mrf.mxu0
          %v1537 = vadd.f32 0.0, %v1536
          %v1538 = vpop.f32.mrf.mxu0
          %1539 = vdwg.mxu0
          %v1540 = vld [vmem:[#allocation2 + $0x20] sm:$0xff]
          %v1541 = vld [vmem:[#allocation2 + $0x28] sm:$0xff]
          %v1542 = vld [vmem:[#allocation2 + $0x30] sm:$0xff]
          %v1543 = vld [vmem:[#allocation2 + $0x38] sm:$0xff]
          %v1544 = vmul.f32 %v1540, %v1004
          %v1545 = vmul.f32 %v1541, %v1004
          %v1546 = vmul.f32 %v1542, %v1004
          %v1547 = vmul.f32 %v1543, %v1004
          %1552 = vrot.lane.b32.xlu0 %v1544, 112
          %v1553 = vpop.permute.xlu0 %1552
          %1554 = vrot.lane.b32.xlu0 %v1545, 112
          %v1555 = vpop.permute.xlu0 %1554
          %1556 = vrot.lane.b32.xlu0 %v1546, 112
          %v1557 = vpop.permute.xlu0 %1556
          %1558 = vrot.lane.b32.xlu0 %v1547, 112
          %v1559 = vpop.permute.xlu0 %1558
          %1564 = vmatprep.subr.mxu0 0.0
          %1565 = vmatpush1.msra.mxu0 0.0
          %1566 = vmatprep.subr.mxu0 0.0
          %1567 = vmatpush1.msra.mxu0 0.0
          %1568 = vmatprep.subr.mxu0 0.0
          %1569 = vmatpush1.msra.mxu0 0.0
          %1570 = vmatprep.subr.mxu0 0.0
          %1571 = vmatpush1.msra.mxu0 0.0
          %1572 = vmatprep.subr.mxu0 0.0
          %1573 = vmatpush1.msra.mxu0 0.0
          %1574 = vmatprep.subr.mxu0 0.0
          %1575 = vmatpush1.msra.mxu0 0.0
          %1576 = vmatprep.subr.mxu0 0.0
          %1577 = vmatpush1.msra.mxu0 0.0
          %1578 = vmatprep.subr.mxu0 0.0
          %1579 = vmatpush1.msra.mxu0 0.0
          %1580 = vmatprep.subr.mxu0 0.0
          %1581 = vmatpush1.msra.mxu0 0.0
          %1582 = vmatprep.subr.mxu0 0.0
          %1583 = vmatpush1.msra.mxu0 0.0
          %1584 = vmatprep.subr.mxu0 0.0
          %1585 = vmatpush1.msra.mxu0 0.0
          %1586 = vmatprep.subr.mxu0 0.0
          %1587 = vmatpush1.msra.mxu0 0.0
          %1588 = vmatprep.subr.mxu0 0.0
          %1589 = vmatpush1.msra.mxu0 %v1559
          %1590 = vmatprep.subr.mxu0 0.0
          %1591 = vmatpush1.msra.mxu0 %v1557
          %1592 = vmatprep.subr.mxu0 0.0
          %1593 = vmatpush1.msra.mxu0 %v1555
          %1594 = vmatprep.subr.mxu0 0.0
          %1595 = vmatpush1.msra.mxu0 %v1553
          %1596 = vmatprep.subr.mxu0 0.0
          %1597 = vmatpush2.msra.mxu0 0.0
          %1598 = vmatprep.subr.mxu0 0.0
          %1599 = vmatpush2.msra.mxu0 0.0
          %1600 = vmatprep.subr.mxu0 0.0
          %1601 = vmatpush2.msra.mxu0 0.0
          %1602 = vmatprep.subr.mxu0 0.0
          %1603 = vmatpush2.msra.mxu0 0.0
          %1604 = vmatprep.subr.mxu0 0.0
          %1605 = vmatpush2.msra.mxu0 0.0
          %1606 = vmatprep.subr.mxu0 0.0
          %1607 = vmatpush2.msra.mxu0 0.0
          %1608 = vmatprep.subr.mxu0 0.0
          %1609 = vmatpush2.msra.mxu0 0.0
          %1610 = vmatprep.subr.mxu0 0.0
          %1611 = vmatpush2.msra.mxu0 0.0
          %1612 = vmatprep.subr.mxu0 0.0
          %1613 = vmatpush2.msra.mxu0 0.0
          %1614 = vmatprep.subr.mxu0 0.0
          %1615 = vmatpush2.msra.mxu0 0.0
          %1616 = vmatprep.subr.mxu0 0.0
          %1617 = vmatpush2.msra.mxu0 0.0
          %1618 = vmatprep.subr.mxu0 0.0
          %1619 = vmatpush2.msra.mxu0 0.0
          %1620 = vmatprep.subr.mxu0 0.0
          %1621 = vmatpush2.msra.mxu0 0.0
          %1622 = vmatprep.subr.mxu0 0.0
          %1623 = vmatpush2.msra.mxu0 0.0
          %1624 = vmatprep.subr.mxu0 0.0
          %1625 = vmatpush2.msra.mxu0 0.0
          %1626 = vmatprep.subr.mxu0 0.0
          %1627 = vmatpush2.msra.mxu0 0.0
          %1628 = vmatprep.mubr.f32.mxu0 0.0
          %1629 = vmatmul.mubr.f32.gmra.mxu0 %v1023
          %v1630 = vpop.f32.mrf.mxu0
          %v1631 = vadd.f32 0.0, %v1630
          %v1632 = vpop.f32.mrf.mxu0
          %1633 = vmatprep.mubr.f32.mxu0 0.0
          %1634 = vmatmul.mubr.f32.gmra.mxu0 %v1026
          %v1635 = vpop.f32.mrf.mxu0
          %v1636 = vadd.f32 0.0, %v1635
          %v1637 = vpop.f32.mrf.mxu0
          %1638 = vmatprep.mubr.f32.mxu0 0.0
          %1639 = vmatmul.mubr.f32.gmra.mxu0 %v1029
          %v1640 = vpop.f32.mrf.mxu0
          %v1641 = vadd.f32 0.0, %v1640
          %v1642 = vpop.f32.mrf.mxu0
          %1643 = vmatprep.mubr.f32.mxu0 0.0
          %1644 = vmatmul.mubr.f32.gmra.mxu0 %v1032
          %v1645 = vpop.f32.mrf.mxu0
          %v1646 = vadd.f32 0.0, %v1645
          %v1647 = vpop.f32.mrf.mxu0
          %1648 = vmatprep.mubr.f32.mxu0 0.0
          %1649 = vmatmul.mubr.f32.gmra.mxu0 %v1035
          %v1650 = vpop.f32.mrf.mxu0
          %v1651 = vadd.f32 0.0, %v1650
          %v1652 = vpop.f32.mrf.mxu0
          %1653 = vmatprep.mubr.f32.mxu0 0.0
          %1654 = vmatmul.mubr.f32.gmra.mxu0 %v1038
          %v1655 = vpop.f32.mrf.mxu0
          %v1656 = vadd.f32 0.0, %v1655
          %v1657 = vpop.f32.mrf.mxu0
          %1658 = vmatprep.mubr.f32.mxu0 0.0
          %1659 = vmatmul.mubr.f32.gmra.mxu0 %v1041
          %v1660 = vpop.f32.mrf.mxu0
          %v1661 = vadd.f32 0.0, %v1660
          %v1662 = vpop.f32.mrf.mxu0
          %1663 = vmatprep.mubr.f32.mxu0 0.0
          %1664 = vmatmul.mubr.f32.gmra.mxu0 %v1044
          %v1665 = vpop.f32.mrf.mxu0
          %v1666 = vadd.f32 0.0, %v1665
          %v1667 = vpop.f32.mrf.mxu0
          %1668 = vmatprep.mubr.f32.mxu0 0.0
          %1669 = vmatmul.mubr.f32.gmra.mxu0 %v1047
          %v1670 = vpop.f32.mrf.mxu0
          %v1671 = vadd.f32 0.0, %v1670
          %v1672 = vpop.f32.mrf.mxu0
          %1673 = vmatprep.mubr.f32.mxu0 0.0
          %1674 = vmatmul.mubr.f32.gmra.mxu0 %v1050
          %v1675 = vpop.f32.mrf.mxu0
          %v1676 = vadd.f32 0.0, %v1675
          %v1677 = vpop.f32.mrf.mxu0
          %1678 = vmatprep.mubr.f32.mxu0 0.0
          %1679 = vmatmul.mubr.f32.gmra.mxu0 %v1053
          %v1680 = vpop.f32.mrf.mxu0
          %v1681 = vadd.f32 0.0, %v1680
          %v1682 = vpop.f32.mrf.mxu0
          %1683 = vmatprep.mubr.f32.mxu0 0.0
          %1684 = vmatmul.mubr.f32.gmra.mxu0 %v1056
          %v1685 = vpop.f32.mrf.mxu0
          %v1686 = vadd.f32 0.0, %v1685
          %v1687 = vpop.f32.mrf.mxu0
          %1688 = vdwg.mxu0
          %1689 = vxpose.xlu0.b32.start [1/16] %v1631, 128
          %1690 = vxpose.xlu0.b32.cont [2/16] %v1636, 128
          %1691 = vxpose.xlu0.b32.cont [3/16] %v1641, 128
          %1692 = vxpose.xlu0.b32.cont [4/16] %v1646, 128
          %1693 = vxpose.xlu0.b32.cont [5/16] 0.0, 128
          %1694 = vxpose.xlu0.b32.cont [6/16] 0.0, 128
          %1695 = vxpose.xlu0.b32.cont [7/16] 0.0, 128
          %1696 = vxpose.xlu0.b32.cont [8/16] 0.0, 128
          %1697 = vxpose.xlu0.b32.cont [9/16] 0.0, 128
          %1698 = vxpose.xlu0.b32.cont [10/16] 0.0, 128
          %1699 = vxpose.xlu0.b32.cont [11/16] 0.0, 128
          %1700 = vxpose.xlu0.b32.cont [12/16] 0.0, 128
          %1701 = vxpose.xlu0.b32.cont [13/16] 0.0, 128
          %1702 = vxpose.xlu0.b32.cont [14/16] 0.0, 128
          %1703 = vxpose.xlu0.b32.cont [15/16] 0.0, 128
          %1704 = vxpose.xlu0.b32.end [16/16] 0.0, 128
          %v1705 = vpop.trf.xlu0
          %v1706 = vpop.trf.xlu0
          %v1707 = vpop.trf.xlu0
          %v1708 = vpop.trf.xlu0
          %v1709 = vpop.trf.xlu0
          %v1710 = vpop.trf.xlu0
          %v1711 = vpop.trf.xlu0
          %v1712 = vpop.trf.xlu0
          %v1713 = vpop.trf.xlu0
          %v1714 = vpop.trf.xlu0
          %v1715 = vpop.trf.xlu0
          %v1716 = vpop.trf.xlu0
          %v1717 = vpop.trf.xlu0
          %v1718 = vpop.trf.xlu0
          %v1719 = vpop.trf.xlu0
          %v1720 = vpop.trf.xlu0
          %v1722 = vsel %vm684, %v1705, 0
          %v1725 = vsel %vm684, %v1706, 0
          %1727 = vmatprep.subr.mxu0 0.0
          %1728 = vmatpush1.msra.mxu0 0.0
          %1729 = vmatprep.subr.mxu0 0.0
          %1730 = vmatpush1.msra.mxu0 0.0
          %1731 = vmatprep.subr.mxu0 0.0
          %1732 = vmatpush1.msra.mxu0 0.0
          %1733 = vmatprep.subr.mxu0 0.0
          %1734 = vmatpush1.msra.mxu0 0.0
          %1735 = vmatprep.subr.mxu0 0.0
          %1736 = vmatpush1.msra.mxu0 0.0
          %1737 = vmatprep.subr.mxu0 0.0
          %1738 = vmatpush1.msra.mxu0 0.0
          %1739 = vmatprep.subr.mxu0 0.0
          %1740 = vmatpush1.msra.mxu0 0.0
          %1741 = vmatprep.subr.mxu0 0.0
          %1742 = vmatpush1.msra.mxu0 0.0
          %1743 = vmatprep.subr.mxu0 0.0
          %1744 = vmatpush1.msra.mxu0 0.0
          %1745 = vmatprep.subr.mxu0 0.0
          %1746 = vmatpush1.msra.mxu0 0.0
          %1747 = vmatprep.subr.mxu0 0.0
          %1748 = vmatpush1.msra.mxu0 0.0
          %1749 = vmatprep.subr.mxu0 0.0
          %1750 = vmatpush1.msra.mxu0 0.0
          %1751 = vmatprep.subr.mxu0 0.0
          %1752 = vmatpush1.msra.mxu0 %v1666
          %1753 = vmatprep.subr.mxu0 0.0
          %1754 = vmatpush1.msra.mxu0 %v1661
          %1755 = vmatprep.subr.mxu0 0.0
          %1756 = vmatpush1.msra.mxu0 %v1656
          %1757 = vmatprep.subr.mxu0 0.0
          %1758 = vmatpush1.msra.mxu0 %v1651
          %1759 = vmatprep.subr.mxu0 0.0
          %1760 = vmatpush2.msra.mxu0 0.0
          %1761 = vmatprep.subr.mxu0 0.0
          %1762 = vmatpush2.msra.mxu0 0.0
          %1763 = vmatprep.subr.mxu0 0.0
          %1764 = vmatpush2.msra.mxu0 0.0
          %1765 = vmatprep.subr.mxu0 0.0
          %1766 = vmatpush2.msra.mxu0 0.0
          %1767 = vmatprep.subr.mxu0 0.0
          %1768 = vmatpush2.msra.mxu0 0.0
          %1769 = vmatprep.subr.mxu0 0.0
          %1770 = vmatpush2.msra.mxu0 0.0
          %1771 = vmatprep.subr.mxu0 0.0
          %1772 = vmatpush2.msra.mxu0 0.0
          %1773 = vmatprep.subr.mxu0 0.0
          %1774 = vmatpush2.msra.mxu0 0.0
          %1775 = vmatprep.subr.mxu0 0.0
          %1776 = vmatpush2.msra.mxu0 0.0
          %1777 = vmatprep.subr.mxu0 0.0
          %1778 = vmatpush2.msra.mxu0 0.0
          %1779 = vmatprep.subr.mxu0 0.0
          %1780 = vmatpush2.msra.mxu0 0.0
          %1781 = vmatprep.subr.mxu0 0.0
          %1782 = vmatpush2.msra.mxu0 0.0
          %1783 = vmatprep.subr.mxu0 0.0
          %1784 = vmatpush2.msra.mxu0 0.0
          %1785 = vmatprep.subr.mxu0 0.0
          %1786 = vmatpush2.msra.mxu0 0.0
          %1787 = vmatprep.subr.mxu0 0.0
          %1788 = vmatpush2.msra.mxu0 0.0
          %1789 = vmatprep.subr.mxu0 0.0
          %1790 = vmatpush2.msra.mxu0 0.0
          %1791 = vmatprep.mubr.f32.mxu0 0.0
          %1792 = vmatmul.mubr.f32.gmra.mxu0 %v1722
          %v1793 = vpop.f32.mrf.mxu0
          %v1794 = vadd.f32 0.0, %v1793
          %v1795 = vpop.f32.mrf.mxu0
          %1796 = vmatprep.mubr.f32.mxu0 0.0
          %1797 = vmatmul.mubr.f32.gmra.mxu0 %v1725
          %v1798 = vpop.f32.mrf.mxu0
          %v1799 = vadd.f32 0.0, %v1798
          %v1800 = vpop.f32.mrf.mxu0
          %1801 = vdwg.mxu0
          %v1802 = vmul.f32 %v1794, 0.17677669
          %v1803 = vmul.f32 %v1799, 0.17677669
          %v1804 = vsel %vm452, %v1802, -inf
          %1805 = vmax.xlane.f32.xlu0 %v1804
          %v1806 = vpop.xlane.xlu0 %1805
          %v1807 = vsel %vm452, %v1803, -inf
          %1808 = vmax.xlane.f32.xlu0 %v1807
          %v1809 = vpop.xlane.xlu0 %1808
          %v1810 = vsub.f32 %v1802, %v1806
          %v1811 = vsub.f32 %v1803, %v1809
          %v1812 = vmul.f32 %v1810, 1.442695
          %v1813 = vpow.pop %v1812
          %v1814 = vmul.f32 %v1811, 1.442695
          %v1815 = vpow.pop %v1814
          %v1816 = vsel %vm452, %v1813, 0.0
          %1817 = vadd.xlane.f32.xlu0 %v1816
          %v1818 = vpop.xlane.xlu0 %1817
          %v1819 = vsel %vm452, %v1815, 0.0
          %1820 = vadd.xlane.f32.xlu0 %v1819
          %v1821 = vpop.xlane.xlu0 %1820
          %v1822 = vrcp.pop %v1818
          %v1823 = vrcp.pop %v1821
          %v1824 = vmul.f32 %v1813, %v1822
          %v1825 = vmul.f32 %v1815, %v1823
          %v1827 = vsel %vm452, %v1671, 0
          %v1830 = vsel %vm452, %v1676, 0
          %v1833 = vsel %vm452, %v1681, 0
          %v1836 = vsel %vm452, %v1686, 0
          %v1839 = vsel %vm452, %v1824, 0
          %v1842 = vsel %vm452, %v1825, 0
          %1844 = vmatprep.subr.mxu0 0.0
          %1845 = vmatpush1.xpose.msra.mxu0 0.0
          %1846 = vmatprep.subr.mxu0 0.0
          %1847 = vmatpush1.xpose.msra.mxu0 0.0
          %1848 = vmatprep.subr.mxu0 0.0
          %1849 = vmatpush1.xpose.msra.mxu0 0.0
          %1850 = vmatprep.subr.mxu0 0.0
          %1851 = vmatpush1.xpose.msra.mxu0 0.0
          %1852 = vmatprep.subr.mxu0 0.0
          %1853 = vmatpush1.xpose.msra.mxu0 0.0
          %1854 = vmatprep.subr.mxu0 0.0
          %1855 = vmatpush1.xpose.msra.mxu0 0.0
          %1856 = vmatprep.subr.mxu0 0.0
          %1857 = vmatpush1.xpose.msra.mxu0 0.0
          %1858 = vmatprep.subr.mxu0 0.0
          %1859 = vmatpush1.xpose.msra.mxu0 0.0
          %1860 = vmatprep.subr.mxu0 0.0
          %1861 = vmatpush1.xpose.msra.mxu0 0.0
          %1862 = vmatprep.subr.mxu0 0.0
          %1863 = vmatpush1.xpose.msra.mxu0 0.0
          %1864 = vmatprep.subr.mxu0 0.0
          %1865 = vmatpush1.xpose.msra.mxu0 0.0
          %1866 = vmatprep.subr.mxu0 0.0
          %1867 = vmatpush1.xpose.msra.mxu0 0.0
          %1868 = vmatprep.subr.mxu0 0.0
          %1869 = vmatpush1.xpose.msra.mxu0 0.0
          %1870 = vmatprep.subr.mxu0 0.0
          %1871 = vmatpush1.xpose.msra.mxu0 0.0
          %1872 = vmatprep.subr.mxu0 0.0
          %1873 = vmatpush1.xpose.msra.mxu0 %v1842
          %1874 = vmatprep.subr.mxu0 0.0
          %1875 = vmatpush1.xpose.msra.mxu0 %v1839
          %1876 = vmatprep.subr.mxu0 0.0
          %1877 = vmatpush2.xpose.msra.mxu0 0.0
          %1878 = vmatprep.subr.mxu0 0.0
          %1879 = vmatpush2.xpose.msra.mxu0 0.0
          %1880 = vmatprep.subr.mxu0 0.0
          %1881 = vmatpush2.xpose.msra.mxu0 0.0
          %1882 = vmatprep.subr.mxu0 0.0
          %1883 = vmatpush2.xpose.msra.mxu0 0.0
          %1884 = vmatprep.subr.mxu0 0.0
          %1885 = vmatpush2.xpose.msra.mxu0 0.0
          %1886 = vmatprep.subr.mxu0 0.0
          %1887 = vmatpush2.xpose.msra.mxu0 0.0
          %1888 = vmatprep.subr.mxu0 0.0
          %1889 = vmatpush2.xpose.msra.mxu0 0.0
          %1890 = vmatprep.subr.mxu0 0.0
          %1891 = vmatpush2.xpose.msra.mxu0 0.0
          %1892 = vmatprep.subr.mxu0 0.0
          %1893 = vmatpush2.xpose.msra.mxu0 0.0
          %1894 = vmatprep.subr.mxu0 0.0
          %1895 = vmatpush2.xpose.msra.mxu0 0.0
          %1896 = vmatprep.subr.mxu0 0.0
          %1897 = vmatpush2.xpose.msra.mxu0 0.0
          %1898 = vmatprep.subr.mxu0 0.0
          %1899 = vmatpush2.xpose.msra.mxu0 0.0
          %1900 = vmatprep.subr.mxu0 0.0
          %1901 = vmatpush2.xpose.msra.mxu0 0.0
          %1902 = vmatprep.subr.mxu0 0.0
          %1903 = vmatpush2.xpose.msra.mxu0 0.0
          %1904 = vmatprep.subr.mxu0 0.0
          %1905 = vmatpush2.xpose.msra.mxu0 0.0
          %1906 = vmatprep.subr.mxu0 0.0
          %1907 = vmatpush2.xpose.msra.mxu0 0.0
          %1908 = vmatprep.mubr.f32.mxu0 0.0
          %1909 = vmatmul.mubr.f32.gmra.mxu0 %v1827
          %v1910 = vpop.f32.mrf.mxu0
          %v1911 = vadd.f32 0.0, %v1910
          %v1912 = vpop.f32.mrf.mxu0
          %1913 = vmatprep.mubr.f32.mxu0 0.0
          %1914 = vmatmul.mubr.f32.gmra.mxu0 %v1830
          %v1915 = vpop.f32.mrf.mxu0
          %v1916 = vadd.f32 0.0, %v1915
          %v1917 = vpop.f32.mrf.mxu0
          %1918 = vmatprep.mubr.f32.mxu0 0.0
          %1919 = vmatmul.mubr.f32.gmra.mxu0 %v1833
          %v1920 = vpop.f32.mrf.mxu0
          %v1921 = vadd.f32 0.0, %v1920
          %v1922 = vpop.f32.mrf.mxu0
          %1923 = vmatprep.mubr.f32.mxu0 0.0
          %1924 = vmatmul.mubr.f32.gmra.mxu0 %v1836
          %v1925 = vpop.f32.mrf.mxu0
          %v1926 = vadd.f32 0.0, %v1925
          %v1927 = vpop.f32.mrf.mxu0
          %1928 = vdwg.mxu0
          %v1929 = vld [vmem:[%s4 + $0x20] sm:$0xff]
          %v1930 = vld [vmem:[%s4 + $0x28] sm:$0xff]
          %v1931 = vld [vmem:[%s4 + $0x30] sm:$0xff]
          %v1932 = vld [vmem:[%s4 + $0x38] sm:$0xff]
          %1933 = vxpose.xlu0.b32.start [1/16] %v1911, 128
          %1934 = vxpose.xlu0.b32.cont [2/16] %v1916, 128
          %1935 = vxpose.xlu0.b32.cont [3/16] %v1921, 128
          %1936 = vxpose.xlu0.b32.cont [4/16] %v1926, 128
          %1937 = vxpose.xlu0.b32.cont [5/16] 0.0, 128
          %1938 = vxpose.xlu0.b32.cont [6/16] 0.0, 128
          %1939 = vxpose.xlu0.b32.cont [7/16] 0.0, 128
          %1940 = vxpose.xlu0.b32.cont [8/16] 0.0, 128
          %1941 = vxpose.xlu0.b32.cont [9/16] 0.0, 128
          %1942 = vxpose.xlu0.b32.cont [10/16] 0.0, 128
          %1943 = vxpose.xlu0.b32.cont [11/16] 0.0, 128
          %1944 = vxpose.xlu0.b32.cont [12/16] 0.0, 128
          %1945 = vxpose.xlu0.b32.cont [13/16] 0.0, 128
          %1946 = vxpose.xlu0.b32.cont [14/16] 0.0, 128
          %1947 = vxpose.xlu0.b32.cont [15/16] 0.0, 128
          %1948 = vxpose.xlu0.b32.end [16/16] 0.0, 128
          %v1949 = vpop.trf.xlu0
          %v1950 = vpop.trf.xlu0
          %v1951 = vpop.trf.xlu0
          %v1952 = vpop.trf.xlu0
          %v1953 = vpop.trf.xlu0
          %v1954 = vpop.trf.xlu0
          %v1955 = vpop.trf.xlu0
          %v1956 = vpop.trf.xlu0
          %v1957 = vpop.trf.xlu0
          %v1958 = vpop.trf.xlu0
          %v1959 = vpop.trf.xlu0
          %v1960 = vpop.trf.xlu0
          %v1961 = vpop.trf.xlu0
          %v1962 = vpop.trf.xlu0
          %v1963 = vpop.trf.xlu0
          %v1964 = vpop.trf.xlu0
          %v1966 = vsel %vm684, %v1949, 0
          %v1969 = vsel %vm684, %v1950, 0
          %1971 = vmatprep.subr.mxu0 0.0
          %1972 = vmatpush1.msra.mxu0 0.0
          %1973 = vmatprep.subr.mxu0 0.0
          %1974 = vmatpush1.msra.mxu0 0.0
          %1975 = vmatprep.subr.mxu0 0.0
          %1976 = vmatpush1.msra.mxu0 0.0
          %1977 = vmatprep.subr.mxu0 0.0
          %1978 = vmatpush1.msra.mxu0 0.0
          %1979 = vmatprep.subr.mxu0 0.0
          %1980 = vmatpush1.msra.mxu0 0.0
          %1981 = vmatprep.subr.mxu0 0.0
          %1982 = vmatpush1.msra.mxu0 0.0
          %1983 = vmatprep.subr.mxu0 0.0
          %1984 = vmatpush1.msra.mxu0 0.0
          %1985 = vmatprep.subr.mxu0 0.0
          %1986 = vmatpush1.msra.mxu0 0.0
          %1987 = vmatprep.subr.mxu0 0.0
          %1988 = vmatpush1.msra.mxu0 0.0
          %1989 = vmatprep.subr.mxu0 0.0
          %1990 = vmatpush1.msra.mxu0 0.0
          %1991 = vmatprep.subr.mxu0 0.0
          %1992 = vmatpush1.msra.mxu0 0.0
          %1993 = vmatprep.subr.mxu0 0.0
          %1994 = vmatpush1.msra.mxu0 0.0
          %1995 = vmatprep.subr.mxu0 0.0
          %1996 = vmatpush1.msra.mxu0 %v1932
          %1997 = vmatprep.subr.mxu0 0.0
          %1998 = vmatpush1.msra.mxu0 %v1931
          %1999 = vmatprep.subr.mxu0 0.0
          %2000 = vmatpush1.msra.mxu0 %v1930
          %2001 = vmatprep.subr.mxu0 0.0
          %2002 = vmatpush1.msra.mxu0 %v1929
          %2003 = vmatprep.subr.mxu0 0.0
          %2004 = vmatpush2.msra.mxu0 0.0
          %2005 = vmatprep.subr.mxu0 0.0
          %2006 = vmatpush2.msra.mxu0 0.0
          %2007 = vmatprep.subr.mxu0 0.0
          %2008 = vmatpush2.msra.mxu0 0.0
          %2009 = vmatprep.subr.mxu0 0.0
          %2010 = vmatpush2.msra.mxu0 0.0
          %2011 = vmatprep.subr.mxu0 0.0
          %2012 = vmatpush2.msra.mxu0 0.0
          %2013 = vmatprep.subr.mxu0 0.0
          %2014 = vmatpush2.msra.mxu0 0.0
          %2015 = vmatprep.subr.mxu0 0.0
          %2016 = vmatpush2.msra.mxu0 0.0
          %2017 = vmatprep.subr.mxu0 0.0
          %2018 = vmatpush2.msra.mxu0 0.0
          %2019 = vmatprep.subr.mxu0 0.0
          %2020 = vmatpush2.msra.mxu0 0.0
          %2021 = vmatprep.subr.mxu0 0.0
          %2022 = vmatpush2.msra.mxu0 0.0
          %2023 = vmatprep.subr.mxu0 0.0
          %2024 = vmatpush2.msra.mxu0 0.0
          %2025 = vmatprep.subr.mxu0 0.0
          %2026 = vmatpush2.msra.mxu0 0.0
          %2027 = vmatprep.subr.mxu0 0.0
          %2028 = vmatpush2.msra.mxu0 0.0
          %2029 = vmatprep.subr.mxu0 0.0
          %2030 = vmatpush2.msra.mxu0 0.0
          %2031 = vmatprep.subr.mxu0 0.0
          %2032 = vmatpush2.msra.mxu0 0.0
          %2033 = vmatprep.subr.mxu0 0.0
          %2034 = vmatpush2.msra.mxu0 0.0
          %2035 = vmatprep.mubr.f32.mxu0 0.0
          %2036 = vmatmul.mubr.f32.gmra.mxu0 %v1966
          %v2037 = vpop.f32.mrf.mxu0
          %v2038 = vadd.f32 0.0, %v2037
          %v2039 = vpop.f32.mrf.mxu0
          %2040 = vmatprep.mubr.f32.mxu0 0.0
          %2041 = vmatmul.mubr.f32.gmra.mxu0 %v1969
          %v2042 = vpop.f32.mrf.mxu0
          %v2043 = vadd.f32 0.0, %v2042
          %v2044 = vpop.f32.mrf.mxu0
          %2045 = vdwg.mxu0
          %v2046 = vld [vmem:[#allocation2 + $0x40] sm:$0xff]
          %v2047 = vld [vmem:[#allocation2 + $0x48] sm:$0xff]
          %v2048 = vld [vmem:[#allocation2 + $0x50] sm:$0xff]
          %v2049 = vld [vmem:[#allocation2 + $0x58] sm:$0xff]
          %v2050 = vmul.f32 %v2046, %v1004
          %v2051 = vmul.f32 %v2047, %v1004
          %v2052 = vmul.f32 %v2048, %v1004
          %v2053 = vmul.f32 %v2049, %v1004
          %2058 = vrot.lane.b32.xlu0 %v2050, 96
          %v2059 = vpop.permute.xlu0 %2058
          %2060 = vrot.lane.b32.xlu0 %v2051, 96
          %v2061 = vpop.permute.xlu0 %2060
          %2062 = vrot.lane.b32.xlu0 %v2052, 96
          %v2063 = vpop.permute.xlu0 %2062
          %2064 = vrot.lane.b32.xlu0 %v2053, 96
          %v2065 = vpop.permute.xlu0 %2064
          %2070 = vmatprep.subr.mxu0 0.0
          %2071 = vmatpush1.msra.mxu0 0.0
          %2072 = vmatprep.subr.mxu0 0.0
          %2073 = vmatpush1.msra.mxu0 0.0
          %2074 = vmatprep.subr.mxu0 0.0
          %2075 = vmatpush1.msra.mxu0 0.0
          %2076 = vmatprep.subr.mxu0 0.0
          %2077 = vmatpush1.msra.mxu0 0.0
          %2078 = vmatprep.subr.mxu0 0.0
          %2079 = vmatpush1.msra.mxu0 0.0
          %2080 = vmatprep.subr.mxu0 0.0
          %2081 = vmatpush1.msra.mxu0 0.0
          %2082 = vmatprep.subr.mxu0 0.0
          %2083 = vmatpush1.msra.mxu0 0.0
          %2084 = vmatprep.subr.mxu0 0.0
          %2085 = vmatpush1.msra.mxu0 0.0
          %2086 = vmatprep.subr.mxu0 0.0
          %2087 = vmatpush1.msra.mxu0 0.0
          %2088 = vmatprep.subr.mxu0 0.0
          %2089 = vmatpush1.msra.mxu0 0.0
          %2090 = vmatprep.subr.mxu0 0.0
          %2091 = vmatpush1.msra.mxu0 0.0
          %2092 = vmatprep.subr.mxu0 0.0
          %2093 = vmatpush1.msra.mxu0 0.0
          %2094 = vmatprep.subr.mxu0 0.0
          %2095 = vmatpush1.msra.mxu0 %v2065
          %2096 = vmatprep.subr.mxu0 0.0
          %2097 = vmatpush1.msra.mxu0 %v2063
          %2098 = vmatprep.subr.mxu0 0.0
          %2099 = vmatpush1.msra.mxu0 %v2061
          %2100 = vmatprep.subr.mxu0 0.0
          %2101 = vmatpush1.msra.mxu0 %v2059
          %2102 = vmatprep.subr.mxu0 0.0
          %2103 = vmatpush2.msra.mxu0 0.0
          %2104 = vmatprep.subr.mxu0 0.0
          %2105 = vmatpush2.msra.mxu0 0.0
          %2106 = vmatprep.subr.mxu0 0.0
          %2107 = vmatpush2.msra.mxu0 0.0
          %2108 = vmatprep.subr.mxu0 0.0
          %2109 = vmatpush2.msra.mxu0 0.0
          %2110 = vmatprep.subr.mxu0 0.0
          %2111 = vmatpush2.msra.mxu0 0.0
          %2112 = vmatprep.subr.mxu0 0.0
          %2113 = vmatpush2.msra.mxu0 0.0
          %2114 = vmatprep.subr.mxu0 0.0
          %2115 = vmatpush2.msra.mxu0 0.0
          %2116 = vmatprep.subr.mxu0 0.0
          %2117 = vmatpush2.msra.mxu0 0.0
          %2118 = vmatprep.subr.mxu0 0.0
          %2119 = vmatpush2.msra.mxu0 0.0
          %2120 = vmatprep.subr.mxu0 0.0
          %2121 = vmatpush2.msra.mxu0 0.0
          %2122 = vmatprep.subr.mxu0 0.0
          %2123 = vmatpush2.msra.mxu0 0.0
          %2124 = vmatprep.subr.mxu0 0.0
          %2125 = vmatpush2.msra.mxu0 0.0
          %2126 = vmatprep.subr.mxu0 0.0
          %2127 = vmatpush2.msra.mxu0 0.0
          %2128 = vmatprep.subr.mxu0 0.0
          %2129 = vmatpush2.msra.mxu0 0.0
          %2130 = vmatprep.subr.mxu0 0.0
          %2131 = vmatpush2.msra.mxu0 0.0
          %2132 = vmatprep.subr.mxu0 0.0
          %2133 = vmatpush2.msra.mxu0 0.0
          %2134 = vmatprep.mubr.f32.mxu0 0.0
          %2135 = vmatmul.mubr.f32.gmra.mxu0 %v1023
          %v2136 = vpop.f32.mrf.mxu0
          %v2137 = vadd.f32 0.0, %v2136
          %v2138 = vpop.f32.mrf.mxu0
          %2139 = vmatprep.mubr.f32.mxu0 0.0
          %2140 = vmatmul.mubr.f32.gmra.mxu0 %v1026
          %v2141 = vpop.f32.mrf.mxu0
          %v2142 = vadd.f32 0.0, %v2141
          %v2143 = vpop.f32.mrf.mxu0
          %2144 = vmatprep.mubr.f32.mxu0 0.0
          %2145 = vmatmul.mubr.f32.gmra.mxu0 %v1029
          %v2146 = vpop.f32.mrf.mxu0
          %v2147 = vadd.f32 0.0, %v2146
          %v2148 = vpop.f32.mrf.mxu0
          %2149 = vmatprep.mubr.f32.mxu0 0.0
          %2150 = vmatmul.mubr.f32.gmra.mxu0 %v1032
          %v2151 = vpop.f32.mrf.mxu0
          %v2152 = vadd.f32 0.0, %v2151
          %v2153 = vpop.f32.mrf.mxu0
          %2154 = vmatprep.mubr.f32.mxu0 0.0
          %2155 = vmatmul.mubr.f32.gmra.mxu0 %v1035
          %v2156 = vpop.f32.mrf.mxu0
          %v2157 = vadd.f32 0.0, %v2156
          %v2158 = vpop.f32.mrf.mxu0
          %2159 = vmatprep.mubr.f32.mxu0 0.0
          %2160 = vmatmul.mubr.f32.gmra.mxu0 %v1038
          %v2161 = vpop.f32.mrf.mxu0
          %v2162 = vadd.f32 0.0, %v2161
          %v2163 = vpop.f32.mrf.mxu0
          %2164 = vmatprep.mubr.f32.mxu0 0.0
          %2165 = vmatmul.mubr.f32.gmra.mxu0 %v1041
          %v2166 = vpop.f32.mrf.mxu0
          %v2167 = vadd.f32 0.0, %v2166
          %v2168 = vpop.f32.mrf.mxu0
          %2169 = vmatprep.mubr.f32.mxu0 0.0
          %2170 = vmatmul.mubr.f32.gmra.mxu0 %v1044
          %v2171 = vpop.f32.mrf.mxu0
          %v2172 = vadd.f32 0.0, %v2171
          %v2173 = vpop.f32.mrf.mxu0
          %2174 = vmatprep.mubr.f32.mxu0 0.0
          %2175 = vmatmul.mubr.f32.gmra.mxu0 %v1047
          %v2176 = vpop.f32.mrf.mxu0
          %v2177 = vadd.f32 0.0, %v2176
          %v2178 = vpop.f32.mrf.mxu0
          %2179 = vmatprep.mubr.f32.mxu0 0.0
          %2180 = vmatmul.mubr.f32.gmra.mxu0 %v1050
          %v2181 = vpop.f32.mrf.mxu0
          %v2182 = vadd.f32 0.0, %v2181
          %v2183 = vpop.f32.mrf.mxu0
          %2184 = vmatprep.mubr.f32.mxu0 0.0
          %2185 = vmatmul.mubr.f32.gmra.mxu0 %v1053
          %v2186 = vpop.f32.mrf.mxu0
          %v2187 = vadd.f32 0.0, %v2186
          %v2188 = vpop.f32.mrf.mxu0
          %2189 = vmatprep.mubr.f32.mxu0 0.0
          %2190 = vmatmul.mubr.f32.gmra.mxu0 %v1056
          %v2191 = vpop.f32.mrf.mxu0
          %v2192 = vadd.f32 0.0, %v2191
          %v2193 = vpop.f32.mrf.mxu0
          %2194 = vdwg.mxu0
          %2195 = vxpose.xlu0.b32.start [1/16] %v2137, 128
          %2196 = vxpose.xlu0.b32.cont [2/16] %v2142, 128
          %2197 = vxpose.xlu0.b32.cont [3/16] %v2147, 128
          %2198 = vxpose.xlu0.b32.cont [4/16] %v2152, 128
          %2199 = vxpose.xlu0.b32.cont [5/16] 0.0, 128
          %2200 = vxpose.xlu0.b32.cont [6/16] 0.0, 128
          %2201 = vxpose.xlu0.b32.cont [7/16] 0.0, 128
          %2202 = vxpose.xlu0.b32.cont [8/16] 0.0, 128
          %2203 = vxpose.xlu0.b32.cont [9/16] 0.0, 128
          %2204 = vxpose.xlu0.b32.cont [10/16] 0.0, 128
          %2205 = vxpose.xlu0.b32.cont [11/16] 0.0, 128
          %2206 = vxpose.xlu0.b32.cont [12/16] 0.0, 128
          %2207 = vxpose.xlu0.b32.cont [13/16] 0.0, 128
          %2208 = vxpose.xlu0.b32.cont [14/16] 0.0, 128
          %2209 = vxpose.xlu0.b32.cont [15/16] 0.0, 128
          %2210 = vxpose.xlu0.b32.end [16/16] 0.0, 128
          %v2211 = vpop.trf.xlu0
          %v2212 = vpop.trf.xlu0
          %v2213 = vpop.trf.xlu0
          %v2214 = vpop.trf.xlu0
          %v2215 = vpop.trf.xlu0
          %v2216 = vpop.trf.xlu0
          %v2217 = vpop.trf.xlu0
          %v2218 = vpop.trf.xlu0
          %v2219 = vpop.trf.xlu0
          %v2220 = vpop.trf.xlu0
          %v2221 = vpop.trf.xlu0
          %v2222 = vpop.trf.xlu0
          %v2223 = vpop.trf.xlu0
          %v2224 = vpop.trf.xlu0
          %v2225 = vpop.trf.xlu0
          %v2226 = vpop.trf.xlu0
          %v2228 = vsel %vm684, %v2211, 0
          %v2231 = vsel %vm684, %v2212, 0
          %2233 = vmatprep.subr.mxu0 0.0
          %2234 = vmatpush1.msra.mxu0 0.0
          %2235 = vmatprep.subr.mxu0 0.0
          %2236 = vmatpush1.msra.mxu0 0.0
          %2237 = vmatprep.subr.mxu0 0.0
          %2238 = vmatpush1.msra.mxu0 0.0
          %2239 = vmatprep.subr.mxu0 0.0
          %2240 = vmatpush1.msra.mxu0 0.0
          %2241 = vmatprep.subr.mxu0 0.0
          %2242 = vmatpush1.msra.mxu0 0.0
          %2243 = vmatprep.subr.mxu0 0.0
          %2244 = vmatpush1.msra.mxu0 0.0
          %2245 = vmatprep.subr.mxu0 0.0
          %2246 = vmatpush1.msra.mxu0 0.0
          %2247 = vmatprep.subr.mxu0 0.0
          %2248 = vmatpush1.msra.mxu0 0.0
          %2249 = vmatprep.subr.mxu0 0.0
          %2250 = vmatpush1.msra.mxu0 0.0
          %2251 = vmatprep.subr.mxu0 0.0
          %2252 = vmatpush1.msra.mxu0 0.0
          %2253 = vmatprep.subr.mxu0 0.0
          %2254 = vmatpush1.msra.mxu0 0.0
          %2255 = vmatprep.subr.mxu0 0.0
          %2256 = vmatpush1.msra.mxu0 0.0
          %2257 = vmatprep.subr.mxu0 0.0
          %2258 = vmatpush1.msra.mxu0 %v2172
          %2259 = vmatprep.subr.mxu0 0.0
          %2260 = vmatpush1.msra.mxu0 %v2167
          %2261 = vmatprep.subr.mxu0 0.0
          %2262 = vmatpush1.msra.mxu0 %v2162
          %2263 = vmatprep.subr.mxu0 0.0
          %2264 = vmatpush1.msra.mxu0 %v2157
          %2265 = vmatprep.subr.mxu0 0.0
          %2266 = vmatpush2.msra.mxu0 0.0
          %2267 = vmatprep.subr.mxu0 0.0
          %2268 = vmatpush2.msra.mxu0 0.0
          %2269 = vmatprep.subr.mxu0 0.0
          %2270 = vmatpush2.msra.mxu0 0.0
          %2271 = vmatprep.subr.mxu0 0.0
          %2272 = vmatpush2.msra.mxu0 0.0
          %2273 = vmatprep.subr.mxu0 0.0
          %2274 = vmatpush2.msra.mxu0 0.0
          %2275 = vmatprep.subr.mxu0 0.0
          %2276 = vmatpush2.msra.mxu0 0.0
          %2277 = vmatprep.subr.mxu0 0.0
          %2278 = vmatpush2.msra.mxu0 0.0
          %2279 = vmatprep.subr.mxu0 0.0
          %2280 = vmatpush2.msra.mxu0 0.0
          %2281 = vmatprep.subr.mxu0 0.0
          %2282 = vmatpush2.msra.mxu0 0.0
          %2283 = vmatprep.subr.mxu0 0.0
          %2284 = vmatpush2.msra.mxu0 0.0
          %2285 = vmatprep.subr.mxu0 0.0
          %2286 = vmatpush2.msra.mxu0 0.0
          %2287 = vmatprep.subr.mxu0 0.0
          %2288 = vmatpush2.msra.mxu0 0.0
          %2289 = vmatprep.subr.mxu0 0.0
          %2290 = vmatpush2.msra.mxu0 0.0
          %2291 = vmatprep.subr.mxu0 0.0
          %2292 = vmatpush2.msra.mxu0 0.0
          %2293 = vmatprep.subr.mxu0 0.0
          %2294 = vmatpush2.msra.mxu0 0.0
          %2295 = vmatprep.subr.mxu0 0.0
          %2296 = vmatpush2.msra.mxu0 0.0
          %2297 = vmatprep.mubr.f32.mxu0 0.0
          %2298 = vmatmul.mubr.f32.gmra.mxu0 %v2228
          %v2299 = vpop.f32.mrf.mxu0
          %v2300 = vadd.f32 0.0, %v2299
          %v2301 = vpop.f32.mrf.mxu0
          %2302 = vmatprep.mubr.f32.mxu0 0.0
          %2303 = vmatmul.mubr.f32.gmra.mxu0 %v2231
          %v2304 = vpop.f32.mrf.mxu0
          %v2305 = vadd.f32 0.0, %v2304
          %v2306 = vpop.f32.mrf.mxu0
          %2307 = vdwg.mxu0
          %v2308 = vmul.f32 %v2300, 0.17677669
          %v2309 = vmul.f32 %v2305, 0.17677669
          %v2310 = vsel %vm452, %v2308, -inf
          %2311 = vmax.xlane.f32.xlu0 %v2310
          %v2312 = vpop.xlane.xlu0 %2311
          %v2313 = vsel %vm452, %v2309, -inf
          %2314 = vmax.xlane.f32.xlu0 %v2313
          %v2315 = vpop.xlane.xlu0 %2314
          %v2316 = vsub.f32 %v2308, %v2312
          %v2317 = vsub.f32 %v2309, %v2315
          %v2318 = vmul.f32 %v2316, 1.442695
          %v2319 = vpow.pop %v2318
          %v2320 = vmul.f32 %v2317, 1.442695
          %v2321 = vpow.pop %v2320
          %v2322 = vsel %vm452, %v2319, 0.0
          %2323 = vadd.xlane.f32.xlu0 %v2322
          %v2324 = vpop.xlane.xlu0 %2323
          %v2325 = vsel %vm452, %v2321, 0.0
          %2326 = vadd.xlane.f32.xlu0 %v2325
          %v2327 = vpop.xlane.xlu0 %2326
          %v2328 = vrcp.pop %v2324
          %v2329 = vrcp.pop %v2327
          %v2330 = vmul.f32 %v2319, %v2328
          %v2331 = vmul.f32 %v2321, %v2329
          %v2333 = vsel %vm452, %v2177, 0
          %v2336 = vsel %vm452, %v2182, 0
          %v2339 = vsel %vm452, %v2187, 0
          %v2342 = vsel %vm452, %v2192, 0
          %v2345 = vsel %vm452, %v2330, 0
          %v2348 = vsel %vm452, %v2331, 0
          %2350 = vmatprep.subr.mxu0 0.0
          %2351 = vmatpush1.xpose.msra.mxu0 0.0
          %2352 = vmatprep.subr.mxu0 0.0
          %2353 = vmatpush1.xpose.msra.mxu0 0.0
          %2354 = vmatprep.subr.mxu0 0.0
          %2355 = vmatpush1.xpose.msra.mxu0 0.0
          %2356 = vmatprep.subr.mxu0 0.0
          %2357 = vmatpush1.xpose.msra.mxu0 0.0
          %2358 = vmatprep.subr.mxu0 0.0
          %2359 = vmatpush1.xpose.msra.mxu0 0.0
          %2360 = vmatprep.subr.mxu0 0.0
          %2361 = vmatpush1.xpose.msra.mxu0 0.0
          %2362 = vmatprep.subr.mxu0 0.0
          %2363 = vmatpush1.xpose.msra.mxu0 0.0
          %2364 = vmatprep.subr.mxu0 0.0
          %2365 = vmatpush1.xpose.msra.mxu0 0.0
          %2366 = vmatprep.subr.mxu0 0.0
          %2367 = vmatpush1.xpose.msra.mxu0 0.0
          %2368 = vmatprep.subr.mxu0 0.0
          %2369 = vmatpush1.xpose.msra.mxu0 0.0
          %2370 = vmatprep.subr.mxu0 0.0
          %2371 = vmatpush1.xpose.msra.mxu0 0.0
          %2372 = vmatprep.subr.mxu0 0.0
          %2373 = vmatpush1.xpose.msra.mxu0 0.0
          %2374 = vmatprep.subr.mxu0 0.0
          %2375 = vmatpush1.xpose.msra.mxu0 0.0
          %2376 = vmatprep.subr.mxu0 0.0
          %2377 = vmatpush1.xpose.msra.mxu0 0.0
          %2378 = vmatprep.subr.mxu0 0.0
          %2379 = vmatpush1.xpose.msra.mxu0 %v2348
          %2380 = vmatprep.subr.mxu0 0.0
          %2381 = vmatpush1.xpose.msra.mxu0 %v2345
          %2382 = vmatprep.subr.mxu0 0.0
          %2383 = vmatpush2.xpose.msra.mxu0 0.0
          %2384 = vmatprep.subr.mxu0 0.0
          %2385 = vmatpush2.xpose.msra.mxu0 0.0
          %2386 = vmatprep.subr.mxu0 0.0
          %2387 = vmatpush2.xpose.msra.mxu0 0.0
          %2388 = vmatprep.subr.mxu0 0.0
          %2389 = vmatpush2.xpose.msra.mxu0 0.0
          %2390 = vmatprep.subr.mxu0 0.0
          %2391 = vmatpush2.xpose.msra.mxu0 0.0
          %2392 = vmatprep.subr.mxu0 0.0
          %2393 = vmatpush2.xpose.msra.mxu0 0.0
          %2394 = vmatprep.subr.mxu0 0.0
          %2395 = vmatpush2.xpose.msra.mxu0 0.0
          %2396 = vmatprep.subr.mxu0 0.0
          %2397 = vmatpush2.xpose.msra.mxu0 0.0
          %2398 = vmatprep.subr.mxu0 0.0
          %2399 = vmatpush2.xpose.msra.mxu0 0.0
          %2400 = vmatprep.subr.mxu0 0.0
          %2401 = vmatpush2.xpose.msra.mxu0 0.0
          %2402 = vmatprep.subr.mxu0 0.0
          %2403 = vmatpush2.xpose.msra.mxu0 0.0
          %2404 = vmatprep.subr.mxu0 0.0
          %2405 = vmatpush2.xpose.msra.mxu0 0.0
          %2406 = vmatprep.subr.mxu0 0.0
          %2407 = vmatpush2.xpose.msra.mxu0 0.0
          %2408 = vmatprep.subr.mxu0 0.0
          %2409 = vmatpush2.xpose.msra.mxu0 0.0
          %2410 = vmatprep.subr.mxu0 0.0
          %2411 = vmatpush2.xpose.msra.mxu0 0.0
          %2412 = vmatprep.subr.mxu0 0.0
          %2413 = vmatpush2.xpose.msra.mxu0 0.0
          %2414 = vmatprep.mubr.f32.mxu0 0.0
          %2415 = vmatmul.mubr.f32.gmra.mxu0 %v2333
          %v2416 = vpop.f32.mrf.mxu0
          %v2417 = vadd.f32 0.0, %v2416
          %v2418 = vpop.f32.mrf.mxu0
          %2419 = vmatprep.mubr.f32.mxu0 0.0
          %2420 = vmatmul.mubr.f32.gmra.mxu0 %v2336
          %v2421 = vpop.f32.mrf.mxu0
          %v2422 = vadd.f32 0.0, %v2421
          %v2423 = vpop.f32.mrf.mxu0
          %2424 = vmatprep.mubr.f32.mxu0 0.0
          %2425 = vmatmul.mubr.f32.gmra.mxu0 %v2339
          %v2426 = vpop.f32.mrf.mxu0
          %v2427 = vadd.f32 0.0, %v2426
          %v2428 = vpop.f32.mrf.mxu0
          %2429 = vmatprep.mubr.f32.mxu0 0.0
          %2430 = vmatmul.mubr.f32.gmra.mxu0 %v2342
          %v2431 = vpop.f32.mrf.mxu0
          %v2432 = vadd.f32 0.0, %v2431
          %v2433 = vpop.f32.mrf.mxu0
          %2434 = vdwg.mxu0
          %v2435 = vld [vmem:[%s4 + $0x40] sm:$0xff]
          %v2436 = vld [vmem:[%s4 + $0x48] sm:$0xff]
          %v2437 = vld [vmem:[%s4 + $0x50] sm:$0xff]
          %v2438 = vld [vmem:[%s4 + $0x58] sm:$0xff]
          %2439 = vxpose.xlu0.b32.start [1/16] %v2417, 128
          %2440 = vxpose.xlu0.b32.cont [2/16] %v2422, 128
          %2441 = vxpose.xlu0.b32.cont [3/16] %v2427, 128
          %2442 = vxpose.xlu0.b32.cont [4/16] %v2432, 128
          %2443 = vxpose.xlu0.b32.cont [5/16] 0.0, 128
          %2444 = vxpose.xlu0.b32.cont [6/16] 0.0, 128
          %2445 = vxpose.xlu0.b32.cont [7/16] 0.0, 128
          %2446 = vxpose.xlu0.b32.cont [8/16] 0.0, 128
          %2447 = vxpose.xlu0.b32.cont [9/16] 0.0, 128
          %2448 = vxpose.xlu0.b32.cont [10/16] 0.0, 128
          %2449 = vxpose.xlu0.b32.cont [11/16] 0.0, 128
          %2450 = vxpose.xlu0.b32.cont [12/16] 0.0, 128
          %2451 = vxpose.xlu0.b32.cont [13/16] 0.0, 128
          %2452 = vxpose.xlu0.b32.cont [14/16] 0.0, 128
          %2453 = vxpose.xlu0.b32.cont [15/16] 0.0, 128
          %2454 = vxpose.xlu0.b32.end [16/16] 0.0, 128
          %v2455 = vpop.trf.xlu0
          %v2456 = vpop.trf.xlu0
          %v2457 = vpop.trf.xlu0
          %v2458 = vpop.trf.xlu0
          %v2459 = vpop.trf.xlu0
          %v2460 = vpop.trf.xlu0
          %v2461 = vpop.trf.xlu0
          %v2462 = vpop.trf.xlu0
          %v2463 = vpop.trf.xlu0
          %v2464 = vpop.trf.xlu0
          %v2465 = vpop.trf.xlu0
          %v2466 = vpop.trf.xlu0
          %v2467 = vpop.trf.xlu0
          %v2468 = vpop.trf.xlu0
          %v2469 = vpop.trf.xlu0
          %v2470 = vpop.trf.xlu0
          %v2472 = vsel %vm684, %v2455, 0
          %v2475 = vsel %vm684, %v2456, 0
          %2477 = vmatprep.subr.mxu0 0.0
          %2478 = vmatpush1.msra.mxu0 0.0
          %2479 = vmatprep.subr.mxu0 0.0
          %2480 = vmatpush1.msra.mxu0 0.0
          %2481 = vmatprep.subr.mxu0 0.0
          %2482 = vmatpush1.msra.mxu0 0.0
          %2483 = vmatprep.subr.mxu0 0.0
          %2484 = vmatpush1.msra.mxu0 0.0
          %2485 = vmatprep.subr.mxu0 0.0
          %2486 = vmatpush1.msra.mxu0 0.0
          %2487 = vmatprep.subr.mxu0 0.0
          %2488 = vmatpush1.msra.mxu0 0.0
          %2489 = vmatprep.subr.mxu0 0.0
          %2490 = vmatpush1.msra.mxu0 0.0
          %2491 = vmatprep.subr.mxu0 0.0
          %2492 = vmatpush1.msra.mxu0 0.0
          %2493 = vmatprep.subr.mxu0 0.0
          %2494 = vmatpush1.msra.mxu0 0.0
          %2495 = vmatprep.subr.mxu0 0.0
          %2496 = vmatpush1.msra.mxu0 0.0
          %2497 = vmatprep.subr.mxu0 0.0
          %2498 = vmatpush1.msra.mxu0 0.0
          %2499 = vmatprep.subr.mxu0 0.0
          %2500 = vmatpush1.msra.mxu0 0.0
          %2501 = vmatprep.subr.mxu0 0.0
          %2502 = vmatpush1.msra.mxu0 %v2438
          %2503 = vmatprep.subr.mxu0 0.0
          %2504 = vmatpush1.msra.mxu0 %v2437
          %2505 = vmatprep.subr.mxu0 0.0
          %2506 = vmatpush1.msra.mxu0 %v2436
          %2507 = vmatprep.subr.mxu0 0.0
          %2508 = vmatpush1.msra.mxu0 %v2435
          %2509 = vmatprep.subr.mxu0 0.0
          %2510 = vmatpush2.msra.mxu0 0.0
          %2511 = vmatprep.subr.mxu0 0.0
          %2512 = vmatpush2.msra.mxu0 0.0
          %2513 = vmatprep.subr.mxu0 0.0
          %2514 = vmatpush2.msra.mxu0 0.0
          %2515 = vmatprep.subr.mxu0 0.0
          %2516 = vmatpush2.msra.mxu0 0.0
          %2517 = vmatprep.subr.mxu0 0.0
          %2518 = vmatpush2.msra.mxu0 0.0
          %2519 = vmatprep.subr.mxu0 0.0
          %2520 = vmatpush2.msra.mxu0 0.0
          %2521 = vmatprep.subr.mxu0 0.0
          %2522 = vmatpush2.msra.mxu0 0.0
          %2523 = vmatprep.subr.mxu0 0.0
          %2524 = vmatpush2.msra.mxu0 0.0
          %2525 = vmatprep.subr.mxu0 0.0
          %2526 = vmatpush2.msra.mxu0 0.0
          %2527 = vmatprep.subr.mxu0 0.0
          %2528 = vmatpush2.msra.mxu0 0.0
          %2529 = vmatprep.subr.mxu0 0.0
          %2530 = vmatpush2.msra.mxu0 0.0
          %2531 = vmatprep.subr.mxu0 0.0
          %2532 = vmatpush2.msra.mxu0 0.0
          %2533 = vmatprep.subr.mxu0 0.0
          %2534 = vmatpush2.msra.mxu0 0.0
          %2535 = vmatprep.subr.mxu0 0.0
          %2536 = vmatpush2.msra.mxu0 0.0
          %2537 = vmatprep.subr.mxu0 0.0
          %2538 = vmatpush2.msra.mxu0 0.0
          %2539 = vmatprep.subr.mxu0 0.0
          %2540 = vmatpush2.msra.mxu0 0.0
          %2541 = vmatprep.mubr.f32.mxu0 0.0
          %2542 = vmatmul.mubr.f32.gmra.mxu0 %v2472
          %v2543 = vpop.f32.mrf.mxu0
          %v2544 = vadd.f32 0.0, %v2543
          %v2545 = vpop.f32.mrf.mxu0
          %2546 = vmatprep.mubr.f32.mxu0 0.0
          %2547 = vmatmul.mubr.f32.gmra.mxu0 %v2475
          %v2548 = vpop.f32.mrf.mxu0
          %v2549 = vadd.f32 0.0, %v2548
          %v2550 = vpop.f32.mrf.mxu0
          %2551 = vdwg.mxu0
          %v2552 = vld [vmem:[#allocation2 + $0x60] sm:$0xff]
          %v2553 = vld [vmem:[#allocation2 + $0x68] sm:$0xff]
          %v2554 = vld [vmem:[#allocation2 + $0x70] sm:$0xff]
          %v2555 = vld [vmem:[#allocation2 + $0x78] sm:$0xff]
          %v2556 = vmul.f32 %v2552, %v1004
          %v2557 = vmul.f32 %v2553, %v1004
          %v2558 = vmul.f32 %v2554, %v1004
          %v2559 = vmul.f32 %v2555, %v1004
          %2564 = vrot.lane.b32.xlu0 %v2556, 80
          %v2565 = vpop.permute.xlu0 %2564
          %2566 = vrot.lane.b32.xlu0 %v2557, 80
          %v2567 = vpop.permute.xlu0 %2566
          %2568 = vrot.lane.b32.xlu0 %v2558, 80
          %v2569 = vpop.permute.xlu0 %2568
          %2570 = vrot.lane.b32.xlu0 %v2559, 80
          %v2571 = vpop.permute.xlu0 %2570
          %2576 = vmatprep.subr.mxu0 0.0
          %2577 = vmatpush1.msra.mxu0 0.0
          %2578 = vmatprep.subr.mxu0 0.0
          %2579 = vmatpush1.msra.mxu0 0.0
          %2580 = vmatprep.subr.mxu0 0.0
          %2581 = vmatpush1.msra.mxu0 0.0
          %2582 = vmatprep.subr.mxu0 0.0
          %2583 = vmatpush1.msra.mxu0 0.0
          %2584 = vmatprep.subr.mxu0 0.0
          %2585 = vmatpush1.msra.mxu0 0.0
          %2586 = vmatprep.subr.mxu0 0.0
          %2587 = vmatpush1.msra.mxu0 0.0
          %2588 = vmatprep.subr.mxu0 0.0
          %2589 = vmatpush1.msra.mxu0 0.0
          %2590 = vmatprep.subr.mxu0 0.0
          %2591 = vmatpush1.msra.mxu0 0.0
          %2592 = vmatprep.subr.mxu0 0.0
          %2593 = vmatpush1.msra.mxu0 0.0
          %2594 = vmatprep.subr.mxu0 0.0
          %2595 = vmatpush1.msra.mxu0 0.0
          %2596 = vmatprep.subr.mxu0 0.0
          %2597 = vmatpush1.msra.mxu0 0.0
          %2598 = vmatprep.subr.mxu0 0.0
          %2599 = vmatpush1.msra.mxu0 0.0
          %2600 = vmatprep.subr.mxu0 0.0
          %2601 = vmatpush1.msra.mxu0 %v2571
          %2602 = vmatprep.subr.mxu0 0.0
          %2603 = vmatpush1.msra.mxu0 %v2569
          %2604 = vmatprep.subr.mxu0 0.0
          %2605 = vmatpush1.msra.mxu0 %v2567
          %2606 = vmatprep.subr.mxu0 0.0
          %2607 = vmatpush1.msra.mxu0 %v2565
          %2608 = vmatprep.subr.mxu0 0.0
          %2609 = vmatpush2.msra.mxu0 0.0
          %2610 = vmatprep.subr.mxu0 0.0
          %2611 = vmatpush2.msra.mxu0 0.0
          %2612 = vmatprep.subr.mxu0 0.0
          %2613 = vmatpush2.msra.mxu0 0.0
          %2614 = vmatprep.subr.mxu0 0.0
          %2615 = vmatpush2.msra.mxu0 0.0
          %2616 = vmatprep.subr.mxu0 0.0
          %2617 = vmatpush2.msra.mxu0 0.0
          %2618 = vmatprep.subr.mxu0 0.0
          %2619 = vmatpush2.msra.mxu0 0.0
          %2620 = vmatprep.subr.mxu0 0.0
          %2621 = vmatpush2.msra.mxu0 0.0
          %2622 = vmatprep.subr.mxu0 0.0
          %2623 = vmatpush2.msra.mxu0 0.0
          %2624 = vmatprep.subr.mxu0 0.0
          %2625 = vmatpush2.msra.mxu0 0.0
          %2626 = vmatprep.subr.mxu0 0.0
          %2627 = vmatpush2.msra.mxu0 0.0
          %2628 = vmatprep.subr.mxu0 0.0
          %2629 = vmatpush2.msra.mxu0 0.0
          %2630 = vmatprep.subr.mxu0 0.0
          %2631 = vmatpush2.msra.mxu0 0.0
          %2632 = vmatprep.subr.mxu0 0.0
          %2633 = vmatpush2.msra.mxu0 0.0
          %2634 = vmatprep.subr.mxu0 0.0
          %2635 = vmatpush2.msra.mxu0 0.0
          %2636 = vmatprep.subr.mxu0 0.0
          %2637 = vmatpush2.msra.mxu0 0.0
          %2638 = vmatprep.subr.mxu0 0.0
          %2639 = vmatpush2.msra.mxu0 0.0
          %2640 = vmatprep.mubr.f32.mxu0 0.0
          %2641 = vmatmul.mubr.f32.gmra.mxu0 %v1023
          %v2642 = vpop.f32.mrf.mxu0
          %v2643 = vadd.f32 0.0, %v2642
          %v2644 = vpop.f32.mrf.mxu0
          %2645 = vmatprep.mubr.f32.mxu0 0.0
          %2646 = vmatmul.mubr.f32.gmra.mxu0 %v1026
          %v2647 = vpop.f32.mrf.mxu0
          %v2648 = vadd.f32 0.0, %v2647
          %v2649 = vpop.f32.mrf.mxu0
          %2650 = vmatprep.mubr.f32.mxu0 0.0
          %2651 = vmatmul.mubr.f32.gmra.mxu0 %v1029
          %v2652 = vpop.f32.mrf.mxu0
          %v2653 = vadd.f32 0.0, %v2652
          %v2654 = vpop.f32.mrf.mxu0
          %2655 = vmatprep.mubr.f32.mxu0 0.0
          %2656 = vmatmul.mubr.f32.gmra.mxu0 %v1032
          %v2657 = vpop.f32.mrf.mxu0
          %v2658 = vadd.f32 0.0, %v2657
          %v2659 = vpop.f32.mrf.mxu0
          %2660 = vmatprep.mubr.f32.mxu0 0.0
          %2661 = vmatmul.mubr.f32.gmra.mxu0 %v1035
          %v2662 = vpop.f32.mrf.mxu0
          %v2663 = vadd.f32 0.0, %v2662
          %v2664 = vpop.f32.mrf.mxu0
          %2665 = vmatprep.mubr.f32.mxu0 0.0
          %2666 = vmatmul.mubr.f32.gmra.mxu0 %v1038
          %v2667 = vpop.f32.mrf.mxu0
          %v2668 = vadd.f32 0.0, %v2667
          %v2669 = vpop.f32.mrf.mxu0
          %2670 = vmatprep.mubr.f32.mxu0 0.0
          %2671 = vmatmul.mubr.f32.gmra.mxu0 %v1041
          %v2672 = vpop.f32.mrf.mxu0
          %v2673 = vadd.f32 0.0, %v2672
          %v2674 = vpop.f32.mrf.mxu0
          %2675 = vmatprep.mubr.f32.mxu0 0.0
          %2676 = vmatmul.mubr.f32.gmra.mxu0 %v1044
          %v2677 = vpop.f32.mrf.mxu0
          %v2678 = vadd.f32 0.0, %v2677
          %v2679 = vpop.f32.mrf.mxu0
          %2680 = vmatprep.mubr.f32.mxu0 0.0
          %2681 = vmatmul.mubr.f32.gmra.mxu0 %v1047
          %v2682 = vpop.f32.mrf.mxu0
          %v2683 = vadd.f32 0.0, %v2682
          %v2684 = vpop.f32.mrf.mxu0
          %2685 = vmatprep.mubr.f32.mxu0 0.0
          %2686 = vmatmul.mubr.f32.gmra.mxu0 %v1050
          %v2687 = vpop.f32.mrf.mxu0
          %v2688 = vadd.f32 0.0, %v2687
          %v2689 = vpop.f32.mrf.mxu0
          %2690 = vmatprep.mubr.f32.mxu0 0.0
          %2691 = vmatmul.mubr.f32.gmra.mxu0 %v1053
          %v2692 = vpop.f32.mrf.mxu0
          %v2693 = vadd.f32 0.0, %v2692
          %v2694 = vpop.f32.mrf.mxu0
          %2695 = vmatprep.mubr.f32.mxu0 0.0
          %2696 = vmatmul.mubr.f32.gmra.mxu0 %v1056
          %v2697 = vpop.f32.mrf.mxu0
          %v2698 = vadd.f32 0.0, %v2697
          %v2699 = vpop.f32.mrf.mxu0
          %2700 = vdwg.mxu0
          %2701 = vxpose.xlu0.b32.start [1/16] %v2643, 128
          %2702 = vxpose.xlu0.b32.cont [2/16] %v2648, 128
          %2703 = vxpose.xlu0.b32.cont [3/16] %v2653, 128
          %2704 = vxpose.xlu0.b32.cont [4/16] %v2658, 128
          %2705 = vxpose.xlu0.b32.cont [5/16] 0.0, 128
          %2706 = vxpose.xlu0.b32.cont [6/16] 0.0, 128
          %2707 = vxpose.xlu0.b32.cont [7/16] 0.0, 128
          %2708 = vxpose.xlu0.b32.cont [8/16] 0.0, 128
          %2709 = vxpose.xlu0.b32.cont [9/16] 0.0, 128
          %2710 = vxpose.xlu0.b32.cont [10/16] 0.0, 128
          %2711 = vxpose.xlu0.b32.cont [11/16] 0.0, 128
          %2712 = vxpose.xlu0.b32.cont [12/16] 0.0, 128
          %2713 = vxpose.xlu0.b32.cont [13/16] 0.0, 128
          %2714 = vxpose.xlu0.b32.cont [14/16] 0.0, 128
          %2715 = vxpose.xlu0.b32.cont [15/16] 0.0, 128
          %2716 = vxpose.xlu0.b32.end [16/16] 0.0, 128
          %v2717 = vpop.trf.xlu0
          %v2718 = vpop.trf.xlu0
          %v2719 = vpop.trf.xlu0
          %v2720 = vpop.trf.xlu0
          %v2721 = vpop.trf.xlu0
          %v2722 = vpop.trf.xlu0
          %v2723 = vpop.trf.xlu0
          %v2724 = vpop.trf.xlu0
          %v2725 = vpop.trf.xlu0
          %v2726 = vpop.trf.xlu0
          %v2727 = vpop.trf.xlu0
          %v2728 = vpop.trf.xlu0
          %v2729 = vpop.trf.xlu0
          %v2730 = vpop.trf.xlu0
          %v2731 = vpop.trf.xlu0
          %v2732 = vpop.trf.xlu0
          %v2734 = vsel %vm684, %v2717, 0
          %v2737 = vsel %vm684, %v2718, 0
          %2739 = vmatprep.subr.mxu0 0.0
          %2740 = vmatpush1.msra.mxu0 0.0
          %2741 = vmatprep.subr.mxu0 0.0
          %2742 = vmatpush1.msra.mxu0 0.0
          %2743 = vmatprep.subr.mxu0 0.0
          %2744 = vmatpush1.msra.mxu0 0.0
          %2745 = vmatprep.subr.mxu0 0.0
          %2746 = vmatpush1.msra.mxu0 0.0
          %2747 = vmatprep.subr.mxu0 0.0
          %2748 = vmatpush1.msra.mxu0 0.0
          %2749 = vmatprep.subr.mxu0 0.0
          %2750 = vmatpush1.msra.mxu0 0.0
          %2751 = vmatprep.subr.mxu0 0.0
          %2752 = vmatpush1.msra.mxu0 0.0
          %2753 = vmatprep.subr.mxu0 0.0
          %2754 = vmatpush1.msra.mxu0 0.0
          %2755 = vmatprep.subr.mxu0 0.0
          %2756 = vmatpush1.msra.mxu0 0.0
          %2757 = vmatprep.subr.mxu0 0.0
          %2758 = vmatpush1.msra.mxu0 0.0
          %2759 = vmatprep.subr.mxu0 0.0
          %2760 = vmatpush1.msra.mxu0 0.0
          %2761 = vmatprep.subr.mxu0 0.0
          %2762 = vmatpush1.msra.mxu0 0.0
          %2763 = vmatprep.subr.mxu0 0.0
          %2764 = vmatpush1.msra.mxu0 %v2678
          %2765 = vmatprep.subr.mxu0 0.0
          %2766 = vmatpush1.msra.mxu0 %v2673
          %2767 = vmatprep.subr.mxu0 0.0
          %2768 = vmatpush1.msra.mxu0 %v2668
          %2769 = vmatprep.subr.mxu0 0.0
          %2770 = vmatpush1.msra.mxu0 %v2663
          %2771 = vmatprep.subr.mxu0 0.0
          %2772 = vmatpush2.msra.mxu0 0.0
          %2773 = vmatprep.subr.mxu0 0.0
          %2774 = vmatpush2.msra.mxu0 0.0
          %2775 = vmatprep.subr.mxu0 0.0
          %2776 = vmatpush2.msra.mxu0 0.0
          %2777 = vmatprep.subr.mxu0 0.0
          %2778 = vmatpush2.msra.mxu0 0.0
          %2779 = vmatprep.subr.mxu0 0.0
          %2780 = vmatpush2.msra.mxu0 0.0
          %2781 = vmatprep.subr.mxu0 0.0
          %2782 = vmatpush2.msra.mxu0 0.0
          %2783 = vmatprep.subr.mxu0 0.0
          %2784 = vmatpush2.msra.mxu0 0.0
          %2785 = vmatprep.subr.mxu0 0.0
          %2786 = vmatpush2.msra.mxu0 0.0
          %2787 = vmatprep.subr.mxu0 0.0
          %2788 = vmatpush2.msra.mxu0 0.0
          %2789 = vmatprep.subr.mxu0 0.0
          %2790 = vmatpush2.msra.mxu0 0.0
          %2791 = vmatprep.subr.mxu0 0.0
          %2792 = vmatpush2.msra.mxu0 0.0
          %2793 = vmatprep.subr.mxu0 0.0
          %2794 = vmatpush2.msra.mxu0 0.0
          %2795 = vmatprep.subr.mxu0 0.0
          %2796 = vmatpush2.msra.mxu0 0.0
          %2797 = vmatprep.subr.mxu0 0.0
          %2798 = vmatpush2.msra.mxu0 0.0
          %2799 = vmatprep.subr.mxu0 0.0
          %2800 = vmatpush2.msra.mxu0 0.0
          %2801 = vmatprep.subr.mxu0 0.0
          %2802 = vmatpush2.msra.mxu0 0.0
          %2803 = vmatprep.mubr.f32.mxu0 0.0
          %2804 = vmatmul.mubr.f32.gmra.mxu0 %v2734
          %v2805 = vpop.f32.mrf.mxu0
          %v2806 = vadd.f32 0.0, %v2805
          %v2807 = vpop.f32.mrf.mxu0
          %2808 = vmatprep.mubr.f32.mxu0 0.0
          %2809 = vmatmul.mubr.f32.gmra.mxu0 %v2737
          %v2810 = vpop.f32.mrf.mxu0
          %v2811 = vadd.f32 0.0, %v2810
          %v2812 = vpop.f32.mrf.mxu0
          %2813 = vdwg.mxu0
          %v2814 = vmul.f32 %v2806, 0.17677669
          %v2815 = vmul.f32 %v2811, 0.17677669
          %v2816 = vsel %vm452, %v2814, -inf
          %2817 = vmax.xlane.f32.xlu0 %v2816
          %v2818 = vpop.xlane.xlu0 %2817
          %v2819 = vsel %vm452, %v2815, -inf
          %2820 = vmax.xlane.f32.xlu0 %v2819
          %v2821 = vpop.xlane.xlu0 %2820
          %v2822 = vsub.f32 %v2814, %v2818
          %v2823 = vsub.f32 %v2815, %v2821
          %v2824 = vmul.f32 %v2822, 1.442695
          %v2825 = vpow.pop %v2824
          %v2826 = vmul.f32 %v2823, 1.442695
          %v2827 = vpow.pop %v2826
          %v2828 = vsel %vm452, %v2825, 0.0
          %2829 = vadd.xlane.f32.xlu0 %v2828
          %v2830 = vpop.xlane.xlu0 %2829
          %v2831 = vsel %vm452, %v2827, 0.0
          %2832 = vadd.xlane.f32.xlu0 %v2831
          %v2833 = vpop.xlane.xlu0 %2832
          %v2834 = vrcp.pop %v2830
          %v2835 = vrcp.pop %v2833
          %v2836 = vmul.f32 %v2825, %v2834
          %v2837 = vmul.f32 %v2827, %v2835
          %v2839 = vsel %vm452, %v2683, 0
          %v2842 = vsel %vm452, %v2688, 0
          %v2845 = vsel %vm452, %v2693, 0
          %v2848 = vsel %vm452, %v2698, 0
          %v2851 = vsel %vm452, %v2836, 0
          %v2854 = vsel %vm452, %v2837, 0
          %2856 = vmatprep.subr.mxu0 0.0
          %2857 = vmatpush1.xpose.msra.mxu0 0.0
          %2858 = vmatprep.subr.mxu0 0.0
          %2859 = vmatpush1.xpose.msra.mxu0 0.0
          %2860 = vmatprep.subr.mxu0 0.0
          %2861 = vmatpush1.xpose.msra.mxu0 0.0
          %2862 = vmatprep.subr.mxu0 0.0
          %2863 = vmatpush1.xpose.msra.mxu0 0.0
          %2864 = vmatprep.subr.mxu0 0.0
          %2865 = vmatpush1.xpose.msra.mxu0 0.0
          %2866 = vmatprep.subr.mxu0 0.0
          %2867 = vmatpush1.xpose.msra.mxu0 0.0
          %2868 = vmatprep.subr.mxu0 0.0
          %2869 = vmatpush1.xpose.msra.mxu0 0.0
          %2870 = vmatprep.subr.mxu0 0.0
          %2871 = vmatpush1.xpose.msra.mxu0 0.0
          %2872 = vmatprep.subr.mxu0 0.0
          %2873 = vmatpush1.xpose.msra.mxu0 0.0
          %2874 = vmatprep.subr.mxu0 0.0
          %2875 = vmatpush1.xpose.msra.mxu0 0.0
          %2876 = vmatprep.subr.mxu0 0.0
          %2877 = vmatpush1.xpose.msra.mxu0 0.0
          %2878 = vmatprep.subr.mxu0 0.0
          %2879 = vmatpush1.xpose.msra.mxu0 0.0
          %2880 = vmatprep.subr.mxu0 0.0
          %2881 = vmatpush1.xpose.msra.mxu0 0.0
          %2882 = vmatprep.subr.mxu0 0.0
          %2883 = vmatpush1.xpose.msra.mxu0 0.0
          %2884 = vmatprep.subr.mxu0 0.0
          %2885 = vmatpush1.xpose.msra.mxu0 %v2854
          %2886 = vmatprep.subr.mxu0 0.0
          %2887 = vmatpush1.xpose.msra.mxu0 %v2851
          %2888 = vmatprep.subr.mxu0 0.0
          %2889 = vmatpush2.xpose.msra.mxu0 0.0
          %2890 = vmatprep.subr.mxu0 0.0
          %2891 = vmatpush2.xpose.msra.mxu0 0.0
          %2892 = vmatprep.subr.mxu0 0.0
          %2893 = vmatpush2.xpose.msra.mxu0 0.0
          %2894 = vmatprep.subr.mxu0 0.0
          %2895 = vmatpush2.xpose.msra.mxu0 0.0
          %2896 = vmatprep.subr.mxu0 0.0
          %2897 = vmatpush2.xpose.msra.mxu0 0.0
          %2898 = vmatprep.subr.mxu0 0.0
          %2899 = vmatpush2.xpose.msra.mxu0 0.0
          %2900 = vmatprep.subr.mxu0 0.0
          %2901 = vmatpush2.xpose.msra.mxu0 0.0
          %2902 = vmatprep.subr.mxu0 0.0
          %2903 = vmatpush2.xpose.msra.mxu0 0.0
          %2904 = vmatprep.subr.mxu0 0.0
          %2905 = vmatpush2.xpose.msra.mxu0 0.0
          %2906 = vmatprep.subr.mxu0 0.0
          %2907 = vmatpush2.xpose.msra.mxu0 0.0
          %2908 = vmatprep.subr.mxu0 0.0
          %2909 = vmatpush2.xpose.msra.mxu0 0.0
          %2910 = vmatprep.subr.mxu0 0.0
          %2911 = vmatpush2.xpose.msra.mxu0 0.0
          %2912 = vmatprep.subr.mxu0 0.0
          %2913 = vmatpush2.xpose.msra.mxu0 0.0
          %2914 = vmatprep.subr.mxu0 0.0
          %2915 = vmatpush2.xpose.msra.mxu0 0.0
          %2916 = vmatprep.subr.mxu0 0.0
          %2917 = vmatpush2.xpose.msra.mxu0 0.0
          %2918 = vmatprep.subr.mxu0 0.0
          %2919 = vmatpush2.xpose.msra.mxu0 0.0
          %2920 = vmatprep.mubr.f32.mxu0 0.0
          %2921 = vmatmul.mubr.f32.gmra.mxu0 %v2839
          %v2922 = vpop.f32.mrf.mxu0
          %v2923 = vadd.f32 0.0, %v2922
          %v2924 = vpop.f32.mrf.mxu0
          %2925 = vmatprep.mubr.f32.mxu0 0.0
          %2926 = vmatmul.mubr.f32.gmra.mxu0 %v2842
          %v2927 = vpop.f32.mrf.mxu0
          %v2928 = vadd.f32 0.0, %v2927
          %v2929 = vpop.f32.mrf.mxu0
          %2930 = vmatprep.mubr.f32.mxu0 0.0
          %2931 = vmatmul.mubr.f32.gmra.mxu0 %v2845
          %v2932 = vpop.f32.mrf.mxu0
          %v2933 = vadd.f32 0.0, %v2932
          %v2934 = vpop.f32.mrf.mxu0
          %2935 = vmatprep.mubr.f32.mxu0 0.0
          %2936 = vmatmul.mubr.f32.gmra.mxu0 %v2848
          %v2937 = vpop.f32.mrf.mxu0
          %v2938 = vadd.f32 0.0, %v2937
          %v2939 = vpop.f32.mrf.mxu0
          %2940 = vdwg.mxu0
          %v2941 = vld [vmem:[%s4 + $0x60] sm:$0xff]
          %v2942 = vld [vmem:[%s4 + $0x68] sm:$0xff]
          %v2943 = vld [vmem:[%s4 + $0x70] sm:$0xff]
          %v2944 = vld [vmem:[%s4 + $0x78] sm:$0xff]
          %2945 = vxpose.xlu0.b32.start [1/16] %v2923, 128
          %2946 = vxpose.xlu0.b32.cont [2/16] %v2928, 128
          %2947 = vxpose.xlu0.b32.cont [3/16] %v2933, 128
          %2948 = vxpose.xlu0.b32.cont [4/16] %v2938, 128
          %2949 = vxpose.xlu0.b32.cont [5/16] 0.0, 128
          %2950 = vxpose.xlu0.b32.cont [6/16] 0.0, 128
          %2951 = vxpose.xlu0.b32.cont [7/16] 0.0, 128
          %2952 = vxpose.xlu0.b32.cont [8/16] 0.0, 128
          %2953 = vxpose.xlu0.b32.cont [9/16] 0.0, 128
          %2954 = vxpose.xlu0.b32.cont [10/16] 0.0, 128
          %2955 = vxpose.xlu0.b32.cont [11/16] 0.0, 128
          %2956 = vxpose.xlu0.b32.cont [12/16] 0.0, 128
          %2957 = vxpose.xlu0.b32.cont [13/16] 0.0, 128
          %2958 = vxpose.xlu0.b32.cont [14/16] 0.0, 128
          %2959 = vxpose.xlu0.b32.cont [15/16] 0.0, 128
          %2960 = vxpose.xlu0.b32.end [16/16] 0.0, 128
          %v2961 = vpop.trf.xlu0
          %v2962 = vpop.trf.xlu0
          %v2963 = vpop.trf.xlu0
          %v2964 = vpop.trf.xlu0
          %v2965 = vpop.trf.xlu0
          %v2966 = vpop.trf.xlu0
          %v2967 = vpop.trf.xlu0
          %v2968 = vpop.trf.xlu0
          %v2969 = vpop.trf.xlu0
          %v2970 = vpop.trf.xlu0
          %v2971 = vpop.trf.xlu0
          %v2972 = vpop.trf.xlu0
          %v2973 = vpop.trf.xlu0
          %v2974 = vpop.trf.xlu0
          %v2975 = vpop.trf.xlu0
          %v2976 = vpop.trf.xlu0
          %v2978 = vsel %vm684, %v2961, 0
          %v2981 = vsel %vm684, %v2962, 0
          %2983 = vmatprep.subr.mxu0 0.0
          %2984 = vmatpush1.msra.mxu0 0.0
          %2985 = vmatprep.subr.mxu0 0.0
          %2986 = vmatpush1.msra.mxu0 0.0
          %2987 = vmatprep.subr.mxu0 0.0
          %2988 = vmatpush1.msra.mxu0 0.0
          %2989 = vmatprep.subr.mxu0 0.0
          %2990 = vmatpush1.msra.mxu0 0.0
          %2991 = vmatprep.subr.mxu0 0.0
          %2992 = vmatpush1.msra.mxu0 0.0
          %2993 = vmatprep.subr.mxu0 0.0
          %2994 = vmatpush1.msra.mxu0 0.0
          %2995 = vmatprep.subr.mxu0 0.0
          %2996 = vmatpush1.msra.mxu0 0.0
          %2997 = vmatprep.subr.mxu0 0.0
          %2998 = vmatpush1.msra.mxu0 0.0
          %2999 = vmatprep.subr.mxu0 0.0
          %3000 = vmatpush1.msra.mxu0 0.0
          %3001 = vmatprep.subr.mxu0 0.0
          %3002 = vmatpush1.msra.mxu0 0.0
          %3003 = vmatprep.subr.mxu0 0.0
          %3004 = vmatpush1.msra.mxu0 0.0
          %3005 = vmatprep.subr.mxu0 0.0
          %3006 = vmatpush1.msra.mxu0 0.0
          %3007 = vmatprep.subr.mxu0 0.0
          %3008 = vmatpush1.msra.mxu0 %v2944
          %3009 = vmatprep.subr.mxu0 0.0
          %3010 = vmatpush1.msra.mxu0 %v2943
          %3011 = vmatprep.subr.mxu0 0.0
          %3012 = vmatpush1.msra.mxu0 %v2942
          %3013 = vmatprep.subr.mxu0 0.0
          %3014 = vmatpush1.msra.mxu0 %v2941
          %3015 = vmatprep.subr.mxu0 0.0
          %3016 = vmatpush2.msra.mxu0 0.0
          %3017 = vmatprep.subr.mxu0 0.0
          %3018 = vmatpush2.msra.mxu0 0.0
          %3019 = vmatprep.subr.mxu0 0.0
          %3020 = vmatpush2.msra.mxu0 0.0
          %3021 = vmatprep.subr.mxu0 0.0
          %3022 = vmatpush2.msra.mxu0 0.0
          %3023 = vmatprep.subr.mxu0 0.0
          %3024 = vmatpush2.msra.mxu0 0.0
          %3025 = vmatprep.subr.mxu0 0.0
          %3026 = vmatpush2.msra.mxu0 0.0
          %3027 = vmatprep.subr.mxu0 0.0
          %3028 = vmatpush2.msra.mxu0 0.0
          %3029 = vmatprep.subr.mxu0 0.0
          %3030 = vmatpush2.msra.mxu0 0.0
          %3031 = vmatprep.subr.mxu0 0.0
          %3032 = vmatpush2.msra.mxu0 0.0
          %3033 = vmatprep.subr.mxu0 0.0
          %3034 = vmatpush2.msra.mxu0 0.0
          %3035 = vmatprep.subr.mxu0 0.0
          %3036 = vmatpush2.msra.mxu0 0.0
          %3037 = vmatprep.subr.mxu0 0.0
          %3038 = vmatpush2.msra.mxu0 0.0
          %3039 = vmatprep.subr.mxu0 0.0
          %3040 = vmatpush2.msra.mxu0 0.0
          %3041 = vmatprep.subr.mxu0 0.0
          %3042 = vmatpush2.msra.mxu0 0.0
          %3043 = vmatprep.subr.mxu0 0.0
          %3044 = vmatpush2.msra.mxu0 0.0
          %3045 = vmatprep.subr.mxu0 0.0
          %3046 = vmatpush2.msra.mxu0 0.0
          %3047 = vmatprep.mubr.f32.mxu0 0.0
          %3048 = vmatmul.mubr.f32.gmra.mxu0 %v2978
          %v3049 = vpop.f32.mrf.mxu0
          %v3050 = vadd.f32 0.0, %v3049
          %v3051 = vpop.f32.mrf.mxu0
          %3052 = vmatprep.mubr.f32.mxu0 0.0
          %3053 = vmatmul.mubr.f32.gmra.mxu0 %v2981
          %v3054 = vpop.f32.mrf.mxu0
          %v3055 = vadd.f32 0.0, %v3054
          %v3056 = vpop.f32.mrf.mxu0
          %3057 = vdwg.mxu0
          %3058 = vst [vmem:[%s280] sm:$0xff] %v1532
          %3059 = vst [vmem:[%s280 + $0x8] sm:$0xff] %v1537
          %3060 = vst [vmem:[%s280 + $0x10] sm:$0xff] %v2038
          %3061 = vst [vmem:[%s280 + $0x18] sm:$0xff] %v2043
          %3062 = vst [vmem:[%s280 + $0x20] sm:$0xff] %v2544
          %3063 = vst [vmem:[%s280 + $0x28] sm:$0xff] %v2549
          %3064 = vst [vmem:[%s280 + $0x30] sm:$0xff] %v3050
          %3065 = vst [vmem:[%s280 + $0x38] sm:$0xff] %v3055
        $region48: #{tpu_custom_call.1} parent=39 // pred_fallthru
          _
        %s3066 = sand.u32 %s158, 1
        %s3067 = scalar_lea.sflag [#allocation5], %s3066
        %s3068 = sand.u32 %s158, 1
        %s3069 = smul.addr %s3068, 32
        %s3070 = scalar_lea.vmem [#allocation4], %s3069
        %s3071 = sand.u32 %s184, 1
        %s3072 = scalar_lea.sflag [#allocation7], %s3071
        %s3073 = sand.u32 %s184, 1
        %s3074 = smul.addr %s3073, 64
        %s3075 = scalar_lea.vmem [#allocation6], %s3074
        // Predicated region
        $region49: #{tpu_custom_call.1} parent=39 // pred_check
          %p3076 = pneg %p168
        $region50: #{tpu_custom_call.1} parent=39 // pred_check_branch
          %3078 = sbr.rel (%p3076) target = $region52
        $region51: #{tpu_custom_call.1} parent=39 // pred_region
          %s3079 = smul.u32 4, %s29
          %s3081 = ssub.s32 512, 512
          %3082 = vsyncadd %s3067, %s3081
          %s3083 = smul.addr %s28, 8
          %s3084 = sadd.s32 %s3079, %s3083
          %s3085 = smul.addr %s3084, 128
          %s3086 = scalar_lea.hbm %s5, %s3085
          %s3087 = sshll.u32 %s3070, 4
          %s3088 = int_to_ptr.vmem [resolvable:$true] %s3087
          %3093 = dma.vmem_to_hbm [thread:$0]  %s3088, 512, %s3086, %s3067, 128, 128, 8
        $region52: #{tpu_custom_call.1} parent=39 // pred_fallthru
          _
        // Predicated region
        $region53: #{tpu_custom_call.1} parent=39 // pred_check
          %p3094 = pneg %p194
        $region54: #{tpu_custom_call.1} parent=39 // pred_check_branch
          %3096 = sbr.rel (%p3094) target = $region56
        $region55: #{tpu_custom_call.1} parent=39 // pred_region
          %s3098 = ssub.s32 1024, 1024
          %3099 = vsyncadd %s3072, %s3098
          %s3100 = smul.addr %s28, 8
          %s3101 = smul.addr %s3100, 128
          %s3102 = scalar_lea.hbm %s6, %s3101
          %s3103 = sshll.u32 %s3075, 4
          %s3104 = int_to_ptr.vmem [resolvable:$true] %s3103
          %3109 = dma.vmem_to_hbm [thread:$0]  %s3104, 1024, %s3102, %s3072, 128, 128, 8
        $region56: #{tpu_custom_call.1} parent=39 // pred_fallthru
          _
      $region40: #{tpu_custom_call.1} parent=5 // pred_fallthru
        _
      %p3110 = scmp.le.s32.totalorder 2, %s19
      // Predicated region
      $region57: #{tpu_custom_call.1} parent=5 // pred_check
        %p3111 = pneg %p3110
      $region58: #{tpu_custom_call.1} parent=5 // pred_check_branch
        %3113 = sbr.rel (%p3111) target = $region60
      $region59: #{tpu_custom_call.1} parent=5 // pred_region
        %s3114 = ssub.s32 %s19, 2
        // Predicated region
        $region61: #{tpu_custom_call.1} parent=59 // pred_check
          %p3115 = pneg %p174
        $region62: #{tpu_custom_call.1} parent=59 // pred_check_branch
          %3117 = sbr.rel (%p3115) target = $region64
        $region63: #{tpu_custom_call.1} parent=59 // pred_region
          %s3118 = sand.u32 %s159, 1
          %s3119 = scalar_lea.sflag [#allocation5], %s3118
          %s3120 = sand.u32 %s159, 1
          %s3121 = smul.addr %s3120, 32
          %s3122 = scalar_lea.vmem [#allocation4], %s3121
          %3123 = dma.done %s3119, 512
        $region64: #{tpu_custom_call.1} parent=59 // pred_fallthru
          _
        // Predicated region
        $region65: #{tpu_custom_call.1} parent=59 // pred_check
          %p3124 = pneg %p200
        $region66: #{tpu_custom_call.1} parent=59 // pred_check_branch
          %3126 = sbr.rel (%p3124) target = $region68
        $region67: #{tpu_custom_call.1} parent=59 // pred_region
          %s3127 = sand.u32 %s185, 1
          %s3128 = scalar_lea.sflag [#allocation7], %s3127
          %s3129 = sand.u32 %s185, 1
          %s3130 = smul.addr %s3129, 64
          %s3131 = scalar_lea.vmem [#allocation6], %s3130
          %3132 = dma.done %s3128, 1024
        $region68: #{tpu_custom_call.1} parent=59 // pred_fallthru
          _
      $region60: #{tpu_custom_call.1} parent=5 // pred_fallthru
        _
    $region6: #{tpu_custom_call.1} parent=1 // loop_footer
      %s23 = sadd.s32 1, %s19
    $region7: #{tpu_custom_call.1} parent=1 // loop_footer_branch
      %18 = sbr.rel target = $region3
    $region8: #{tpu_custom_call.1} parent=1 // loop_exit
      _
    %3133 = vsyncpa [#allocation5], 1
    %s3134 = scalar_lea.sflag [#allocation5], 1
    %3135 = vsyncpa %s3134, 1
    %3136 = vsyncpa [#allocation7], 1
    %s3137 = scalar_lea.sflag [#allocation7], 1
    %3138 = vsyncpa %s3137, 1

</llo_original>
